<compile_context>
chip_gen: v7x
topology: tpu7x:2x2x1
jax: 0.10.0
libtpu: 0.0.40
codegen_flags: <defaults>
</compile_context>

<pallas_src>
import jax
import jax.numpy as jnp
import numpy as np
from jax.experimental import pallas as pl
from jax.experimental.pallas import tpu as pltpu

LN_EPS = 1e-5
BN_EPS = 1e-5
LANES = 128


def _round8(n):
    return ((n + 7) // 8) * 8


# ---------------------------------------------------------------------------
# Host-side packing: shared constant matrices + per-layer weight slab
# ---------------------------------------------------------------------------
def _build_consts(H, W):
    """Constant matrices for the (C, H*W) lane-dense compute layout."""
    HW = H * W
    # Bw: group-mean over w within each h-group (lane index = h*W + w).
    Bw = np.kron(np.eye(H), np.full((W, W), 1.0 / W)).astype(np.float32)  # (HW, HW)
    # Phw: cols 0:H = mean over w (per h); cols H:H+W = mean over h (per w).
    Phw = np.zeros((HW, LANES), np.float32)
    for h in range(H):
        Phw[h * W:(h + 1) * W, h] = 1.0 / W
    for w in range(W):
        Phw[w::W, H + w] = 1.0 / H
    # Eh: broadcast a_h (per (c,h)) back to (c, h*W+w).
    Eh = np.zeros((LANES, HW), np.float32)
    for h in range(H):
        Eh[h, h * W:(h + 1) * W] = 1.0
    # Ew: broadcast a_w (per (c,w), stored at column H+w) back to (c, h*W+w).
    Ew = np.zeros((LANES, HW), np.float32)
    for w in range(W):
        Ew[H + w, w::W] = 1.0
    return jnp.asarray(np.concatenate([Bw, Phw, Eh, Ew], axis=0))  # (4*128, 128)


def _pad_piece(a):
    """Pad a 2-D parameter piece to (round8(rows), 128)."""
    a = jnp.asarray(a, jnp.float32)
    r, c = a.shape
    return jnp.pad(a, ((0, _round8(r) - r), (0, LANES - c)))


def _ca_pieces(p, C, H, W, mip):
    ln_g, ln_b, w1, b1, wh, bh, ww, bw = p
    HW = H * W
    g_full = jnp.tile(ln_g, H).reshape(1, HW)          # gamma[w] tiled over h
    b_full = jnp.tile(ln_b, H).reshape(1, HW)
    b1_full = jnp.broadcast_to(b1[:, None], (mip, LANES))
    whw = jnp.concatenate([wh, ww], axis=0)            # (2C, mip) fused out-convs
    bhw_full = jnp.broadcast_to(
        jnp.concatenate([bh, bw])[:, None], (2 * C, LANES))
    return [g_full, b_full, w1, b1_full, whw, bhw_full]


def _ffn_pieces(p, C, H, W, mlp):
    ln_g, ln_b, w1, b1, w2, b2 = p
    HW = H * W
    n1 = -(-(H * mlp) // LANES)
    g_full = jnp.tile(ln_g, H).reshape(1, HW)
    b_full = jnp.tile(ln_b, H).reshape(1, HW)
    # Block-diagonal "per-token" Linear weights: Linear acts on the W axis,
    # which is the minor part of the (C, H*W) lane index -> kron(I_H, W).
    w1big = jnp.kron(jnp.eye(H, dtype=jnp.float32), w1)   # (HW, H*mlp)
    w2big = jnp.kron(jnp.eye(H, dtype=jnp.float32), w2)   # (H*mlp, HW)
    b1big = jnp.tile(b1, H)                                # (H*mlp,)
    pad = n1 * LANES - H * mlp
    w1big = jnp.pad(w1big, ((0, 0), (0, pad)))
    w2big = jnp.pad(w2big, ((0, pad), (0, 0)))
    b1big = jnp.pad(b1big, (0, pad)).reshape(n1, LANES)
    b2_full = jnp.tile(b2, H).reshape(1, HW)
    pieces = [g_full, b_full]
    pieces += [w1big[:, j * LANES:(j + 1) * LANES] for j in range(n1)]
    pieces += [b1big]
    pieces += [w2big[j * LANES:(j + 1) * LANES, :] for j in range(n1)]
    pieces += [b2_full]
    return pieces


def _layer_plan(C, H, W, mip, mlp):
    """Static row offsets of every piece inside one packed layer block."""
    HW = H * W
    n1 = -(-(H * mlp) // LANES)
    ca_rows = [1, 1, mip, mip, 2 * C, 2 * C]
    ffn_rows = [1, 1] + [HW] * n1 + [n1] + [LANES] * n1 + [1]

    def offs(rows):
        out, cur = [], 0
        for r in rows:
            out.append(cur)
            cur += _round8(r)
        return out, cur

    ca_offs, ca_total = offs(ca_rows)
    ffn_offs, ffn_total = offs(ffn_rows)
    sub_offsets, cur = [], 0
    for kind in ("ca", "ffn", "ca", "ffn", "ca", "ffn"):
        sub_offsets.append(cur)
        cur += ca_total if kind == "ca" else ffn_total
    return dict(n1=n1, ca_offs=ca_offs, ffn_offs=ffn_offs,
                sub_offsets=sub_offsets, R=_round8(cur))


def _pack_layer(layer, C, H, W, mip, mlp, plan):
    pieces = []
    for sub in layer:
        if len(sub) == 8:
            pieces += _ca_pieces(sub, C, H, W, mip)
        else:
            pieces += _ffn_pieces(sub, C, H, W, mlp)
    slab = jnp.concatenate([_pad_piece(p) for p in pieces], axis=0)
    return jnp.pad(slab, ((0, plan["R"] - slab.shape[0]), (0, 0)))


# ---------------------------------------------------------------------------
# Fused whole-network kernel (per grid step: one sample through all layers)
# ---------------------------------------------------------------------------
def _make_kernel(C, H, W, mip, mlp, depth, plan):
    HW = H * W
    n1 = plan["n1"]
    R = plan["R"]
    ca_offs = plan["ca_offs"]
    ffn_offs = plan["ffn_offs"]
    sub_offs = plan["sub_offsets"]

    def kernel(x_ref, c_ref, w_ref, o_ref):
        # Shared constant matrices (loaded once, reused by every sub-block).
        bw_m = c_ref[0:HW, :]                       # (HW, HW)   LN block-average
        phw_m = c_ref[HW:2 * HW, :]                 # (HW, 128)  both CA pools
        eh_m = c_ref[2 * HW:2 * HW + LANES, :]      # (128, HW)  a_h broadcast
        ew_m = c_ref[2 * HW + LANES:2 * HW + 2 * LANES, :]  # a_w broadcast

        def ln(t, g, b):
            # Two-pass LayerNorm over W via group-averaging matmuls (no relayout).
            mu = jnp.dot(t, bw_m, preferred_element_type=jnp.float32)
            d = t - mu
            var = jnp.dot(d * d, bw_m, preferred_element_type=jnp.float32)
            return d * jax.lax.rsqrt(var + LN_EPS) * g + b

        def piece(base, off, rows):
            return w_ref[pl.ds(base + off, rows), :]

        def ca_block(t, base):
            g = piece(base, ca_offs[0], 1)                    # (1, HW)
            bta = piece(base, ca_offs[1], 1)
            w1 = piece(base, ca_offs[2], mip)[:, :C]          # (mip, C)
            b1 = piece(base, ca_offs[3], mip)                 # (mip, 128)
            whw = piece(base, ca_offs[4], 2 * C)[:, :mip]     # (2C, mip)
            bhw = piece(base, ca_offs[5], 2 * C)              # (2C, 128)
            y = ln(t, g, bta)                                  # (C, HW)
            v = jnp.dot(y, phw_m, preferred_element_type=jnp.float32)  # (C, 128)
            z = jnp.dot(w1, v, preferred_element_type=jnp.float32) + b1
            z = z * (jnp.clip(z + 3.0, 0.0, 6.0) * (1.0 / 6.0))         # h_swish
            a = jnp.dot(whw, z, preferred_element_type=jnp.float32) + bhw
            s = jax.nn.sigmoid(a)                              # (2C, 128)
            ah = jnp.dot(s[:C], eh_m, preferred_element_type=jnp.float32)
            aw = jnp.dot(s[C:], ew_m, preferred_element_type=jnp.float32)
            return t + y * ah * aw

        def ffn_block(t, base):
            g = piece(base, ffn_offs[0], 1)
            bta = piece(base, ffn_offs[1], 1)
            b1 = piece(base, ffn_offs[2 + n1], n1)             # (n1, 128)
            b2 = piece(base, ffn_offs[3 + 2 * n1], 1)          # (1, HW)
            y = ln(t, g, bta)
            h2 = jnp.zeros_like(t)
            for j in range(n1):                                # static, n1 small
                w1j = piece(base, ffn_offs[2 + j], HW)         # (HW, 128)
                w2j = piece(base, ffn_offs[3 + n1 + j], LANES) # (128, HW)
                h1 = jnp.maximum(
                    jnp.dot(y, w1j, preferred_element_type=jnp.float32)
                    + b1[j:j + 1, :], 0.0)
                h2 = h2 + jnp.dot(h1, w2j, preferred_element_type=jnp.float32)
            # Dropout(p) is a no-op in inference semantics.
            return t + h2 + b2

        x0 = x_ref[0].astype(jnp.float32)                      # (C, HW)

        def layer_body(l, t):
            base = l * R
            for k, kind in enumerate(("ca", "ffn", "ca", "ffn", "ca", "ffn")):
                sb = base + sub_offs[k]
                t = ca_block(t, sb) if kind == "ca" else ffn_block(t, sb)
            return t

        if depth == 1:
            out = layer_body(0, x0)                 # fully static weight offsets
        else:
            # fori_loop bounds vreg live ranges and keeps trace size constant.
            out = jax.lax.fori_loop(0, depth, layer_body, x0)

        o_ref[0] = out.astype(o_ref.dtype)          # lane-dense (C, HW) store

    return kernel


# ---------------------------------------------------------------------------
# Wrapper: one pallas_call for the whole TransformerCA forward
# ---------------------------------------------------------------------------
def transformer_ca_forward(x, layers):
    N, C, H, W = x.shape
    if C != W:
        raise ValueError("TransformerCA requires C == W == dim")
    HW = H * W
    if HW != LANES:
        raise ValueError("lane-dense kernel design point requires H*W == 128")
    depth = len(layers)
    mip = layers[0][0][2].shape[0]
    mlp = layers[0][1][2].shape[1]

    plan = _layer_plan(C, H, W, mip, mlp)
    R = plan["R"]

    consts = _build_consts(H, W)                                   # (512, 128)
    weights = jnp.concatenate(
        [_pack_layer(l, C, H, W, mip, mlp, plan) for l in layers], axis=0)

    x_flat = x.reshape(N, C, HW)
    kernel = _make_kernel(C, H, W, mip, mlp, depth, plan)

    w_bytes = int(weights.size * 4)
    c_bytes = int(consts.size * 4)
    slab_bytes = C * HW * 4
    # Double-buffered inputs + headroom; capped for v7x's 64 MiB VMEM.
    vmem_limit = int(min(max(2 * (w_bytes + c_bytes) + 4 * slab_bytes
                             + (8 << 20), 16 << 20), 48 << 20))

    flops_ca = (2 * 2 * C * HW * HW + 2 * C * HW * LANES + 2 * mip * C * LANES
                + 2 * (2 * C) * mip * LANES + 2 * 2 * C * LANES * HW)
    flops_ffn = 2 * 2 * C * HW * HW + plan["n1"] * (4 * C * HW * LANES)
    flops = int(N * depth * 3 * (flops_ca + flops_ffn))
    transc = int(N * depth * 3 * (2 * C * LANES + 2 * C * HW))
    bytes_acc = int(2 * N * slab_bytes + w_bytes + c_bytes)

    out_flat = pl.pallas_call(
        kernel,
        grid=(N,),
        in_specs=[
            pl.BlockSpec((1, C, HW), lambda n: (n, 0, 0)),      # activation
            pl.BlockSpec(consts.shape, lambda n: (0, 0)),       # shared consts
            pl.BlockSpec(weights.shape, lambda n: (0, 0)),      # packed weights
        ],
        out_specs=pl.BlockSpec((1, C, HW), lambda n: (n, 0, 0)),
        out_shape=jax.ShapeDtypeStruct((N, C, HW), x.dtype),
        compiler_params=pltpu.CompilerParams(
            dimension_semantics=("parallel",),      # 2 TCs on v7x; harmless on v5e/v6e
            vmem_limit_bytes=vmem_limit),
        cost_estimate=pl.CostEstimate(
            flops=flops, transcendentals=transc, bytes_accessed=bytes_acc),
    )(x_flat, consts, weights)

    return out_flat.reshape(N, C, H, W)


# ---------------------------------------------------------------------------
# Deterministic parameter construction (eval-mode BN folded into conv1)
# ---------------------------------------------------------------------------
def init_ca_params(key, dim):
    mip = max(8, dim // 4)
    ks = jax.random.split(key, 12)
    sd = 0.1
    ln_g = 1.0 + 0.05 * jax.random.normal(ks[0], (dim,))
    ln_b = 0.05 * jax.random.normal(ks[1], (dim,))
    w1 = sd * jax.random.normal(ks[2], (mip, dim))      # conv1 1x1: (out, in)
    b1 = sd * jax.random.normal(ks[3], (mip,))
    bn_w = 1.0 + 0.05 * jax.random.normal(ks[4], (mip,))
    bn_b = 0.05 * jax.random.normal(ks[5], (mip,))
    run_m = 0.05 * jax.random.normal(ks[6], (mip,))
    run_v = 1.0 + 0.1 * jax.random.uniform(ks[7], (mip,))
    scale = bn_w / jnp.sqrt(run_v + BN_EPS)             # eval-mode BN affine
    off = bn_b - run_m * scale
    w1f = w1 * scale[:, None]
    b1f = b1 * scale + off
    wh = sd * jax.random.normal(ks[8], (dim, mip))      # conv_h 1x1
    bh = sd * jax.random.normal(ks[9], (dim,))
    ww = sd * jax.random.normal(ks[10], (dim, mip))     # conv_w 1x1
    bw = sd * jax.random.normal(ks[11], (dim,))
    return (ln_g, ln_b, w1f, b1f, wh, bh, ww, bw)


def init_ffn_params(key, dim, mlp_dim):
    ks = jax.random.split(key, 6)
    sd = 0.1
    ln_g = 1.0 + 0.05 * jax.random.normal(ks[0], (dim,))
    ln_b = 0.05 * jax.random.normal(ks[1], (dim,))
    w1 = sd * jax.random.normal(ks[2], (dim, mlp_dim))  # stored (in, out) = torch W.T
    b1 = sd * jax.random.normal(ks[3], (mlp_dim,))
    w2 = sd * jax.random.normal(ks[4], (mlp_dim, dim))
    b2 = sd * jax.random.normal(ks[5], (dim,))
    return (ln_g, ln_b, w1, b1, w2, b2)


def init_transformer_ca(key, dim, depth, mlp_dim):
    layers = []
    for d in range(depth):
        kd = jax.random.fold_in(key, d)
        k = jax.random.split(kd, 6)
        layers.append((
            init_ca_params(k[0], dim), init_ffn_params(k[1], dim, mlp_dim),
            init_ca_params(k[2], dim), init_ffn_params(k[3], dim, mlp_dim),
            init_ca_params(k[4], dim), init_ffn_params(k[5], dim, mlp_dim),
        ))
    return layers


# ---------------------------------------------------------------------------
# Plain-JAX reference (mirrors the PyTorch module math) for correctness check
# ---------------------------------------------------------------------------
def _ln_ref(x, g, b):
    mu = jnp.mean(x, axis=-1, keepdims=True)
    var = jnp.mean(jnp.square(x - mu), axis=-1, keepdims=True)
    return (x - mu) * jax.lax.rsqrt(var + LN_EPS) * g + b


def _ca_ref(x, p):
    ln_g, ln_b, w1, b1, wh, bh, ww, bw = p
    H = x.shape[2]
    y = _ln_ref(x, ln_g, ln_b)                          # (N, C, H, W)
    xh = jnp.mean(y, axis=3)                            # (N, C, H)
    xw = jnp.mean(y, axis=2)                            # (N, C, W)
    v = jnp.concatenate([xh, xw], axis=2)               # (N, C, H+W)
    z = jnp.einsum('mc,ncl->nml', w1, v) + b1[None, :, None]
    z = z * jnp.clip(z + 3.0, 0.0, 6.0) / 6.0
    zh, zw = z[:, :, :H], z[:, :, H:]
    a_h = jax.nn.sigmoid(jnp.einsum('cm,nml->ncl', wh, zh) + bh[None, :, None])
    a_w = jax.nn.sigmoid(jnp.einsum('cm,nml->ncl', ww, zw) + bw[None, :, None])
    return x + y * a_w[:, :, None, :] * a_h[:, :, :, None]


def _ffn_ref(x, p):
    ln_g, ln_b, w1, b1, w2, b2 = p
    y = _ln_ref(x, ln_g, ln_b)
    h = jnp.maximum(jnp.einsum('nchw,wm->nchm', y, w1) + b1, 0.0)
    return x + jnp.einsum('nchm,mw->nchw', h, w2) + b2


def _reference_forward(x, layers):
    for layer in layers:
        for p in layer:
            x = _ca_ref(x, p) if len(p) == 8 else _ffn_ref(x, p)
    return x


if __name__ == "__main__":
    # Shapes consistent with the module: C == W == dim, H*W == 128 (lane-dense).
    N, dim, H = 2, 16, 8
    depth, heads, mlp_dim, dropout = 1, 4, 32, 0.0   # heads/dropout unused in forward

    key = jax.random.PRNGKey(0)
    kx, kp = jax.random.split(key)
    x = jax.random.normal(kx, (N, dim, H, dim), dtype=jnp.float32)  # (N, C, H, W)

    layers = init_transformer_ca(kp, dim, depth, mlp_dim)

    fwd = jax.jit(transformer_ca_forward)
    out = jax.block_until_ready(fwd(x, layers))

    ref = _reference_forward(x, layers)
    if not bool(jnp.allclose(out, ref, rtol=5e-4, atol=5e-4)):
        raise AssertionError("Pallas output does not match reference")

    print("KERNEL_OK")
</pallas_src>

<mosaic_0001>
module attributes {stable_mosaic.version = 11 : i64} {
  func.func @kernel(%arg0: i32, %arg1: memref<1x16x128xf32, #tpu.memory_space<vmem>>, %arg2: memref<512x128xf32, #tpu.memory_space<vmem>>, %arg3: memref<1920x128xf32, #tpu.memory_space<vmem>>, %arg4: memref<1x16x128xf32, #tpu.memory_space<vmem>>) attributes {dimension_semantics = [#tpu.dimension_semantics<parallel>], iteration_bounds = array<i64: 2>, scalar_prefetch = 0 : i64, scratch_operands = 0 : i64, tpu.core_type = #tpu.core_type<tc>, window_params = [{transform_indices = @transform_0, window_bounds = array<i64: 1, 16, 128>}, {pipeline_mode = #tpu.pipeline_mode<synchronous>, transform_indices = @transform_1, window_bounds = array<i64: 512, 128>}, {pipeline_mode = #tpu.pipeline_mode<synchronous>, transform_indices = @transform_2, window_bounds = array<i64: 1920, 128>}, {transform_indices = @transform_3, window_bounds = array<i64: 1, 16, 128>}]} {
    %c0 = arith.constant 0 : index
    %c0_0 = arith.constant 0 : index
    %0 = vector.load %arg2[%c0, %c0_0] : memref<512x128xf32, #tpu.memory_space<vmem>>, vector<128x128xf32>
    %c128 = arith.constant 128 : index
    %c0_1 = arith.constant 0 : index
    %1 = vector.load %arg2[%c128, %c0_1] : memref<512x128xf32, #tpu.memory_space<vmem>>, vector<128x128xf32>
    %c256 = arith.constant 256 : index
    %c0_2 = arith.constant 0 : index
    %2 = vector.load %arg2[%c256, %c0_2] : memref<512x128xf32, #tpu.memory_space<vmem>>, vector<128x128xf32>
    %c384 = arith.constant 384 : index
    %c0_3 = arith.constant 0 : index
    %3 = vector.load %arg2[%c384, %c0_3] : memref<512x128xf32, #tpu.memory_space<vmem>>, vector<128x128xf32>
    %c0_4 = arith.constant 0 : index
    %c0_5 = arith.constant 0 : index
    %c0_6 = arith.constant 0 : index
    %4 = vector.load %arg1[%c0_4, %c0_5, %c0_6] : memref<1x16x128xf32, #tpu.memory_space<vmem>>, vector<1x16x128xf32>
    %5 = vector.shape_cast %4 : vector<1x16x128xf32> to vector<16x128xf32>
    %c0_7 = arith.constant 0 : index
    %c0_8 = arith.constant 0 : index
    %6 = vector.load %arg3[%c0_7, %c0_8] : memref<1920x128xf32, #tpu.memory_space<vmem>>, vector<1x128xf32>
    %c8 = arith.constant 8 : index
    %c0_9 = arith.constant 0 : index
    %7 = vector.load %arg3[%c8, %c0_9] : memref<1920x128xf32, #tpu.memory_space<vmem>>, vector<1x128xf32>
    %c16 = arith.constant 16 : index
    %c0_10 = arith.constant 0 : index
    %8 = vector.load %arg3[%c16, %c0_10] : memref<1920x128xf32, #tpu.memory_space<vmem>>, vector<8x128xf32>
    %9 = vector.extract_strided_slice %8 {offsets = [0, 0], sizes = [8, 16], strides = [1, 1]} : vector<8x128xf32> to vector<8x16xf32>
    %c24 = arith.constant 24 : index
    %c0_11 = arith.constant 0 : index
    %10 = vector.load %arg3[%c24, %c0_11] : memref<1920x128xf32, #tpu.memory_space<vmem>>, vector<8x128xf32>
    %c32 = arith.constant 32 : index
    %c0_12 = arith.constant 0 : index
    %11 = vector.load %arg3[%c32, %c0_12] : memref<1920x128xf32, #tpu.memory_space<vmem>>, vector<32x128xf32>
    %12 = vector.extract_strided_slice %11 {offsets = [0, 0], sizes = [32, 8], strides = [1, 1]} : vector<32x128xf32> to vector<32x8xf32>
    %c64 = arith.constant 64 : index
    %c0_13 = arith.constant 0 : index
    %13 = vector.load %arg3[%c64, %c0_13] : memref<1920x128xf32, #tpu.memory_space<vmem>>, vector<32x128xf32>
    %cst = arith.constant dense<0.000000e+00> : vector<16x128xf32>
    %14 = tpu.matmul %5, %0, %cst {dimension_numbers = #tpu.dot_dimension_numbers<[1], [0], [0], [1], [0, 0, 1, 1], [], []>} : vector<16x128xf32>, vector<128x128xf32>, vector<16x128xf32> -> vector<16x128xf32>
    %15 = arith.subf %5, %14 : vector<16x128xf32>
    %16 = arith.mulf %15, %15 : vector<16x128xf32>
    %cst_14 = arith.constant dense<0.000000e+00> : vector<16x128xf32>
    %17 = tpu.matmul %16, %0, %cst_14 {dimension_numbers = #tpu.dot_dimension_numbers<[1], [0], [0], [1], [0, 0, 1, 1], [], []>} : vector<16x128xf32>, vector<128x128xf32>, vector<16x128xf32> -> vector<16x128xf32>
    %cst_15 = arith.constant 9.99999974E-6 : f32
    %18 = vector.broadcast %cst_15 : f32 to vector<16x128xf32>
    %19 = arith.addf %17, %18 : vector<16x128xf32>
    %20 = math.rsqrt %19 : vector<16x128xf32>
    %21 = arith.mulf %15, %20 : vector<16x128xf32>
    %22 = vector.broadcast %6 : vector<1x128xf32> to vector<16x128xf32>
    %23 = arith.mulf %21, %22 : vector<16x128xf32>
    %24 = vector.broadcast %7 : vector<1x128xf32> to vector<16x128xf32>
    %25 = arith.addf %23, %24 : vector<16x128xf32>
    %cst_16 = arith.constant dense<0.000000e+00> : vector<16x128xf32>
    %26 = tpu.matmul %25, %1, %cst_16 {dimension_numbers = #tpu.dot_dimension_numbers<[1], [0], [0], [1], [0, 0, 1, 1], [], []>} : vector<16x128xf32>, vector<128x128xf32>, vector<16x128xf32> -> vector<16x128xf32>
    %cst_17 = arith.constant dense<0.000000e+00> : vector<8x128xf32>
    %27 = tpu.matmul %9, %26, %cst_17 {dimension_numbers = #tpu.dot_dimension_numbers<[1], [0], [0], [1], [0, 0, 1, 1], [], []>} : vector<8x16xf32>, vector<16x128xf32>, vector<8x128xf32> -> vector<8x128xf32>
    %28 = arith.addf %27, %10 : vector<8x128xf32>
    %cst_18 = arith.constant 3.000000e+00 : f32
    %29 = vector.broadcast %cst_18 : f32 to vector<8x128xf32>
    %30 = arith.addf %28, %29 : vector<8x128xf32>
    %cst_19 = arith.constant 0.000000e+00 : f32
    %cst_20 = arith.constant 6.000000e+00 : f32
    %31 = vector.broadcast %cst_19 : f32 to vector<8x128xf32>
    %32 = arith.maximumf %31, %30 : vector<8x128xf32>
    %33 = vector.broadcast %cst_20 : f32 to vector<8x128xf32>
    %34 = arith.minimumf %33, %32 : vector<8x128xf32>
    %cst_21 = arith.constant 0.166666672 : f32
    %35 = vector.broadcast %cst_21 : f32 to vector<8x128xf32>
    %36 = arith.mulf %34, %35 : vector<8x128xf32>
    %37 = arith.mulf %28, %36 : vector<8x128xf32>
    %cst_22 = arith.constant dense<0.000000e+00> : vector<32x128xf32>
    %38 = tpu.matmul %12, %37, %cst_22 {dimension_numbers = #tpu.dot_dimension_numbers<[1], [0], [0], [1], [0, 0, 1, 1], [], []>} : vector<32x8xf32>, vector<8x128xf32>, vector<32x128xf32> -> vector<32x128xf32>
    %39 = arith.addf %38, %13 : vector<32x128xf32>
    %40 = arith.negf %39 : vector<32x128xf32>
    %41 = math.exp %40 : vector<32x128xf32>
    %cst_23 = arith.constant 1.000000e+00 : f32
    %42 = vector.broadcast %cst_23 : f32 to vector<32x128xf32>
    %43 = arith.addf %42, %41 : vector<32x128xf32>
    %44 = arith.divf %42, %43 : vector<32x128xf32>
    %45 = vector.extract_strided_slice %44 {offsets = [0, 0], sizes = [16, 128], strides = [1, 1]} : vector<32x128xf32> to vector<16x128xf32>
    %cst_24 = arith.constant dense<0.000000e+00> : vector<16x128xf32>
    %46 = tpu.matmul %45, %2, %cst_24 {dimension_numbers = #tpu.dot_dimension_numbers<[1], [0], [0], [1], [0, 0, 1, 1], [], []>} : vector<16x128xf32>, vector<128x128xf32>, vector<16x128xf32> -> vector<16x128xf32>
    %47 = vector.extract_strided_slice %44 {offsets = [16, 0], sizes = [16, 128], strides = [1, 1]} : vector<32x128xf32> to vector<16x128xf32>
    %cst_25 = arith.constant dense<0.000000e+00> : vector<16x128xf32>
    %48 = tpu.matmul %47, %3, %cst_25 {dimension_numbers = #tpu.dot_dimension_numbers<[1], [0], [0], [1], [0, 0, 1, 1], [], []>} : vector<16x128xf32>, vector<128x128xf32>, vector<16x128xf32> -> vector<16x128xf32>
    %49 = arith.mulf %25, %46 : vector<16x128xf32>
    %50 = arith.mulf %49, %48 : vector<16x128xf32>
    %51 = arith.addf %5, %50 : vector<16x128xf32>
    %c96 = arith.constant 96 : index
    %c0_26 = arith.constant 0 : index
    %52 = vector.load %arg3[%c96, %c0_26] : memref<1920x128xf32, #tpu.memory_space<vmem>>, vector<1x128xf32>
    %c104 = arith.constant 104 : index
    %c0_27 = arith.constant 0 : index
    %53 = vector.load %arg3[%c104, %c0_27] : memref<1920x128xf32, #tpu.memory_space<vmem>>, vector<1x128xf32>
    %c368 = arith.constant 368 : index
    %c0_28 = arith.constant 0 : index
    %54 = vector.load %arg3[%c368, %c0_28] : memref<1920x128xf32, #tpu.memory_space<vmem>>, vector<2x128xf32>
    %c632 = arith.constant 632 : index
    %c0_29 = arith.constant 0 : index
    %55 = vector.load %arg3[%c632, %c0_29] : memref<1920x128xf32, #tpu.memory_space<vmem>>, vector<1x128xf32>
    %cst_30 = arith.constant dense<0.000000e+00> : vector<16x128xf32>
    %56 = tpu.matmul %51, %0, %cst_30 {dimension_numbers = #tpu.dot_dimension_numbers<[1], [0], [0], [1], [0, 0, 1, 1], [], []>} : vector<16x128xf32>, vector<128x128xf32>, vector<16x128xf32> -> vector<16x128xf32>
    %57 = arith.subf %51, %56 : vector<16x128xf32>
    %58 = arith.mulf %57, %57 : vector<16x128xf32>
    %cst_31 = arith.constant dense<0.000000e+00> : vector<16x128xf32>
    %59 = tpu.matmul %58, %0, %cst_31 {dimension_numbers = #tpu.dot_dimension_numbers<[1], [0], [0], [1], [0, 0, 1, 1], [], []>} : vector<16x128xf32>, vector<128x128xf32>, vector<16x128xf32> -> vector<16x128xf32>
    %cst_32 = arith.constant 9.99999974E-6 : f32
    %60 = vector.broadcast %cst_32 : f32 to vector<16x128xf32>
    %61 = arith.addf %59, %60 : vector<16x128xf32>
    %62 = math.rsqrt %61 : vector<16x128xf32>
    %63 = arith.mulf %57, %62 : vector<16x128xf32>
    %64 = vector.broadcast %52 : vector<1x128xf32> to vector<16x128xf32>
    %65 = arith.mulf %63, %64 : vector<16x128xf32>
    %66 = vector.broadcast %53 : vector<1x128xf32> to vector<16x128xf32>
    %67 = arith.addf %65, %66 : vector<16x128xf32>
    %cst_33 = arith.constant 0.000000e+00 : f32
    %68 = vector.broadcast %cst_33 : f32 to vector<16x128xf32>
    %c112 = arith.constant 112 : index
    %c0_34 = arith.constant 0 : index
    %69 = vector.load %arg3[%c112, %c0_34] : memref<1920x128xf32, #tpu.memory_space<vmem>>, vector<128x128xf32>
    %c376 = arith.constant 376 : index
    %c0_35 = arith.constant 0 : index
    %70 = vector.load %arg3[%c376, %c0_35] : memref<1920x128xf32, #tpu.memory_space<vmem>>, vector<128x128xf32>
    %cst_36 = arith.constant dense<0.000000e+00> : vector<16x128xf32>
    %71 = tpu.matmul %67, %69, %cst_36 {dimension_numbers = #tpu.dot_dimension_numbers<[1], [0], [0], [1], [0, 0, 1, 1], [], []>} : vector<16x128xf32>, vector<128x128xf32>, vector<16x128xf32> -> vector<16x128xf32>
    %72 = vector.extract_strided_slice %54 {offsets = [0, 0], sizes = [1, 128], strides = [1, 1]} : vector<2x128xf32> to vector<1x128xf32>
    %73 = vector.broadcast %72 : vector<1x128xf32> to vector<16x128xf32>
    %74 = arith.addf %71, %73 : vector<16x128xf32>
    %cst_37 = arith.constant 0.000000e+00 : f32
    %75 = vector.broadcast %cst_37 : f32 to vector<16x128xf32>
    %76 = arith.maximumf %74, %75 : vector<16x128xf32>
    %cst_38 = arith.constant dense<0.000000e+00> : vector<16x128xf32>
    %77 = tpu.matmul %76, %70, %cst_38 {dimension_numbers = #tpu.dot_dimension_numbers<[1], [0], [0], [1], [0, 0, 1, 1], [], []>} : vector<16x128xf32>, vector<128x128xf32>, vector<16x128xf32> -> vector<16x128xf32>
    %78 = arith.addf %68, %77 : vector<16x128xf32>
    %c240 = arith.constant 240 : index
    %c0_39 = arith.constant 0 : index
    %79 = vector.load %arg3[%c240, %c0_39] : memref<1920x128xf32, #tpu.memory_space<vmem>>, vector<128x128xf32>
    %c504 = arith.constant 504 : index
    %c0_40 = arith.constant 0 : index
    %80 = vector.load %arg3[%c504, %c0_40] : memref<1920x128xf32, #tpu.memory_space<vmem>>, vector<128x128xf32>
    %cst_41 = arith.constant dense<0.000000e+00> : vector<16x128xf32>
    %81 = tpu.matmul %67, %79, %cst_41 {dimension_numbers = #tpu.dot_dimension_numbers<[1], [0], [0], [1], [0, 0, 1, 1], [], []>} : vector<16x128xf32>, vector<128x128xf32>, vector<16x128xf32> -> vector<16x128xf32>
    %82 = vector.extract_strided_slice %54 {offsets = [1, 0], sizes = [1, 128], strides = [1, 1]} : vector<2x128xf32> to vector<1x128xf32>
    %83 = vector.broadcast %82 : vector<1x128xf32> to vector<16x128xf32>
    %84 = arith.addf %81, %83 : vector<16x128xf32>
    %cst_42 = arith.constant 0.000000e+00 : f32
    %85 = vector.broadcast %cst_42 : f32 to vector<16x128xf32>
    %86 = arith.maximumf %84, %85 : vector<16x128xf32>
    %cst_43 = arith.constant dense<0.000000e+00> : vector<16x128xf32>
    %87 = tpu.matmul %86, %80, %cst_43 {dimension_numbers = #tpu.dot_dimension_numbers<[1], [0], [0], [1], [0, 0, 1, 1], [], []>} : vector<16x128xf32>, vector<128x128xf32>, vector<16x128xf32> -> vector<16x128xf32>
    %88 = arith.addf %78, %87 : vector<16x128xf32>
    %89 = arith.addf %51, %88 : vector<16x128xf32>
    %90 = vector.broadcast %55 : vector<1x128xf32> to vector<16x128xf32>
    %91 = arith.addf %89, %90 : vector<16x128xf32>
    %c640 = arith.constant 640 : index
    %c0_44 = arith.constant 0 : index
    %92 = vector.load %arg3[%c640, %c0_44] : memref<1920x128xf32, #tpu.memory_space<vmem>>, vector<1x128xf32>
    %c648 = arith.constant 648 : index
    %c0_45 = arith.constant 0 : index
    %93 = vector.load %arg3[%c648, %c0_45] : memref<1920x128xf32, #tpu.memory_space<vmem>>, vector<1x128xf32>
    %c656 = arith.constant 656 : index
    %c0_46 = arith.constant 0 : index
    %94 = vector.load %arg3[%c656, %c0_46] : memref<1920x128xf32, #tpu.memory_space<vmem>>, vector<8x128xf32>
    %95 = vector.extract_strided_slice %94 {offsets = [0, 0], sizes = [8, 16], strides = [1, 1]} : vector<8x128xf32> to vector<8x16xf32>
    %c664 = arith.constant 664 : index
    %c0_47 = arith.constant 0 : index
    %96 = vector.load %arg3[%c664, %c0_47] : memref<1920x128xf32, #tpu.memory_space<vmem>>, vector<8x128xf32>
    %c672 = arith.constant 672 : index
    %c0_48 = arith.constant 0 : index
    %97 = vector.load %arg3[%c672, %c0_48] : memref<1920x128xf32, #tpu.memory_space<vmem>>, vector<32x128xf32>
    %98 = vector.extract_strided_slice %97 {offsets = [0, 0], sizes = [32, 8], strides = [1, 1]} : vector<32x128xf32> to vector<32x8xf32>
    %c704 = arith.constant 704 : index
    %c0_49 = arith.constant 0 : index
    %99 = vector.load %arg3[%c704, %c0_49] : memref<1920x128xf32, #tpu.memory_space<vmem>>, vector<32x128xf32>
    %cst_50 = arith.constant dense<0.000000e+00> : vector<16x128xf32>
    %100 = tpu.matmul %91, %0, %cst_50 {dimension_numbers = #tpu.dot_dimension_numbers<[1], [0], [0], [1], [0, 0, 1, 1], [], []>} : vector<16x128xf32>, vector<128x128xf32>, vector<16x128xf32> -> vector<16x128xf32>
    %101 = arith.subf %91, %100 : vector<16x128xf32>
    %102 = arith.mulf %101, %101 : vector<16x128xf32>
    %cst_51 = arith.constant dense<0.000000e+00> : vector<16x128xf32>
    %103 = tpu.matmul %102, %0, %cst_51 {dimension_numbers = #tpu.dot_dimension_numbers<[1], [0], [0], [1], [0, 0, 1, 1], [], []>} : vector<16x128xf32>, vector<128x128xf32>, vector<16x128xf32> -> vector<16x128xf32>
    %cst_52 = arith.constant 9.99999974E-6 : f32
    %104 = vector.broadcast %cst_52 : f32 to vector<16x128xf32>
    %105 = arith.addf %103, %104 : vector<16x128xf32>
    %106 = math.rsqrt %105 : vector<16x128xf32>
    %107 = arith.mulf %101, %106 : vector<16x128xf32>
    %108 = vector.broadcast %92 : vector<1x128xf32> to vector<16x128xf32>
    %109 = arith.mulf %107, %108 : vector<16x128xf32>
    %110 = vector.broadcast %93 : vector<1x128xf32> to vector<16x128xf32>
    %111 = arith.addf %109, %110 : vector<16x128xf32>
    %cst_53 = arith.constant dense<0.000000e+00> : vector<16x128xf32>
    %112 = tpu.matmul %111, %1, %cst_53 {dimension_numbers = #tpu.dot_dimension_numbers<[1], [0], [0], [1], [0, 0, 1, 1], [], []>} : vector<16x128xf32>, vector<128x128xf32>, vector<16x128xf32> -> vector<16x128xf32>
    %cst_54 = arith.constant dense<0.000000e+00> : vector<8x128xf32>
    %113 = tpu.matmul %95, %112, %cst_54 {dimension_numbers = #tpu.dot_dimension_numbers<[1], [0], [0], [1], [0, 0, 1, 1], [], []>} : vector<8x16xf32>, vector<16x128xf32>, vector<8x128xf32> -> vector<8x128xf32>
    %114 = arith.addf %113, %96 : vector<8x128xf32>
    %cst_55 = arith.constant 3.000000e+00 : f32
    %115 = vector.broadcast %cst_55 : f32 to vector<8x128xf32>
    %116 = arith.addf %114, %115 : vector<8x128xf32>
    %cst_56 = arith.constant 0.000000e+00 : f32
    %cst_57 = arith.constant 6.000000e+00 : f32
    %117 = vector.broadcast %cst_56 : f32 to vector<8x128xf32>
    %118 = arith.maximumf %117, %116 : vector<8x128xf32>
    %119 = vector.broadcast %cst_57 : f32 to vector<8x128xf32>
    %120 = arith.minimumf %119, %118 : vector<8x128xf32>
    %cst_58 = arith.constant 0.166666672 : f32
    %121 = vector.broadcast %cst_58 : f32 to vector<8x128xf32>
    %122 = arith.mulf %120, %121 : vector<8x128xf32>
    %123 = arith.mulf %114, %122 : vector<8x128xf32>
    %cst_59 = arith.constant dense<0.000000e+00> : vector<32x128xf32>
    %124 = tpu.matmul %98, %123, %cst_59 {dimension_numbers = #tpu.dot_dimension_numbers<[1], [0], [0], [1], [0, 0, 1, 1], [], []>} : vector<32x8xf32>, vector<8x128xf32>, vector<32x128xf32> -> vector<32x128xf32>
    %125 = arith.addf %124, %99 : vector<32x128xf32>
    %126 = arith.negf %125 : vector<32x128xf32>
    %127 = math.exp %126 : vector<32x128xf32>
    %cst_60 = arith.constant 1.000000e+00 : f32
    %128 = vector.broadcast %cst_60 : f32 to vector<32x128xf32>
    %129 = arith.addf %128, %127 : vector<32x128xf32>
    %130 = arith.divf %128, %129 : vector<32x128xf32>
    %131 = vector.extract_strided_slice %130 {offsets = [0, 0], sizes = [16, 128], strides = [1, 1]} : vector<32x128xf32> to vector<16x128xf32>
    %cst_61 = arith.constant dense<0.000000e+00> : vector<16x128xf32>
    %132 = tpu.matmul %131, %2, %cst_61 {dimension_numbers = #tpu.dot_dimension_numbers<[1], [0], [0], [1], [0, 0, 1, 1], [], []>} : vector<16x128xf32>, vector<128x128xf32>, vector<16x128xf32> -> vector<16x128xf32>
    %133 = vector.extract_strided_slice %130 {offsets = [16, 0], sizes = [16, 128], strides = [1, 1]} : vector<32x128xf32> to vector<16x128xf32>
    %cst_62 = arith.constant dense<0.000000e+00> : vector<16x128xf32>
    %134 = tpu.matmul %133, %3, %cst_62 {dimension_numbers = #tpu.dot_dimension_numbers<[1], [0], [0], [1], [0, 0, 1, 1], [], []>} : vector<16x128xf32>, vector<128x128xf32>, vector<16x128xf32> -> vector<16x128xf32>
    %135 = arith.mulf %111, %132 : vector<16x128xf32>
    %136 = arith.mulf %135, %134 : vector<16x128xf32>
    %137 = arith.addf %91, %136 : vector<16x128xf32>
    %c736 = arith.constant 736 : index
    %c0_63 = arith.constant 0 : index
    %138 = vector.load %arg3[%c736, %c0_63] : memref<1920x128xf32, #tpu.memory_space<vmem>>, vector<1x128xf32>
    %c744 = arith.constant 744 : index
    %c0_64 = arith.constant 0 : index
    %139 = vector.load %arg3[%c744, %c0_64] : memref<1920x128xf32, #tpu.memory_space<vmem>>, vector<1x128xf32>
    %c1008 = arith.constant 1008 : index
    %c0_65 = arith.constant 0 : index
    %140 = vector.load %arg3[%c1008, %c0_65] : memref<1920x128xf32, #tpu.memory_space<vmem>>, vector<2x128xf32>
    %c1272 = arith.constant 1272 : index
    %c0_66 = arith.constant 0 : index
    %141 = vector.load %arg3[%c1272, %c0_66] : memref<1920x128xf32, #tpu.memory_space<vmem>>, vector<1x128xf32>
    %cst_67 = arith.constant dense<0.000000e+00> : vector<16x128xf32>
    %142 = tpu.matmul %137, %0, %cst_67 {dimension_numbers = #tpu.dot_dimension_numbers<[1], [0], [0], [1], [0, 0, 1, 1], [], []>} : vector<16x128xf32>, vector<128x128xf32>, vector<16x128xf32> -> vector<16x128xf32>
    %143 = arith.subf %137, %142 : vector<16x128xf32>
    %144 = arith.mulf %143, %143 : vector<16x128xf32>
    %cst_68 = arith.constant dense<0.000000e+00> : vector<16x128xf32>
    %145 = tpu.matmul %144, %0, %cst_68 {dimension_numbers = #tpu.dot_dimension_numbers<[1], [0], [0], [1], [0, 0, 1, 1], [], []>} : vector<16x128xf32>, vector<128x128xf32>, vector<16x128xf32> -> vector<16x128xf32>
    %cst_69 = arith.constant 9.99999974E-6 : f32
    %146 = vector.broadcast %cst_69 : f32 to vector<16x128xf32>
    %147 = arith.addf %145, %146 : vector<16x128xf32>
    %148 = math.rsqrt %147 : vector<16x128xf32>
    %149 = arith.mulf %143, %148 : vector<16x128xf32>
    %150 = vector.broadcast %138 : vector<1x128xf32> to vector<16x128xf32>
    %151 = arith.mulf %149, %150 : vector<16x128xf32>
    %152 = vector.broadcast %139 : vector<1x128xf32> to vector<16x128xf32>
    %153 = arith.addf %151, %152 : vector<16x128xf32>
    %cst_70 = arith.constant 0.000000e+00 : f32
    %154 = vector.broadcast %cst_70 : f32 to vector<16x128xf32>
    %c752 = arith.constant 752 : index
    %c0_71 = arith.constant 0 : index
    %155 = vector.load %arg3[%c752, %c0_71] : memref<1920x128xf32, #tpu.memory_space<vmem>>, vector<128x128xf32>
    %c1016 = arith.constant 1016 : index
    %c0_72 = arith.constant 0 : index
    %156 = vector.load %arg3[%c1016, %c0_72] : memref<1920x128xf32, #tpu.memory_space<vmem>>, vector<128x128xf32>
    %cst_73 = arith.constant dense<0.000000e+00> : vector<16x128xf32>
    %157 = tpu.matmul %153, %155, %cst_73 {dimension_numbers = #tpu.dot_dimension_numbers<[1], [0], [0], [1], [0, 0, 1, 1], [], []>} : vector<16x128xf32>, vector<128x128xf32>, vector<16x128xf32> -> vector<16x128xf32>
    %158 = vector.extract_strided_slice %140 {offsets = [0, 0], sizes = [1, 128], strides = [1, 1]} : vector<2x128xf32> to vector<1x128xf32>
    %159 = vector.broadcast %158 : vector<1x128xf32> to vector<16x128xf32>
    %160 = arith.addf %157, %159 : vector<16x128xf32>
    %cst_74 = arith.constant 0.000000e+00 : f32
    %161 = vector.broadcast %cst_74 : f32 to vector<16x128xf32>
    %162 = arith.maximumf %160, %161 : vector<16x128xf32>
    %cst_75 = arith.constant dense<0.000000e+00> : vector<16x128xf32>
    %163 = tpu.matmul %162, %156, %cst_75 {dimension_numbers = #tpu.dot_dimension_numbers<[1], [0], [0], [1], [0, 0, 1, 1], [], []>} : vector<16x128xf32>, vector<128x128xf32>, vector<16x128xf32> -> vector<16x128xf32>
    %164 = arith.addf %154, %163 : vector<16x128xf32>
    %c880 = arith.constant 880 : index
    %c0_76 = arith.constant 0 : index
    %165 = vector.load %arg3[%c880, %c0_76] : memref<1920x128xf32, #tpu.memory_space<vmem>>, vector<128x128xf32>
    %c1144 = arith.constant 1144 : index
    %c0_77 = arith.constant 0 : index
    %166 = vector.load %arg3[%c1144, %c0_77] : memref<1920x128xf32, #tpu.memory_space<vmem>>, vector<128x128xf32>
    %cst_78 = arith.constant dense<0.000000e+00> : vector<16x128xf32>
    %167 = tpu.matmul %153, %165, %cst_78 {dimension_numbers = #tpu.dot_dimension_numbers<[1], [0], [0], [1], [0, 0, 1, 1], [], []>} : vector<16x128xf32>, vector<128x128xf32>, vector<16x128xf32> -> vector<16x128xf32>
    %168 = vector.extract_strided_slice %140 {offsets = [1, 0], sizes = [1, 128], strides = [1, 1]} : vector<2x128xf32> to vector<1x128xf32>
    %169 = vector.broadcast %168 : vector<1x128xf32> to vector<16x128xf32>
    %170 = arith.addf %167, %169 : vector<16x128xf32>
    %cst_79 = arith.constant 0.000000e+00 : f32
    %171 = vector.broadcast %cst_79 : f32 to vector<16x128xf32>
    %172 = arith.maximumf %170, %171 : vector<16x128xf32>
    %cst_80 = arith.constant dense<0.000000e+00> : vector<16x128xf32>
    %173 = tpu.matmul %172, %166, %cst_80 {dimension_numbers = #tpu.dot_dimension_numbers<[1], [0], [0], [1], [0, 0, 1, 1], [], []>} : vector<16x128xf32>, vector<128x128xf32>, vector<16x128xf32> -> vector<16x128xf32>
    %174 = arith.addf %164, %173 : vector<16x128xf32>
    %175 = arith.addf %137, %174 : vector<16x128xf32>
    %176 = vector.broadcast %141 : vector<1x128xf32> to vector<16x128xf32>
    %177 = arith.addf %175, %176 : vector<16x128xf32>
    %c1280 = arith.constant 1280 : index
    %c0_81 = arith.constant 0 : index
    %178 = vector.load %arg3[%c1280, %c0_81] : memref<1920x128xf32, #tpu.memory_space<vmem>>, vector<1x128xf32>
    %c1288 = arith.constant 1288 : index
    %c0_82 = arith.constant 0 : index
    %179 = vector.load %arg3[%c1288, %c0_82] : memref<1920x128xf32, #tpu.memory_space<vmem>>, vector<1x128xf32>
    %c1296 = arith.constant 1296 : index
    %c0_83 = arith.constant 0 : index
    %180 = vector.load %arg3[%c1296, %c0_83] : memref<1920x128xf32, #tpu.memory_space<vmem>>, vector<8x128xf32>
    %181 = vector.extract_strided_slice %180 {offsets = [0, 0], sizes = [8, 16], strides = [1, 1]} : vector<8x128xf32> to vector<8x16xf32>
    %c1304 = arith.constant 1304 : index
    %c0_84 = arith.constant 0 : index
    %182 = vector.load %arg3[%c1304, %c0_84] : memref<1920x128xf32, #tpu.memory_space<vmem>>, vector<8x128xf32>
    %c1312 = arith.constant 1312 : index
    %c0_85 = arith.constant 0 : index
    %183 = vector.load %arg3[%c1312, %c0_85] : memref<1920x128xf32, #tpu.memory_space<vmem>>, vector<32x128xf32>
    %184 = vector.extract_strided_slice %183 {offsets = [0, 0], sizes = [32, 8], strides = [1, 1]} : vector<32x128xf32> to vector<32x8xf32>
    %c1344 = arith.constant 1344 : index
    %c0_86 = arith.constant 0 : index
    %185 = vector.load %arg3[%c1344, %c0_86] : memref<1920x128xf32, #tpu.memory_space<vmem>>, vector<32x128xf32>
    %cst_87 = arith.constant dense<0.000000e+00> : vector<16x128xf32>
    %186 = tpu.matmul %177, %0, %cst_87 {dimension_numbers = #tpu.dot_dimension_numbers<[1], [0], [0], [1], [0, 0, 1, 1], [], []>} : vector<16x128xf32>, vector<128x128xf32>, vector<16x128xf32> -> vector<16x128xf32>
    %187 = arith.subf %177, %186 : vector<16x128xf32>
    %188 = arith.mulf %187, %187 : vector<16x128xf32>
    %cst_88 = arith.constant dense<0.000000e+00> : vector<16x128xf32>
    %189 = tpu.matmul %188, %0, %cst_88 {dimension_numbers = #tpu.dot_dimension_numbers<[1], [0], [0], [1], [0, 0, 1, 1], [], []>} : vector<16x128xf32>, vector<128x128xf32>, vector<16x128xf32> -> vector<16x128xf32>
    %cst_89 = arith.constant 9.99999974E-6 : f32
    %190 = vector.broadcast %cst_89 : f32 to vector<16x128xf32>
    %191 = arith.addf %189, %190 : vector<16x128xf32>
    %192 = math.rsqrt %191 : vector<16x128xf32>
    %193 = arith.mulf %187, %192 : vector<16x128xf32>
    %194 = vector.broadcast %178 : vector<1x128xf32> to vector<16x128xf32>
    %195 = arith.mulf %193, %194 : vector<16x128xf32>
    %196 = vector.broadcast %179 : vector<1x128xf32> to vector<16x128xf32>
    %197 = arith.addf %195, %196 : vector<16x128xf32>
    %cst_90 = arith.constant dense<0.000000e+00> : vector<16x128xf32>
    %198 = tpu.matmul %197, %1, %cst_90 {dimension_numbers = #tpu.dot_dimension_numbers<[1], [0], [0], [1], [0, 0, 1, 1], [], []>} : vector<16x128xf32>, vector<128x128xf32>, vector<16x128xf32> -> vector<16x128xf32>
    %cst_91 = arith.constant dense<0.000000e+00> : vector<8x128xf32>
    %199 = tpu.matmul %181, %198, %cst_91 {dimension_numbers = #tpu.dot_dimension_numbers<[1], [0], [0], [1], [0, 0, 1, 1], [], []>} : vector<8x16xf32>, vector<16x128xf32>, vector<8x128xf32> -> vector<8x128xf32>
    %200 = arith.addf %199, %182 : vector<8x128xf32>
    %cst_92 = arith.constant 3.000000e+00 : f32
    %201 = vector.broadcast %cst_92 : f32 to vector<8x128xf32>
    %202 = arith.addf %200, %201 : vector<8x128xf32>
    %cst_93 = arith.constant 0.000000e+00 : f32
    %cst_94 = arith.constant 6.000000e+00 : f32
    %203 = vector.broadcast %cst_93 : f32 to vector<8x128xf32>
    %204 = arith.maximumf %203, %202 : vector<8x128xf32>
    %205 = vector.broadcast %cst_94 : f32 to vector<8x128xf32>
    %206 = arith.minimumf %205, %204 : vector<8x128xf32>
    %cst_95 = arith.constant 0.166666672 : f32
    %207 = vector.broadcast %cst_95 : f32 to vector<8x128xf32>
    %208 = arith.mulf %206, %207 : vector<8x128xf32>
    %209 = arith.mulf %200, %208 : vector<8x128xf32>
    %cst_96 = arith.constant dense<0.000000e+00> : vector<32x128xf32>
    %210 = tpu.matmul %184, %209, %cst_96 {dimension_numbers = #tpu.dot_dimension_numbers<[1], [0], [0], [1], [0, 0, 1, 1], [], []>} : vector<32x8xf32>, vector<8x128xf32>, vector<32x128xf32> -> vector<32x128xf32>
    %211 = arith.addf %210, %185 : vector<32x128xf32>
    %212 = arith.negf %211 : vector<32x128xf32>
    %213 = math.exp %212 : vector<32x128xf32>
    %cst_97 = arith.constant 1.000000e+00 : f32
    %214 = vector.broadcast %cst_97 : f32 to vector<32x128xf32>
    %215 = arith.addf %214, %213 : vector<32x128xf32>
    %216 = arith.divf %214, %215 : vector<32x128xf32>
    %217 = vector.extract_strided_slice %216 {offsets = [0, 0], sizes = [16, 128], strides = [1, 1]} : vector<32x128xf32> to vector<16x128xf32>
    %cst_98 = arith.constant dense<0.000000e+00> : vector<16x128xf32>
    %218 = tpu.matmul %217, %2, %cst_98 {dimension_numbers = #tpu.dot_dimension_numbers<[1], [0], [0], [1], [0, 0, 1, 1], [], []>} : vector<16x128xf32>, vector<128x128xf32>, vector<16x128xf32> -> vector<16x128xf32>
    %219 = vector.extract_strided_slice %216 {offsets = [16, 0], sizes = [16, 128], strides = [1, 1]} : vector<32x128xf32> to vector<16x128xf32>
    %cst_99 = arith.constant dense<0.000000e+00> : vector<16x128xf32>
    %220 = tpu.matmul %219, %3, %cst_99 {dimension_numbers = #tpu.dot_dimension_numbers<[1], [0], [0], [1], [0, 0, 1, 1], [], []>} : vector<16x128xf32>, vector<128x128xf32>, vector<16x128xf32> -> vector<16x128xf32>
    %221 = arith.mulf %197, %218 : vector<16x128xf32>
    %222 = arith.mulf %221, %220 : vector<16x128xf32>
    %223 = arith.addf %177, %222 : vector<16x128xf32>
    %c1376 = arith.constant 1376 : index
    %c0_100 = arith.constant 0 : index
    %224 = vector.load %arg3[%c1376, %c0_100] : memref<1920x128xf32, #tpu.memory_space<vmem>>, vector<1x128xf32>
    %c1384 = arith.constant 1384 : index
    %c0_101 = arith.constant 0 : index
    %225 = vector.load %arg3[%c1384, %c0_101] : memref<1920x128xf32, #tpu.memory_space<vmem>>, vector<1x128xf32>
    %c1648 = arith.constant 1648 : index
    %c0_102 = arith.constant 0 : index
    %226 = vector.load %arg3[%c1648, %c0_102] : memref<1920x128xf32, #tpu.memory_space<vmem>>, vector<2x128xf32>
    %c1912 = arith.constant 1912 : index
    %c0_103 = arith.constant 0 : index
    %227 = vector.load %arg3[%c1912, %c0_103] : memref<1920x128xf32, #tpu.memory_space<vmem>>, vector<1x128xf32>
    %cst_104 = arith.constant dense<0.000000e+00> : vector<16x128xf32>
    %228 = tpu.matmul %223, %0, %cst_104 {dimension_numbers = #tpu.dot_dimension_numbers<[1], [0], [0], [1], [0, 0, 1, 1], [], []>} : vector<16x128xf32>, vector<128x128xf32>, vector<16x128xf32> -> vector<16x128xf32>
    %229 = arith.subf %223, %228 : vector<16x128xf32>
    %230 = arith.mulf %229, %229 : vector<16x128xf32>
    %cst_105 = arith.constant dense<0.000000e+00> : vector<16x128xf32>
    %231 = tpu.matmul %230, %0, %cst_105 {dimension_numbers = #tpu.dot_dimension_numbers<[1], [0], [0], [1], [0, 0, 1, 1], [], []>} : vector<16x128xf32>, vector<128x128xf32>, vector<16x128xf32> -> vector<16x128xf32>
    %cst_106 = arith.constant 9.99999974E-6 : f32
    %232 = vector.broadcast %cst_106 : f32 to vector<16x128xf32>
    %233 = arith.addf %231, %232 : vector<16x128xf32>
    %234 = math.rsqrt %233 : vector<16x128xf32>
    %235 = arith.mulf %229, %234 : vector<16x128xf32>
    %236 = vector.broadcast %224 : vector<1x128xf32> to vector<16x128xf32>
    %237 = arith.mulf %235, %236 : vector<16x128xf32>
    %238 = vector.broadcast %225 : vector<1x128xf32> to vector<16x128xf32>
    %239 = arith.addf %237, %238 : vector<16x128xf32>
    %cst_107 = arith.constant 0.000000e+00 : f32
    %240 = vector.broadcast %cst_107 : f32 to vector<16x128xf32>
    %c1392 = arith.constant 1392 : index
    %c0_108 = arith.constant 0 : index
    %241 = vector.load %arg3[%c1392, %c0_108] : memref<1920x128xf32, #tpu.memory_space<vmem>>, vector<128x128xf32>
    %c1656 = arith.constant 1656 : index
    %c0_109 = arith.constant 0 : index
    %242 = vector.load %arg3[%c1656, %c0_109] : memref<1920x128xf32, #tpu.memory_space<vmem>>, vector<128x128xf32>
    %cst_110 = arith.constant dense<0.000000e+00> : vector<16x128xf32>
    %243 = tpu.matmul %239, %241, %cst_110 {dimension_numbers = #tpu.dot_dimension_numbers<[1], [0], [0], [1], [0, 0, 1, 1], [], []>} : vector<16x128xf32>, vector<128x128xf32>, vector<16x128xf32> -> vector<16x128xf32>
    %244 = vector.extract_strided_slice %226 {offsets = [0, 0], sizes = [1, 128], strides = [1, 1]} : vector<2x128xf32> to vector<1x128xf32>
    %245 = vector.broadcast %244 : vector<1x128xf32> to vector<16x128xf32>
    %246 = arith.addf %243, %245 : vector<16x128xf32>
    %cst_111 = arith.constant 0.000000e+00 : f32
    %247 = vector.broadcast %cst_111 : f32 to vector<16x128xf32>
    %248 = arith.maximumf %246, %247 : vector<16x128xf32>
    %cst_112 = arith.constant dense<0.000000e+00> : vector<16x128xf32>
    %249 = tpu.matmul %248, %242, %cst_112 {dimension_numbers = #tpu.dot_dimension_numbers<[1], [0], [0], [1], [0, 0, 1, 1], [], []>} : vector<16x128xf32>, vector<128x128xf32>, vector<16x128xf32> -> vector<16x128xf32>
    %250 = arith.addf %240, %249 : vector<16x128xf32>
    %c1520 = arith.constant 1520 : index
    %c0_113 = arith.constant 0 : index
    %251 = vector.load %arg3[%c1520, %c0_113] : memref<1920x128xf32, #tpu.memory_space<vmem>>, vector<128x128xf32>
    %c1784 = arith.constant 1784 : index
    %c0_114 = arith.constant 0 : index
    %252 = vector.load %arg3[%c1784, %c0_114] : memref<1920x128xf32, #tpu.memory_space<vmem>>, vector<128x128xf32>
    %cst_115 = arith.constant dense<0.000000e+00> : vector<16x128xf32>
    %253 = tpu.matmul %239, %251, %cst_115 {dimension_numbers = #tpu.dot_dimension_numbers<[1], [0], [0], [1], [0, 0, 1, 1], [], []>} : vector<16x128xf32>, vector<128x128xf32>, vector<16x128xf32> -> vector<16x128xf32>
    %254 = vector.extract_strided_slice %226 {offsets = [1, 0], sizes = [1, 128], strides = [1, 1]} : vector<2x128xf32> to vector<1x128xf32>
    %255 = vector.broadcast %254 : vector<1x128xf32> to vector<16x128xf32>
    %256 = arith.addf %253, %255 : vector<16x128xf32>
    %cst_116 = arith.constant 0.000000e+00 : f32
    %257 = vector.broadcast %cst_116 : f32 to vector<16x128xf32>
    %258 = arith.maximumf %256, %257 : vector<16x128xf32>
    %cst_117 = arith.constant dense<0.000000e+00> : vector<16x128xf32>
    %259 = tpu.matmul %258, %252, %cst_117 {dimension_numbers = #tpu.dot_dimension_numbers<[1], [0], [0], [1], [0, 0, 1, 1], [], []>} : vector<16x128xf32>, vector<128x128xf32>, vector<16x128xf32> -> vector<16x128xf32>
    %260 = arith.addf %250, %259 : vector<16x128xf32>
    %261 = arith.addf %223, %260 : vector<16x128xf32>
    %262 = vector.broadcast %227 : vector<1x128xf32> to vector<16x128xf32>
    %263 = arith.addf %261, %262 : vector<16x128xf32>
    %c0_118 = arith.constant 0 : index
    %c0_119 = arith.constant 0 : index
    %c0_120 = arith.constant 0 : index
    %264 = vector.load %arg4[%c0_118, %c0_119, %c0_120] : memref<1x16x128xf32, #tpu.memory_space<vmem>>, vector<1x16x128xf32>
    %265 = vector.shape_cast %264 : vector<1x16x128xf32> to vector<16x128xf32>
    %266 = vector.shape_cast %263 : vector<16x128xf32> to vector<1x16x128xf32>
    tpu.vector_store %arg4[%c0_118, %c0_119, %c0_120], %266 {strides = array<i32>} : memref<1x16x128xf32, #tpu.memory_space<vmem>>, vector<1x16x128xf32>,
    return
  }
  func.func @transform_0(%arg0: i32) -> (i32, i32, i32) {
    %c0_i32 = arith.constant 0 : i32
    %c0_i32_0 = arith.constant 0 : i32
    %c0_i32_1 = arith.constant 0 : i32
    return %arg0, %c0_i32, %c0_i32_0 : i32, i32, i32
  }
  func.func @transform_1(%arg0: i32) -> (i32, i32) {
    %c0_i32 = arith.constant 0 : i32
    %c0_i32_0 = arith.constant 0 : i32
    %c0_i32_1 = arith.constant 0 : i32
    return %c0_i32, %c0_i32_0 : i32, i32
  }
  func.func @transform_2(%arg0: i32) -> (i32, i32) {
    %c0_i32 = arith.constant 0 : i32
    %c0_i32_0 = arith.constant 0 : i32
    %c0_i32_1 = arith.constant 0 : i32
    return %c0_i32, %c0_i32_0 : i32, i32
  }
  func.func @transform_3(%arg0: i32) -> (i32, i32, i32) {
    %c0_i32 = arith.constant 0 : i32
    %c0_i32_0 = arith.constant 0 : i32
    %c0_i32_1 = arith.constant 0 : i32
    return %arg0, %c0_i32, %c0_i32_0 : i32, i32, i32
  }
}

</mosaic_0001>

<llo_original>
// kernel: tile.93
$region0: #{tile.93}
  #allocation0 [shape = 's32[1]{0}', space=sflag, size = 0x4, scoped, tag = 'scoped memory for tile.93']
  %s0 = inlined_call_operand.vmem [shape: f32[16], index: 0, kind: input, shape index: {}]
  %s1 = inlined_call_operand.vmem [shape: f32[8,16], index: 1, kind: output, shape index: {}]
  // Predicated region
  $region2: #{tile.93} parent=0 // pred_check
    _
  $region3: #{tile.93} parent=0 // pred_check_branch
    %3 = sbr.rel (0) target = $region5
  $region4: #{tile.93} parent=0 // pred_region
    _
  $region5: #{tile.93} parent=0 // pred_fallthru
    _
  %v4 = vld [vmem:[%s0] ss:$0 sm:$0xff]
  %5 = vst [vmem:[%s1] sm:$0xff] %v4

// kernel: tile.94
$region0: #{tile.94}
  %s0 = inlined_call_operand.vmem [shape: f32[8,16], index: 0, kind: input, shape index: {}]
  %s1 = inlined_call_operand.vmem [shape: f32[1,128], index: 1, kind: output, shape index: {}]
  $region1: #{tile.94} parent=0
    #allocation0 [shape = 'u8[4096]{0}', space=vmem, size = 0x1000, scoped, tag = 'scoped mem for output reshape']
    %v2 = vld [vmem:[%s0] sm:$0x1]
    %vm3 = vcmask 130048
    %4 = vst.msk [vmem:[#allocation0] sm:$0x1] %vm3, %v2
    %s5 = scalar_lea.vmem %s0, 7
    %v6 = vld [vmem:[%s5] sm:$0x1]
    %7 = vrot.lane.b32.xlu0 %v6, 112
    %v8 = vpop.permute.xlu0 %7
    %vm9 = vcmask 1048448
    %10 = vst.msk [vmem:[#allocation0] sm:$0x1] %vm9, %v8
    %s11 = scalar_lea.vmem %s0, 6
    %v12 = vld [vmem:[%s11] sm:$0x1]
    %13 = vrot.lane.b32.xlu0 %v12, 96
    %v14 = vpop.permute.xlu0 %13
    %vm15 = vcmask 917248
    %16 = vst.msk [vmem:[#allocation0] sm:$0x1] %vm15, %v14
    %s17 = scalar_lea.vmem %s0, 5
    %v18 = vld [vmem:[%s17] sm:$0x1]
    %19 = vrot.lane.b32.xlu0 %v18, 80
    %v20 = vpop.permute.xlu0 %19
    %vm21 = vcmask 786048
    %22 = vst.msk [vmem:[#allocation0] sm:$0x1] %vm21, %v20
    %s23 = scalar_lea.vmem %s0, 4
    %v24 = vld [vmem:[%s23] sm:$0x1]
    %25 = vrot.lane.b32.xlu0 %v24, 64
    %v26 = vpop.permute.xlu0 %25
    %vm27 = vcmask 654848
    %28 = vst.msk [vmem:[#allocation0] sm:$0x1] %vm27, %v26
    %s29 = scalar_lea.vmem %s0, 3
    %v30 = vld [vmem:[%s29] sm:$0x1]
    %31 = vrot.lane.b32.xlu0 %v30, 48
    %v32 = vpop.permute.xlu0 %31
    %vm33 = vcmask 523648
    %34 = vst.msk [vmem:[#allocation0] sm:$0x1] %vm33, %v32
    %s35 = scalar_lea.vmem %s0, 2
    %v36 = vld [vmem:[%s35] sm:$0x1]
    %37 = vrot.lane.b32.xlu0 %v36, 32
    %v38 = vpop.permute.xlu0 %37
    %vm39 = vcmask 392448
    %40 = vst.msk [vmem:[#allocation0] sm:$0x1] %vm39, %v38
    %s41 = scalar_lea.vmem %s0, 1
    %v42 = vld [vmem:[%s41] sm:$0x1]
    %43 = vrot.lane.b32.xlu0 %v42, 16
    %v44 = vpop.permute.xlu0 %43
    %vm45 = vcmask 261248
    %46 = vst.msk [vmem:[#allocation0] sm:$0x1] %vm45, %v44
    %s48 = sshllo.u32 0, 1
    %v50 = vld [vmem:[#allocation0] sm:%s48]
    %s51 = sshllo.u32 0, 1
    %52 = vst [vmem:[%s1] sm:%s51] %v50

// kernel: transformer_ca_forward.1
$region0: #{transformer_ca_forward.1}
  #allocation0 [shape = 'u32[]', space=smem, size = 0x4, offset = 0x4, fixed_abs, tag = 'smem constant byte address 0x4 - core index']
  #allocation1 [shape = 'u32[144,128]{1,0:T(1,128)}', space=vmem, size = 0x12000, scoped, tag = 'internal scratch']
  %s0 = inlined_call_operand.vmem [shape: f32[2,16,128], index: 0, kind: input, shape index: {}]
  %s1 = inlined_call_operand.vmem [shape: f32[512,128], index: 1, kind: input, shape index: {}]
  %s2 = inlined_call_operand.vmem [shape: f32[1920,128], index: 2, kind: input, shape index: {}]
  %s3 = inlined_call_operand.vmem [shape: f32[2,16,128], index: 3, kind: output, shape index: {}]
  %s4 = sld [smem:[#allocation0]]
  $region45: #{transformer_ca_forward.1} parent=0
    _
  %s6 = ssub.s32 1, %s4
  %s7 = scalar_select 0, %s6, %s4
  loop: start=0, step=1, limit=4
  $region2: #{transformer_ca_forward.1} parent=0 // loop_pre_header
    _
  $region3: #{transformer_ca_forward.1} parent=0 // loop_header
    %s9 = sphi 0, %s13
    %p10 = scmp.ge.s32.totalorder %s9, 4
    %s19 = sphi 0, %s21
    %s22 = sphi 0, %s19
    %s23 = sphi 0, %s22
    %s39 = sphi 0, %s23
    %s43 = sphi 0, %s43
    %s45 = sphi 0, %s43
    %s46 = sphi 0, %s45
    %s60 = sphi 0, %s46
    %s64 = sphi 0, %s64
    %s66 = sphi 0, %s64
    %s67 = sphi 0, %s66
    %s81 = sphi 0, %s67
    %s87 = sphi 0, %s89
    %s90 = sphi 0, %s87
    %s91 = sphi 0, %s90
    %s107 = sphi 0, %s91
  $region4: #{transformer_ca_forward.1} parent=0 // loop_header_branch
    %12 = sbr.rel (%p10) target = $region8
  $region5: #{transformer_ca_forward.1} parent=0 // loop_body
    %s14 = ssub.s32 %s9, 1
    %s15 = ssub.s32 %s9, 2
    %s16 = sadd.s32 %s9, 1
    %s17 = ssub.s32 %s9, %s16
    %p18 = scmp.eq.s32.totalorder %s17, 0
    %s20 = sadd.s32 %s19, 1
    %s21 = scalar_select %p18, %s19, %s20
    %p24 = pneg %p18
    %p25 = scmp.eq.s32.totalorder %s9, 1
    %p26 = por %p24, %p25
    %p27 = scmp.ne.s32.totalorder %s19, %s22
    %p28 = scmp.eq.s32.totalorder %s9, 0
    %p29 = por %p27, %p28
    %p30 = scmp.ne.s32.totalorder %s19, %s22
    %p31 = scmp.eq.s32.totalorder %s14, 1
    %p32 = por %p30, %p31
    %p33 = scmp.ne.s32.totalorder %s22, %s23
    %p34 = scmp.eq.s32.totalorder %s14, 0
    %p35 = por %p33, %p34
    %p36 = scmp.ne.s32.totalorder %s22, %s23
    %p37 = scmp.eq.s32.totalorder %s15, 1
    %p38 = por %p36, %p37
    %p40 = scmp.ne.s32.totalorder %s23, %s39
    %p41 = scmp.eq.s32.totalorder %s15, 0
    %p42 = por %p40, %p41
    %s44 = sadd.s32 %s43, 1
    %p47 = scmp.eq.s32.totalorder %s9, 1
    %p48 = scmp.ne.s32.totalorder %s43, %s45
    %p49 = scmp.eq.s32.totalorder %s9, 0
    %p50 = por %p48, %p49
    %p51 = scmp.ne.s32.totalorder %s43, %s45
    %p52 = scmp.eq.s32.totalorder %s14, 1
    %p53 = por %p51, %p52
    %p54 = scmp.ne.s32.totalorder %s45, %s46
    %p55 = scmp.eq.s32.totalorder %s14, 0
    %p56 = por %p54, %p55
    %p57 = scmp.ne.s32.totalorder %s45, %s46
    %p58 = scmp.eq.s32.totalorder %s15, 1
    %p59 = por %p57, %p58
    %p61 = scmp.ne.s32.totalorder %s46, %s60
    %p62 = scmp.eq.s32.totalorder %s15, 0
    %p63 = por %p61, %p62
    %s65 = sadd.s32 %s64, 1
    %p68 = scmp.eq.s32.totalorder %s9, 1
    %p69 = scmp.ne.s32.totalorder %s64, %s66
    %p70 = scmp.eq.s32.totalorder %s9, 0
    %p71 = por %p69, %p70
    %p72 = scmp.ne.s32.totalorder %s64, %s66
    %p73 = scmp.eq.s32.totalorder %s14, 1
    %p74 = por %p72, %p73
    %p75 = scmp.ne.s32.totalorder %s66, %s67
    %p76 = scmp.eq.s32.totalorder %s14, 0
    %p77 = por %p75, %p76
    %p78 = scmp.ne.s32.totalorder %s66, %s67
    %p79 = scmp.eq.s32.totalorder %s15, 1
    %p80 = por %p78, %p79
    %p82 = scmp.ne.s32.totalorder %s67, %s81
    %p83 = scmp.eq.s32.totalorder %s15, 0
    %p84 = por %p82, %p83
    %s85 = ssub.s32 %s9, %s16
    %p86 = scmp.eq.s32.totalorder %s85, 0
    %s88 = sadd.s32 %s87, 1
    %s89 = scalar_select %p86, %s87, %s88
    %p92 = pneg %p86
    %p93 = scmp.eq.s32.totalorder %s9, 1
    %p94 = por %p92, %p93
    %p95 = scmp.ne.s32.totalorder %s87, %s90
    %p96 = scmp.eq.s32.totalorder %s9, 0
    %p97 = por %p95, %p96
    %p98 = scmp.ne.s32.totalorder %s87, %s90
    %p99 = scmp.eq.s32.totalorder %s14, 1
    %p100 = por %p98, %p99
    %p101 = scmp.ne.s32.totalorder %s90, %s91
    %p102 = scmp.eq.s32.totalorder %s14, 0
    %p103 = por %p101, %p102
    %p104 = scmp.ne.s32.totalorder %s90, %s91
    %p105 = scmp.eq.s32.totalorder %s15, 1
    %p106 = por %p104, %p105
    %p108 = scmp.ne.s32.totalorder %s91, %s107
    %p109 = scmp.eq.s32.totalorder %s15, 0
    %p110 = por %p108, %p109
    %p111 = scmp.le.s32.totalorder 1, %s9
    %p112 = scmp.lt.s32.totalorder %s9, 3
    %p113 = pnand %p111, %p112
    %p114 = pneg %p113
    // Predicated region
    $region9: #{transformer_ca_forward.1} parent=5 // pred_check
      _
    $region10: #{transformer_ca_forward.1} parent=5 // pred_check_branch
      %116 = sbr.rel (%p113) target = $region12
    $region11: #{transformer_ca_forward.1} parent=5 // pred_region
      %s117 = ssub.s32 %s9, 1
      // Predicated region
      $region13: #{transformer_ca_forward.1} parent=11 // pred_check
        %p118 = pneg %p56
      $region14: #{transformer_ca_forward.1} parent=11 // pred_check_branch
        %120 = sbr.rel (%p118) target = $region16
      $region15: #{transformer_ca_forward.1} parent=11 // pred_region
        _
      $region16: #{transformer_ca_forward.1} parent=11 // pred_fallthru
        _
      // Predicated region
      $region17: #{transformer_ca_forward.1} parent=11 // pred_check
        %p121 = pneg %p77
      $region18: #{transformer_ca_forward.1} parent=11 // pred_check_branch
        %123 = sbr.rel (%p121) target = $region20
      $region19: #{transformer_ca_forward.1} parent=11 // pred_region
        _
      $region20: #{transformer_ca_forward.1} parent=11 // pred_fallthru
        _
    $region12: #{transformer_ca_forward.1} parent=5 // pred_fallthru
      _
    %p124 = scmp.lt.s32.totalorder %s9, 2
    // Predicated region
    $region21: #{transformer_ca_forward.1} parent=5 // pred_check
      %p125 = pneg %p124
    $region22: #{transformer_ca_forward.1} parent=5 // pred_check_branch
      %127 = sbr.rel (%p125) target = $region24
    $region23: #{transformer_ca_forward.1} parent=5 // pred_region
      // Predicated region
      $region25: #{transformer_ca_forward.1} parent=23 // pred_check
        %p128 = pneg %p29
      $region26: #{transformer_ca_forward.1} parent=23 // pred_check_branch
        %130 = sbr.rel (%p128) target = $region28
      $region27: #{transformer_ca_forward.1} parent=23 // pred_region
        %p131 = scmp.lt.s32.totalorder %s9, 1
        %s132 = scalar_select %p131, %s9, 1
        %s133 = smul.addr %s132, 2
        %s134 = smul.addr %s133, 8
        %s135 = scalar_lea.vmem %s0, %s134
      $region28: #{transformer_ca_forward.1} parent=23 // pred_fallthru
        _
    $region24: #{transformer_ca_forward.1} parent=5 // pred_fallthru
      _
    %p136 = scmp.le.s32.totalorder 1, %s9
    %p137 = scmp.lt.s32.totalorder %s9, 3
    %p138 = pnand %p136, %p137
    %p139 = pneg %p138
    // Predicated region
    $region29: #{transformer_ca_forward.1} parent=5 // pred_check
      _
    $region30: #{transformer_ca_forward.1} parent=5 // pred_check_branch
      %141 = sbr.rel (%p138) target = $region32
    $region31: #{transformer_ca_forward.1} parent=5 // pred_region
      %s142 = ssub.s32 %s9, 1
      %p143 = scmp.lt.s32.totalorder %s14, 1
      %s144 = scalar_select %p143, %s14, 1
      %s145 = smul.addr %s144, 2
      %s146 = smul.addr %s145, 8
      %s147 = scalar_lea.vmem %s0, %s146
      %p148 = pneg %p35
      %p149 = pneg %p32
      %p150 = pneg %p56
      %p151 = pneg %p53
      %p152 = pneg %p77
      %p153 = pneg %p74
      %p154 = pneg %p103
      %p155 = pneg %p100
      %p156 = scmp.lt.s32.totalorder %s14, 1
      %s157 = scalar_select %p156, %s14, 1
      %s158 = smul.addr %s157, 2
      %s159 = smul.addr %s158, 8
      %s160 = scalar_lea.vmem %s3, %s159
      %p161 = scmp.lt.s32.totalorder %s14, 1
      %s162 = scalar_select %p161, %s14, 1
      %s163 = smul.addr %s162, 2
      %s164 = smul.addr %s163, 8
      %s165 = scalar_lea.vmem %s0, %s164
      %p166 = scmp.lt.s32.totalorder %s14, 1
      %s167 = scalar_select %p166, %s14, 1
      %s168 = smul.addr %s167, 2
      %s169 = smul.addr %s168, 8
      %s170 = scalar_lea.vmem %s3, %s169
      %v171 = vld [vmem:[%s1] sm:$0xff]
      %v172 = vld [vmem:[%s1 + $0x8] sm:$0xff]
      %v173 = vld [vmem:[%s1 + $0x10] sm:$0xff]
      %v174 = vld [vmem:[%s1 + $0x18] sm:$0xff]
      %v175 = vld [vmem:[%s1 + $0x20] sm:$0xff]
      %v176 = vld [vmem:[%s1 + $0x28] sm:$0xff]
      %v177 = vld [vmem:[%s1 + $0x30] sm:$0xff]
      %v178 = vld [vmem:[%s1 + $0x38] sm:$0xff]
      %v179 = vld [vmem:[%s1 + $0x40] sm:$0xff]
      %v180 = vld [vmem:[%s1 + $0x48] sm:$0xff]
      %v181 = vld [vmem:[%s1 + $0x50] sm:$0xff]
      %v182 = vld [vmem:[%s1 + $0x58] sm:$0xff]
      %v183 = vld [vmem:[%s1 + $0x60] sm:$0xff]
      %v184 = vld [vmem:[%s1 + $0x68] sm:$0xff]
      %v185 = vld [vmem:[%s1 + $0x70] sm:$0xff]
      %v186 = vld [vmem:[%s1 + $0x78] sm:$0xff]
      %v187 = vld [vmem:[%s1 + $0x80] sm:$0xff]
      %v188 = vld [vmem:[%s1 + $0x88] sm:$0xff]
      %v189 = vld [vmem:[%s1 + $0x90] sm:$0xff]
      %v190 = vld [vmem:[%s1 + $0x98] sm:$0xff]
      %v191 = vld [vmem:[%s1 + $0xa0] sm:$0xff]
      %v192 = vld [vmem:[%s1 + $0xa8] sm:$0xff]
      %v193 = vld [vmem:[%s1 + $0xb0] sm:$0xff]
      %v194 = vld [vmem:[%s1 + $0xb8] sm:$0xff]
      %v195 = vld [vmem:[%s1 + $0xc0] sm:$0xff]
      %v196 = vld [vmem:[%s1 + $0xc8] sm:$0xff]
      %v197 = vld [vmem:[%s1 + $0xd0] sm:$0xff]
      %v198 = vld [vmem:[%s1 + $0xd8] sm:$0xff]
      %v199 = vld [vmem:[%s1 + $0xe0] sm:$0xff]
      %v200 = vld [vmem:[%s1 + $0xe8] sm:$0xff]
      %v201 = vld [vmem:[%s1 + $0xf0] sm:$0xff]
      %v202 = vld [vmem:[%s1 + $0xf8] sm:$0xff]
      %v203 = vld [vmem:[%s1 + $0x100] sm:$0xff]
      %v204 = vld [vmem:[%s1 + $0x108] sm:$0xff]
      %v205 = vld [vmem:[%s1 + $0x110] sm:$0xff]
      %v206 = vld [vmem:[%s1 + $0x118] sm:$0xff]
      %v207 = vld [vmem:[%s1 + $0x120] sm:$0xff]
      %v208 = vld [vmem:[%s1 + $0x128] sm:$0xff]
      %v209 = vld [vmem:[%s1 + $0x130] sm:$0xff]
      %v210 = vld [vmem:[%s1 + $0x138] sm:$0xff]
      %v211 = vld [vmem:[%s1 + $0x140] sm:$0xff]
      %v212 = vld [vmem:[%s1 + $0x148] sm:$0xff]
      %v213 = vld [vmem:[%s1 + $0x150] sm:$0xff]
      %v214 = vld [vmem:[%s1 + $0x158] sm:$0xff]
      %v215 = vld [vmem:[%s1 + $0x160] sm:$0xff]
      %v216 = vld [vmem:[%s1 + $0x168] sm:$0xff]
      %v217 = vld [vmem:[%s1 + $0x170] sm:$0xff]
      %v218 = vld [vmem:[%s1 + $0x178] sm:$0xff]
      %v219 = vld [vmem:[%s1 + $0x180] sm:$0xff]
      %v220 = vld [vmem:[%s1 + $0x188] sm:$0xff]
      %v221 = vld [vmem:[%s1 + $0x190] sm:$0xff]
      %v222 = vld [vmem:[%s1 + $0x198] sm:$0xff]
      %v223 = vld [vmem:[%s1 + $0x1a0] sm:$0xff]
      %v224 = vld [vmem:[%s1 + $0x1a8] sm:$0xff]
      %v225 = vld [vmem:[%s1 + $0x1b0] sm:$0xff]
      %v226 = vld [vmem:[%s1 + $0x1b8] sm:$0xff]
      %v227 = vld [vmem:[%s1 + $0x1c0] sm:$0xff]
      %v228 = vld [vmem:[%s1 + $0x1c8] sm:$0xff]
      %v229 = vld [vmem:[%s1 + $0x1d0] sm:$0xff]
      %v230 = vld [vmem:[%s1 + $0x1d8] sm:$0xff]
      %v231 = vld [vmem:[%s1 + $0x1e0] sm:$0xff]
      %v232 = vld [vmem:[%s1 + $0x1e8] sm:$0xff]
      %v233 = vld [vmem:[%s1 + $0x1f0] sm:$0xff]
      %v234 = vld [vmem:[%s1 + $0x1f8] sm:$0xff]
      %v235 = vld [vmem:[%s165] sm:$0xff]
      %v236 = vld [vmem:[%s165 + $0x8] sm:$0xff]
      %v237 = vld [vmem:[%s2] sm:$0x1]
      %v238 = vld [vmem:[%s2 + $0x8] sm:$0x1]
      %v239 = vld [vmem:[%s2 + $0x10] sm:$0xff]
      %v240 = vld [vmem:[%s2 + $0x18] sm:$0xff]
      %v241 = vld [vmem:[%s2 + $0x20] sm:$0xff]
      %v242 = vld [vmem:[%s2 + $0x28] sm:$0xff]
      %v243 = vld [vmem:[%s2 + $0x30] sm:$0xff]
      %v244 = vld [vmem:[%s2 + $0x38] sm:$0xff]
      %v245 = vld [vmem:[%s2 + $0x40] sm:$0xff]
      %v246 = vld [vmem:[%s2 + $0x48] sm:$0xff]
      %v247 = vld [vmem:[%s2 + $0x50] sm:$0xff]
      %v248 = vld [vmem:[%s2 + $0x58] sm:$0xff]
      %249 = vmatprep.subr.mxu0 0.0
      %250 = vmatpush1.msra.mxu0 %v171
      %251 = vmatprep.subr.mxu0 0.0
      %252 = vmatpush1.msra.mxu0 %v172
      %253 = vmatprep.subr.mxu0 0.0
      %254 = vmatpush1.msra.mxu0 %v173
      %255 = vmatprep.subr.mxu0 0.0
      %256 = vmatpush1.msra.mxu0 %v174
      %257 = vmatprep.subr.mxu0 0.0
      %258 = vmatpush1.msra.mxu0 %v175
      %259 = vmatprep.subr.mxu0 0.0
      %260 = vmatpush1.msra.mxu0 %v176
      %261 = vmatprep.subr.mxu0 0.0
      %262 = vmatpush1.msra.mxu0 %v177
      %263 = vmatprep.subr.mxu0 0.0
      %264 = vmatpush1.msra.mxu0 %v178
      %265 = vmatprep.subr.mxu0 0.0
      %266 = vmatpush1.msra.mxu0 %v179
      %267 = vmatprep.subr.mxu0 0.0
      %268 = vmatpush1.msra.mxu0 %v180
      %269 = vmatprep.subr.mxu0 0.0
      %270 = vmatpush1.msra.mxu0 %v181
      %271 = vmatprep.subr.mxu0 0.0
      %272 = vmatpush1.msra.mxu0 %v182
      %273 = vmatprep.subr.mxu0 0.0
      %274 = vmatpush1.msra.mxu0 %v183
      %275 = vmatprep.subr.mxu0 0.0
      %276 = vmatpush1.msra.mxu0 %v184
      %277 = vmatprep.subr.mxu0 0.0
      %278 = vmatpush1.msra.mxu0 %v185
      %279 = vmatprep.subr.mxu0 0.0
      %280 = vmatpush1.msra.mxu0 %v186
      %281 = vmatprep.subr.mxu0 0.0
      %282 = vmatpush1.msra.mxu0 0.0
      %283 = vmatprep.subr.mxu0 0.0
      %284 = vmatpush1.msra.mxu0 0.0
      %285 = vmatprep.subr.mxu0 0.0
      %286 = vmatpush1.msra.mxu0 0.0
      %287 = vmatprep.subr.mxu0 0.0
      %288 = vmatpush1.msra.mxu0 0.0
      %289 = vmatprep.subr.mxu0 0.0
      %290 = vmatpush1.msra.mxu0 0.0
      %291 = vmatprep.subr.mxu0 0.0
      %292 = vmatpush1.msra.mxu0 0.0
      %293 = vmatprep.subr.mxu0 0.0
      %294 = vmatpush1.msra.mxu0 0.0
      %295 = vmatprep.subr.mxu0 0.0
      %296 = vmatpush1.msra.mxu0 0.0
      %297 = vmatprep.subr.mxu0 0.0
      %298 = vmatpush1.msra.mxu0 0.0
      %299 = vmatprep.subr.mxu0 0.0
      %300 = vmatpush1.msra.mxu0 0.0
      %301 = vmatprep.subr.mxu0 0.0
      %302 = vmatpush1.msra.mxu0 0.0
      %303 = vmatprep.subr.mxu0 0.0
      %304 = vmatpush1.msra.mxu0 0.0
      %305 = vmatprep.subr.mxu0 0.0
      %306 = vmatpush1.msra.mxu0 0.0
      %307 = vmatprep.subr.mxu0 0.0
      %308 = vmatpush1.msra.mxu0 0.0
      %309 = vmatprep.subr.mxu0 0.0
      %310 = vmatpush1.msra.mxu0 0.0
      %311 = vmatprep.subr.mxu0 0.0
      %312 = vmatpush1.msra.mxu0 0.0
      %313 = vmatprep.mubr.f32.mxu0 0.0
      %314 = vmatmul.mubr.f32.gmra.mrb[0].mxu0 %v235
      %v315 = vpop.f32.mrb[0].mxu0
      %v316 = vadd.f32 0.0, %v315
      %v317 = vpop.f32.mrb[0].mxu0
      %318 = vmatprep.mubr.f32.mxu0 0.0
      %319 = vmatmul.mubr.f32.gmra.mrb[0].mxu0 %v236
      %v320 = vpop.f32.mrb[0].mxu0
      %v321 = vadd.f32 0.0, %v320
      %v322 = vpop.f32.mrb[0].mxu0
      %323 = vdwg.mxu0
      %v324 = vsub.f32 %v235, %v316
      %v325 = vsub.f32 %v236, %v321
      %v326 = vmul.f32 %v324, %v324
      %v327 = vmul.f32 %v325, %v325
      %328 = vmatprep.subr.mxu0 0.0
      %329 = vmatpush1.msra.mxu0 %v171
      %330 = vmatprep.subr.mxu0 0.0
      %331 = vmatpush1.msra.mxu0 %v172
      %332 = vmatprep.subr.mxu0 0.0
      %333 = vmatpush1.msra.mxu0 %v173
      %334 = vmatprep.subr.mxu0 0.0
      %335 = vmatpush1.msra.mxu0 %v174
      %336 = vmatprep.subr.mxu0 0.0
      %337 = vmatpush1.msra.mxu0 %v175
      %338 = vmatprep.subr.mxu0 0.0
      %339 = vmatpush1.msra.mxu0 %v176
      %340 = vmatprep.subr.mxu0 0.0
      %341 = vmatpush1.msra.mxu0 %v177
      %342 = vmatprep.subr.mxu0 0.0
      %343 = vmatpush1.msra.mxu0 %v178
      %344 = vmatprep.subr.mxu0 0.0
      %345 = vmatpush1.msra.mxu0 %v179
      %346 = vmatprep.subr.mxu0 0.0
      %347 = vmatpush1.msra.mxu0 %v180
      %348 = vmatprep.subr.mxu0 0.0
      %349 = vmatpush1.msra.mxu0 %v181
      %350 = vmatprep.subr.mxu0 0.0
      %351 = vmatpush1.msra.mxu0 %v182
      %352 = vmatprep.subr.mxu0 0.0
      %353 = vmatpush1.msra.mxu0 %v183
      %354 = vmatprep.subr.mxu0 0.0
      %355 = vmatpush1.msra.mxu0 %v184
      %356 = vmatprep.subr.mxu0 0.0
      %357 = vmatpush1.msra.mxu0 %v185
      %358 = vmatprep.subr.mxu0 0.0
      %359 = vmatpush1.msra.mxu0 %v186
      %360 = vmatprep.subr.mxu0 0.0
      %361 = vmatpush1.msra.mxu0 0.0
      %362 = vmatprep.subr.mxu0 0.0
      %363 = vmatpush1.msra.mxu0 0.0
      %364 = vmatprep.subr.mxu0 0.0
      %365 = vmatpush1.msra.mxu0 0.0
      %366 = vmatprep.subr.mxu0 0.0
      %367 = vmatpush1.msra.mxu0 0.0
      %368 = vmatprep.subr.mxu0 0.0
      %369 = vmatpush1.msra.mxu0 0.0
      %370 = vmatprep.subr.mxu0 0.0
      %371 = vmatpush1.msra.mxu0 0.0
      %372 = vmatprep.subr.mxu0 0.0
      %373 = vmatpush1.msra.mxu0 0.0
      %374 = vmatprep.subr.mxu0 0.0
      %375 = vmatpush1.msra.mxu0 0.0
      %376 = vmatprep.subr.mxu0 0.0
      %377 = vmatpush1.msra.mxu0 0.0
      %378 = vmatprep.subr.mxu0 0.0
      %379 = vmatpush1.msra.mxu0 0.0
      %380 = vmatprep.subr.mxu0 0.0
      %381 = vmatpush1.msra.mxu0 0.0
      %382 = vmatprep.subr.mxu0 0.0
      %383 = vmatpush1.msra.mxu0 0.0
      %384 = vmatprep.subr.mxu0 0.0
      %385 = vmatpush1.msra.mxu0 0.0
      %386 = vmatprep.subr.mxu0 0.0
      %387 = vmatpush1.msra.mxu0 0.0
      %388 = vmatprep.subr.mxu0 0.0
      %389 = vmatpush1.msra.mxu0 0.0
      %390 = vmatprep.subr.mxu0 0.0
      %391 = vmatpush1.msra.mxu0 0.0
      %392 = vmatprep.mubr.f32.mxu0 0.0
      %393 = vmatmul.mubr.f32.gmra.mrb[0].mxu0 %v326
      %v394 = vpop.f32.mrb[0].mxu0
      %v395 = vadd.f32 1e-05, %v394
      %v396 = vpop.f32.mrb[0].mxu0
      %397 = vmatprep.mubr.f32.mxu0 0.0
      %398 = vmatmul.mubr.f32.gmra.mrb[0].mxu0 %v327
      %v399 = vpop.f32.mrb[0].mxu0
      %v400 = vadd.f32 1e-05, %v399
      %v401 = vpop.f32.mrb[0].mxu0
      %402 = vdwg.mxu0
      %v403 = vrsqrt.pop %v395
      %v404 = vrsqrt.pop %v400
      %v405 = vmul.f32 %v324, %v403
      %v406 = vmul.f32 %v325, %v404
      %v407 = vlaneseq
      %v408 = vshrl.u32 %v407, 7
      %v409 = vsub.s32 0, %v408
      %v410 = vrot.slane %v237, %v409
      %v411 = vmul.f32 %v405, %v410
      %v412 = vmul.f32 %v406, %v410
      %v413 = vlaneseq
      %v414 = vshrl.u32 %v413, 7
      %v415 = vsub.s32 0, %v414
      %v416 = vrot.slane %v238, %v415
      %v417 = vadd.f32 %v411, %v416
      %v418 = vadd.f32 %v412, %v416
      %419 = vmatprep.subr.mxu0 0.0
      %420 = vmatpush1.msra.mxu0 %v187
      %421 = vmatprep.subr.mxu0 0.0
      %422 = vmatpush1.msra.mxu0 %v188
      %423 = vmatprep.subr.mxu0 0.0
      %424 = vmatpush1.msra.mxu0 %v189
      %425 = vmatprep.subr.mxu0 0.0
      %426 = vmatpush1.msra.mxu0 %v190
      %427 = vmatprep.subr.mxu0 0.0
      %428 = vmatpush1.msra.mxu0 %v191
      %429 = vmatprep.subr.mxu0 0.0
      %430 = vmatpush1.msra.mxu0 %v192
      %431 = vmatprep.subr.mxu0 0.0
      %432 = vmatpush1.msra.mxu0 %v193
      %433 = vmatprep.subr.mxu0 0.0
      %434 = vmatpush1.msra.mxu0 %v194
      %435 = vmatprep.subr.mxu0 0.0
      %436 = vmatpush1.msra.mxu0 %v195
      %437 = vmatprep.subr.mxu0 0.0
      %438 = vmatpush1.msra.mxu0 %v196
      %439 = vmatprep.subr.mxu0 0.0
      %440 = vmatpush1.msra.mxu0 %v197
      %441 = vmatprep.subr.mxu0 0.0
      %442 = vmatpush1.msra.mxu0 %v198
      %443 = vmatprep.subr.mxu0 0.0
      %444 = vmatpush1.msra.mxu0 %v199
      %445 = vmatprep.subr.mxu0 0.0
      %446 = vmatpush1.msra.mxu0 %v200
      %447 = vmatprep.subr.mxu0 0.0
      %448 = vmatpush1.msra.mxu0 %v201
      %449 = vmatprep.subr.mxu0 0.0
      %450 = vmatpush1.msra.mxu0 %v202
      %451 = vmatprep.subr.mxu0 0.0
      %452 = vmatpush1.msra.mxu0 0.0
      %453 = vmatprep.subr.mxu0 0.0
      %454 = vmatpush1.msra.mxu0 0.0
      %455 = vmatprep.subr.mxu0 0.0
      %456 = vmatpush1.msra.mxu0 0.0
      %457 = vmatprep.subr.mxu0 0.0
      %458 = vmatpush1.msra.mxu0 0.0
      %459 = vmatprep.subr.mxu0 0.0
      %460 = vmatpush1.msra.mxu0 0.0
      %461 = vmatprep.subr.mxu0 0.0
      %462 = vmatpush1.msra.mxu0 0.0
      %463 = vmatprep.subr.mxu0 0.0
      %464 = vmatpush1.msra.mxu0 0.0
      %465 = vmatprep.subr.mxu0 0.0
      %466 = vmatpush1.msra.mxu0 0.0
      %467 = vmatprep.subr.mxu0 0.0
      %468 = vmatpush1.msra.mxu0 0.0
      %469 = vmatprep.subr.mxu0 0.0
      %470 = vmatpush1.msra.mxu0 0.0
      %471 = vmatprep.subr.mxu0 0.0
      %472 = vmatpush1.msra.mxu0 0.0
      %473 = vmatprep.subr.mxu0 0.0
      %474 = vmatpush1.msra.mxu0 0.0
      %475 = vmatprep.subr.mxu0 0.0
      %476 = vmatpush1.msra.mxu0 0.0
      %477 = vmatprep.subr.mxu0 0.0
      %478 = vmatpush1.msra.mxu0 0.0
      %479 = vmatprep.subr.mxu0 0.0
      %480 = vmatpush1.msra.mxu0 0.0
      %481 = vmatprep.subr.mxu0 0.0
      %482 = vmatpush1.msra.mxu0 0.0
      %483 = vmatprep.mubr.f32.mxu0 0.0
      %484 = vmatmul.mubr.f32.gmra.mrb[0].mxu0 %v417
      %v485 = vpop.f32.mrb[0].mxu0
      %v486 = vadd.f32 0.0, %v485
      %v487 = vpop.f32.mrb[0].mxu0
      %488 = vmatprep.mubr.f32.mxu0 0.0
      %489 = vmatmul.mubr.f32.gmra.mrb[0].mxu0 %v418
      %v490 = vpop.f32.mrb[0].mxu0
      %v491 = vadd.f32 0.0, %v490
      %v492 = vpop.f32.mrb[0].mxu0
      %493 = vdwg.mxu0
      %vm494 = vcmask 130048
      %v496 = vsel %vm494, %v239, 0
      %498 = vmatprep.subr.mxu0 0.0
      %499 = vmatpush1.msra.mxu0 %v486
      %500 = vmatprep.subr.mxu0 0.0
      %501 = vmatpush1.msra.mxu0 %v491
      %502 = vmatprep.subr.mxu0 0.0
      %503 = vmatpush1.msra.mxu0 0.0
      %504 = vmatprep.subr.mxu0 0.0
      %505 = vmatpush1.msra.mxu0 0.0
      %506 = vmatprep.subr.mxu0 0.0
      %507 = vmatpush1.msra.mxu0 0.0
      %508 = vmatprep.subr.mxu0 0.0
      %509 = vmatpush1.msra.mxu0 0.0
      %510 = vmatprep.subr.mxu0 0.0
      %511 = vmatpush1.msra.mxu0 0.0
      %512 = vmatprep.subr.mxu0 0.0
      %513 = vmatpush1.msra.mxu0 0.0
      %514 = vmatprep.subr.mxu0 0.0
      %515 = vmatpush1.msra.mxu0 0.0
      %516 = vmatprep.subr.mxu0 0.0
      %517 = vmatpush1.msra.mxu0 0.0
      %518 = vmatprep.subr.mxu0 0.0
      %519 = vmatpush1.msra.mxu0 0.0
      %520 = vmatprep.subr.mxu0 0.0
      %521 = vmatpush1.msra.mxu0 0.0
      %522 = vmatprep.subr.mxu0 0.0
      %523 = vmatpush1.msra.mxu0 0.0
      %524 = vmatprep.subr.mxu0 0.0
      %525 = vmatpush1.msra.mxu0 0.0
      %526 = vmatprep.subr.mxu0 0.0
      %527 = vmatpush1.msra.mxu0 0.0
      %528 = vmatprep.subr.mxu0 0.0
      %529 = vmatpush1.msra.mxu0 0.0
      %530 = vmatprep.subr.mxu0 0.0
      %531 = vmatpush1.msra.mxu0 0.0
      %532 = vmatprep.subr.mxu0 0.0
      %533 = vmatpush1.msra.mxu0 0.0
      %534 = vmatprep.subr.mxu0 0.0
      %535 = vmatpush1.msra.mxu0 0.0
      %536 = vmatprep.subr.mxu0 0.0
      %537 = vmatpush1.msra.mxu0 0.0
      %538 = vmatprep.subr.mxu0 0.0
      %539 = vmatpush1.msra.mxu0 0.0
      %540 = vmatprep.subr.mxu0 0.0
      %541 = vmatpush1.msra.mxu0 0.0
      %542 = vmatprep.subr.mxu0 0.0
      %543 = vmatpush1.msra.mxu0 0.0
      %544 = vmatprep.subr.mxu0 0.0
      %545 = vmatpush1.msra.mxu0 0.0
      %546 = vmatprep.subr.mxu0 0.0
      %547 = vmatpush1.msra.mxu0 0.0
      %548 = vmatprep.subr.mxu0 0.0
      %549 = vmatpush1.msra.mxu0 0.0
      %550 = vmatprep.subr.mxu0 0.0
      %551 = vmatpush1.msra.mxu0 0.0
      %552 = vmatprep.subr.mxu0 0.0
      %553 = vmatpush1.msra.mxu0 0.0
      %554 = vmatprep.subr.mxu0 0.0
      %555 = vmatpush1.msra.mxu0 0.0
      %556 = vmatprep.subr.mxu0 0.0
      %557 = vmatpush1.msra.mxu0 0.0
      %558 = vmatprep.subr.mxu0 0.0
      %559 = vmatpush1.msra.mxu0 0.0
      %560 = vmatprep.subr.mxu0 0.0
      %561 = vmatpush1.msra.mxu0 0.0
      %562 = vmatprep.mubr.f32.mxu0 0.0
      %563 = vmatmul.mubr.f32.gmra.mrb[0].mxu0 %v496
      %v564 = vpop.f32.mrb[0].mxu0
      %v565 = vadd.f32 %v240, %v564
      %v566 = vpop.f32.mrb[0].mxu0
      %567 = vdwg.mxu0
      %v568 = vadd.f32 %v565, 3.0
      %v569 = vmax.f32 %v568, 0.0
      %v570 = vmin.f32 %v569, 6.0
      %v571 = vmul.f32 %v570, 0.16666667
      %v572 = vmul.f32 %v565, %v571
      %vm573 = vcmask 64512
      %v575 = vsel %vm573, %v241, 0
      %v578 = vsel %vm573, %v242, 0
      %v581 = vsel %vm573, %v243, 0
      %v584 = vsel %vm573, %v244, 0
      %586 = vmatprep.subr.mxu0 0.0
      %587 = vmatpush1.msra.mxu0 %v572
      %588 = vmatprep.subr.mxu0 0.0
      %589 = vmatpush1.msra.mxu0 0.0
      %590 = vmatprep.subr.mxu0 0.0
      %591 = vmatpush1.msra.mxu0 0.0
      %592 = vmatprep.subr.mxu0 0.0
      %593 = vmatpush1.msra.mxu0 0.0
      %594 = vmatprep.subr.mxu0 0.0
      %595 = vmatpush1.msra.mxu0 0.0
      %596 = vmatprep.subr.mxu0 0.0
      %597 = vmatpush1.msra.mxu0 0.0
      %598 = vmatprep.subr.mxu0 0.0
      %599 = vmatpush1.msra.mxu0 0.0
      %600 = vmatprep.subr.mxu0 0.0
      %601 = vmatpush1.msra.mxu0 0.0
      %602 = vmatprep.subr.mxu0 0.0
      %603 = vmatpush1.msra.mxu0 0.0
      %604 = vmatprep.subr.mxu0 0.0
      %605 = vmatpush1.msra.mxu0 0.0
      %606 = vmatprep.subr.mxu0 0.0
      %607 = vmatpush1.msra.mxu0 0.0
      %608 = vmatprep.subr.mxu0 0.0
      %609 = vmatpush1.msra.mxu0 0.0
      %610 = vmatprep.subr.mxu0 0.0
      %611 = vmatpush1.msra.mxu0 0.0
      %612 = vmatprep.subr.mxu0 0.0
      %613 = vmatpush1.msra.mxu0 0.0
      %614 = vmatprep.subr.mxu0 0.0
      %615 = vmatpush1.msra.mxu0 0.0
      %616 = vmatprep.subr.mxu0 0.0
      %617 = vmatpush1.msra.mxu0 0.0
      %618 = vmatprep.subr.mxu0 0.0
      %619 = vmatpush1.msra.mxu0 0.0
      %620 = vmatprep.subr.mxu0 0.0
      %621 = vmatpush1.msra.mxu0 0.0
      %622 = vmatprep.subr.mxu0 0.0
      %623 = vmatpush1.msra.mxu0 0.0
      %624 = vmatprep.subr.mxu0 0.0
      %625 = vmatpush1.msra.mxu0 0.0
      %626 = vmatprep.subr.mxu0 0.0
      %627 = vmatpush1.msra.mxu0 0.0
      %628 = vmatprep.subr.mxu0 0.0
      %629 = vmatpush1.msra.mxu0 0.0
      %630 = vmatprep.subr.mxu0 0.0
      %631 = vmatpush1.msra.mxu0 0.0
      %632 = vmatprep.subr.mxu0 0.0
      %633 = vmatpush1.msra.mxu0 0.0
      %634 = vmatprep.subr.mxu0 0.0
      %635 = vmatpush1.msra.mxu0 0.0
      %636 = vmatprep.subr.mxu0 0.0
      %637 = vmatpush1.msra.mxu0 0.0
      %638 = vmatprep.subr.mxu0 0.0
      %639 = vmatpush1.msra.mxu0 0.0
      %640 = vmatprep.subr.mxu0 0.0
      %641 = vmatpush1.msra.mxu0 0.0
      %642 = vmatprep.subr.mxu0 0.0
      %643 = vmatpush1.msra.mxu0 0.0
      %644 = vmatprep.subr.mxu0 0.0
      %645 = vmatpush1.msra.mxu0 0.0
      %646 = vmatprep.subr.mxu0 0.0
      %647 = vmatpush1.msra.mxu0 0.0
      %648 = vmatprep.subr.mxu0 0.0
      %649 = vmatpush1.msra.mxu0 0.0
      %650 = vmatprep.mubr.f32.mxu0 0.0
      %651 = vmatmul.mubr.f32.gmra.mrb[0].mxu0 %v575
      %v652 = vpop.f32.mrb[0].mxu0
      %v653 = vadd.f32 %v245, %v652
      %v654 = vpop.f32.mrb[0].mxu0
      %655 = vmatprep.mubr.f32.mxu0 0.0
      %656 = vmatmul.mubr.f32.gmra.mrb[0].mxu0 %v578
      %v657 = vpop.f32.mrb[0].mxu0
      %v658 = vadd.f32 %v246, %v657
      %v659 = vpop.f32.mrb[0].mxu0
      %660 = vmatprep.mubr.f32.mxu0 0.0
      %661 = vmatmul.mubr.f32.gmra.mrb[0].mxu0 %v581
      %v662 = vpop.f32.mrb[0].mxu0
      %v663 = vadd.f32 %v247, %v662
      %v664 = vpop.f32.mrb[0].mxu0
      %665 = vmatprep.mubr.f32.mxu0 0.0
      %666 = vmatmul.mubr.f32.gmra.mrb[0].mxu0 %v584
      %v667 = vpop.f32.mrb[0].mxu0
      %v668 = vadd.f32 %v248, %v667
      %v669 = vpop.f32.mrb[0].mxu0
      %670 = vdwg.mxu0
      %v671 = vxor.u32 %v653, 2147483648
      %v672 = vxor.u32 %v658, 2147483648
      %v673 = vxor.u32 %v663, 2147483648
      %v674 = vxor.u32 %v668, 2147483648
      %v675 = vmul.f32 %v671, 1.442695
      %v676 = vpow.pop %v675
      %v677 = vmul.f32 %v672, 1.442695
      %v678 = vpow.pop %v677
      %v679 = vmul.f32 %v673, 1.442695
      %v680 = vpow.pop %v679
      %v681 = vmul.f32 %v674, 1.442695
      %v682 = vpow.pop %v681
      %v683 = vadd.f32 %v676, 1.0
      %v684 = vadd.f32 %v678, 1.0
      %v685 = vadd.f32 %v680, 1.0
      %v686 = vadd.f32 %v682, 1.0
      %v687 = vrcp.pop %v683
      %v688 = vmul.f32 1.0, %v687
      %v689 = vrcp.pop %v684
      %v690 = vmul.f32 1.0, %v689
      %v691 = vrcp.pop %v685
      %v692 = vmul.f32 1.0, %v691
      %v693 = vrcp.pop %v686
      %v694 = vmul.f32 1.0, %v693
      %695 = vmatprep.subr.mxu0 0.0
      %696 = vmatpush1.msra.mxu0 %v203
      %697 = vmatprep.subr.mxu0 0.0
      %698 = vmatpush1.msra.mxu0 %v204
      %699 = vmatprep.subr.mxu0 0.0
      %700 = vmatpush1.msra.mxu0 %v205
      %701 = vmatprep.subr.mxu0 0.0
      %702 = vmatpush1.msra.mxu0 %v206
      %703 = vmatprep.subr.mxu0 0.0
      %704 = vmatpush1.msra.mxu0 %v207
      %705 = vmatprep.subr.mxu0 0.0
      %706 = vmatpush1.msra.mxu0 %v208
      %707 = vmatprep.subr.mxu0 0.0
      %708 = vmatpush1.msra.mxu0 %v209
      %709 = vmatprep.subr.mxu0 0.0
      %710 = vmatpush1.msra.mxu0 %v210
      %711 = vmatprep.subr.mxu0 0.0
      %712 = vmatpush1.msra.mxu0 %v211
      %713 = vmatprep.subr.mxu0 0.0
      %714 = vmatpush1.msra.mxu0 %v212
      %715 = vmatprep.subr.mxu0 0.0
      %716 = vmatpush1.msra.mxu0 %v213
      %717 = vmatprep.subr.mxu0 0.0
      %718 = vmatpush1.msra.mxu0 %v214
      %719 = vmatprep.subr.mxu0 0.0
      %720 = vmatpush1.msra.mxu0 %v215
      %721 = vmatprep.subr.mxu0 0.0
      %722 = vmatpush1.msra.mxu0 %v216
      %723 = vmatprep.subr.mxu0 0.0
      %724 = vmatpush1.msra.mxu0 %v217
      %725 = vmatprep.subr.mxu0 0.0
      %726 = vmatpush1.msra.mxu0 %v218
      %727 = vmatprep.subr.mxu0 0.0
      %728 = vmatpush1.msra.mxu0 0.0
      %729 = vmatprep.subr.mxu0 0.0
      %730 = vmatpush1.msra.mxu0 0.0
      %731 = vmatprep.subr.mxu0 0.0
      %732 = vmatpush1.msra.mxu0 0.0
      %733 = vmatprep.subr.mxu0 0.0
      %734 = vmatpush1.msra.mxu0 0.0
      %735 = vmatprep.subr.mxu0 0.0
      %736 = vmatpush1.msra.mxu0 0.0
      %737 = vmatprep.subr.mxu0 0.0
      %738 = vmatpush1.msra.mxu0 0.0
      %739 = vmatprep.subr.mxu0 0.0
      %740 = vmatpush1.msra.mxu0 0.0
      %741 = vmatprep.subr.mxu0 0.0
      %742 = vmatpush1.msra.mxu0 0.0
      %743 = vmatprep.subr.mxu0 0.0
      %744 = vmatpush1.msra.mxu0 0.0
      %745 = vmatprep.subr.mxu0 0.0
      %746 = vmatpush1.msra.mxu0 0.0
      %747 = vmatprep.subr.mxu0 0.0
      %748 = vmatpush1.msra.mxu0 0.0
      %749 = vmatprep.subr.mxu0 0.0
      %750 = vmatpush1.msra.mxu0 0.0
      %751 = vmatprep.subr.mxu0 0.0
      %752 = vmatpush1.msra.mxu0 0.0
      %753 = vmatprep.subr.mxu0 0.0
      %754 = vmatpush1.msra.mxu0 0.0
      %755 = vmatprep.subr.mxu0 0.0
      %756 = vmatpush1.msra.mxu0 0.0
      %757 = vmatprep.subr.mxu0 0.0
      %758 = vmatpush1.msra.mxu0 0.0
      %759 = vmatprep.mubr.f32.mxu0 0.0
      %760 = vmatmul.mubr.f32.gmra.mrb[0].mxu0 %v688
      %v761 = vpop.f32.mrb[0].mxu0
      %v762 = vadd.f32 0.0, %v761
      %v763 = vpop.f32.mrb[0].mxu0
      %764 = vmatprep.mubr.f32.mxu0 0.0
      %765 = vmatmul.mubr.f32.gmra.mrb[0].mxu0 %v690
      %v766 = vpop.f32.mrb[0].mxu0
      %v767 = vadd.f32 0.0, %v766
      %v768 = vpop.f32.mrb[0].mxu0
      %769 = vdwg.mxu0
      %770 = vmatprep.subr.mxu0 0.0
      %771 = vmatpush1.msra.mxu0 %v219
      %772 = vmatprep.subr.mxu0 0.0
      %773 = vmatpush1.msra.mxu0 %v220
      %774 = vmatprep.subr.mxu0 0.0
      %775 = vmatpush1.msra.mxu0 %v221
      %776 = vmatprep.subr.mxu0 0.0
      %777 = vmatpush1.msra.mxu0 %v222
      %778 = vmatprep.subr.mxu0 0.0
      %779 = vmatpush1.msra.mxu0 %v223
      %780 = vmatprep.subr.mxu0 0.0
      %781 = vmatpush1.msra.mxu0 %v224
      %782 = vmatprep.subr.mxu0 0.0
      %783 = vmatpush1.msra.mxu0 %v225
      %784 = vmatprep.subr.mxu0 0.0
      %785 = vmatpush1.msra.mxu0 %v226
      %786 = vmatprep.subr.mxu0 0.0
      %787 = vmatpush1.msra.mxu0 %v227
      %788 = vmatprep.subr.mxu0 0.0
      %789 = vmatpush1.msra.mxu0 %v228
      %790 = vmatprep.subr.mxu0 0.0
      %791 = vmatpush1.msra.mxu0 %v229
      %792 = vmatprep.subr.mxu0 0.0
      %793 = vmatpush1.msra.mxu0 %v230
      %794 = vmatprep.subr.mxu0 0.0
      %795 = vmatpush1.msra.mxu0 %v231
      %796 = vmatprep.subr.mxu0 0.0
      %797 = vmatpush1.msra.mxu0 %v232
      %798 = vmatprep.subr.mxu0 0.0
      %799 = vmatpush1.msra.mxu0 %v233
      %800 = vmatprep.subr.mxu0 0.0
      %801 = vmatpush1.msra.mxu0 %v234
      %802 = vmatprep.subr.mxu0 0.0
      %803 = vmatpush1.msra.mxu0 0.0
      %804 = vmatprep.subr.mxu0 0.0
      %805 = vmatpush1.msra.mxu0 0.0
      %806 = vmatprep.subr.mxu0 0.0
      %807 = vmatpush1.msra.mxu0 0.0
      %808 = vmatprep.subr.mxu0 0.0
      %809 = vmatpush1.msra.mxu0 0.0
      %810 = vmatprep.subr.mxu0 0.0
      %811 = vmatpush1.msra.mxu0 0.0
      %812 = vmatprep.subr.mxu0 0.0
      %813 = vmatpush1.msra.mxu0 0.0
      %814 = vmatprep.subr.mxu0 0.0
      %815 = vmatpush1.msra.mxu0 0.0
      %816 = vmatprep.subr.mxu0 0.0
      %817 = vmatpush1.msra.mxu0 0.0
      %818 = vmatprep.subr.mxu0 0.0
      %819 = vmatpush1.msra.mxu0 0.0
      %820 = vmatprep.subr.mxu0 0.0
      %821 = vmatpush1.msra.mxu0 0.0
      %822 = vmatprep.subr.mxu0 0.0
      %823 = vmatpush1.msra.mxu0 0.0
      %824 = vmatprep.subr.mxu0 0.0
      %825 = vmatpush1.msra.mxu0 0.0
      %826 = vmatprep.subr.mxu0 0.0
      %827 = vmatpush1.msra.mxu0 0.0
      %828 = vmatprep.subr.mxu0 0.0
      %829 = vmatpush1.msra.mxu0 0.0
      %830 = vmatprep.subr.mxu0 0.0
      %831 = vmatpush1.msra.mxu0 0.0
      %832 = vmatprep.subr.mxu0 0.0
      %833 = vmatpush1.msra.mxu0 0.0
      %834 = vmatprep.mubr.f32.mxu0 0.0
      %835 = vmatmul.mubr.f32.gmra.mrb[0].mxu0 %v692
      %v836 = vpop.f32.mrb[0].mxu0
      %v837 = vadd.f32 0.0, %v836
      %v838 = vpop.f32.mrb[0].mxu0
      %839 = vmatprep.mubr.f32.mxu0 0.0
      %840 = vmatmul.mubr.f32.gmra.mrb[0].mxu0 %v694
      %v841 = vpop.f32.mrb[0].mxu0
      %v842 = vadd.f32 0.0, %v841
      %v843 = vpop.f32.mrb[0].mxu0
      %844 = vdwg.mxu0
      %v845 = vmul.f32 %v417, %v762
      %v846 = vmul.f32 %v418, %v767
      %v847 = vmul.f32 %v845, %v837
      %v848 = vmul.f32 %v846, %v842
      %v849 = vadd.f32 %v235, %v847
      %v850 = vadd.f32 %v236, %v848
      %v851 = vld [vmem:[%s2 + $0x60] sm:$0x1]
      %v852 = vld [vmem:[%s2 + $0x68] sm:$0x1]
      %v853 = vld [vmem:[%s2 + $0x170] sm:$0x3]
      %v854 = vld [vmem:[%s2 + $0x278] sm:$0x1]
      %855 = vmatprep.subr.mxu0 0.0
      %856 = vmatpush1.msra.mxu0 %v171
      %857 = vmatprep.subr.mxu0 0.0
      %858 = vmatpush1.msra.mxu0 %v172
      %859 = vmatprep.subr.mxu0 0.0
      %860 = vmatpush1.msra.mxu0 %v173
      %861 = vmatprep.subr.mxu0 0.0
      %862 = vmatpush1.msra.mxu0 %v174
      %863 = vmatprep.subr.mxu0 0.0
      %864 = vmatpush1.msra.mxu0 %v175
      %865 = vmatprep.subr.mxu0 0.0
      %866 = vmatpush1.msra.mxu0 %v176
      %867 = vmatprep.subr.mxu0 0.0
      %868 = vmatpush1.msra.mxu0 %v177
      %869 = vmatprep.subr.mxu0 0.0
      %870 = vmatpush1.msra.mxu0 %v178
      %871 = vmatprep.subr.mxu0 0.0
      %872 = vmatpush1.msra.mxu0 %v179
      %873 = vmatprep.subr.mxu0 0.0
      %874 = vmatpush1.msra.mxu0 %v180
      %875 = vmatprep.subr.mxu0 0.0
      %876 = vmatpush1.msra.mxu0 %v181
      %877 = vmatprep.subr.mxu0 0.0
      %878 = vmatpush1.msra.mxu0 %v182
      %879 = vmatprep.subr.mxu0 0.0
      %880 = vmatpush1.msra.mxu0 %v183
      %881 = vmatprep.subr.mxu0 0.0
      %882 = vmatpush1.msra.mxu0 %v184
      %883 = vmatprep.subr.mxu0 0.0
      %884 = vmatpush1.msra.mxu0 %v185
      %885 = vmatprep.subr.mxu0 0.0
      %886 = vmatpush1.msra.mxu0 %v186
      %887 = vmatprep.subr.mxu0 0.0
      %888 = vmatpush1.msra.mxu0 0.0
      %889 = vmatprep.subr.mxu0 0.0
      %890 = vmatpush1.msra.mxu0 0.0
      %891 = vmatprep.subr.mxu0 0.0
      %892 = vmatpush1.msra.mxu0 0.0
      %893 = vmatprep.subr.mxu0 0.0
      %894 = vmatpush1.msra.mxu0 0.0
      %895 = vmatprep.subr.mxu0 0.0
      %896 = vmatpush1.msra.mxu0 0.0
      %897 = vmatprep.subr.mxu0 0.0
      %898 = vmatpush1.msra.mxu0 0.0
      %899 = vmatprep.subr.mxu0 0.0
      %900 = vmatpush1.msra.mxu0 0.0
      %901 = vmatprep.subr.mxu0 0.0
      %902 = vmatpush1.msra.mxu0 0.0
      %903 = vmatprep.subr.mxu0 0.0
      %904 = vmatpush1.msra.mxu0 0.0
      %905 = vmatprep.subr.mxu0 0.0
      %906 = vmatpush1.msra.mxu0 0.0
      %907 = vmatprep.subr.mxu0 0.0
      %908 = vmatpush1.msra.mxu0 0.0
      %909 = vmatprep.subr.mxu0 0.0
      %910 = vmatpush1.msra.mxu0 0.0
      %911 = vmatprep.subr.mxu0 0.0
      %912 = vmatpush1.msra.mxu0 0.0
      %913 = vmatprep.subr.mxu0 0.0
      %914 = vmatpush1.msra.mxu0 0.0
      %915 = vmatprep.subr.mxu0 0.0
      %916 = vmatpush1.msra.mxu0 0.0
      %917 = vmatprep.subr.mxu0 0.0
      %918 = vmatpush1.msra.mxu0 0.0
      %919 = vmatprep.mubr.f32.mxu0 0.0
      %920 = vmatmul.mubr.f32.gmra.mrb[0].mxu0 %v849
      %v921 = vpop.f32.mrb[0].mxu0
      %v922 = vadd.f32 0.0, %v921
      %v923 = vpop.f32.mrb[0].mxu0
      %924 = vmatprep.mubr.f32.mxu0 0.0
      %925 = vmatmul.mubr.f32.gmra.mrb[0].mxu0 %v850
      %v926 = vpop.f32.mrb[0].mxu0
      %v927 = vadd.f32 0.0, %v926
      %v928 = vpop.f32.mrb[0].mxu0
      %929 = vdwg.mxu0
      %v930 = vsub.f32 %v849, %v922
      %v931 = vsub.f32 %v850, %v927
      %v932 = vmul.f32 %v930, %v930
      %v933 = vmul.f32 %v931, %v931
      %934 = vmatprep.subr.mxu0 0.0
      %935 = vmatpush1.msra.mxu0 %v171
      %936 = vmatprep.subr.mxu0 0.0
      %937 = vmatpush1.msra.mxu0 %v172
      %938 = vmatprep.subr.mxu0 0.0
      %939 = vmatpush1.msra.mxu0 %v173
      %940 = vmatprep.subr.mxu0 0.0
      %941 = vmatpush1.msra.mxu0 %v174
      %942 = vmatprep.subr.mxu0 0.0
      %943 = vmatpush1.msra.mxu0 %v175
      %944 = vmatprep.subr.mxu0 0.0
      %945 = vmatpush1.msra.mxu0 %v176
      %946 = vmatprep.subr.mxu0 0.0
      %947 = vmatpush1.msra.mxu0 %v177
      %948 = vmatprep.subr.mxu0 0.0
      %949 = vmatpush1.msra.mxu0 %v178
      %950 = vmatprep.subr.mxu0 0.0
      %951 = vmatpush1.msra.mxu0 %v179
      %952 = vmatprep.subr.mxu0 0.0
      %953 = vmatpush1.msra.mxu0 %v180
      %954 = vmatprep.subr.mxu0 0.0
      %955 = vmatpush1.msra.mxu0 %v181
      %956 = vmatprep.subr.mxu0 0.0
      %957 = vmatpush1.msra.mxu0 %v182
      %958 = vmatprep.subr.mxu0 0.0
      %959 = vmatpush1.msra.mxu0 %v183
      %960 = vmatprep.subr.mxu0 0.0
      %961 = vmatpush1.msra.mxu0 %v184
      %962 = vmatprep.subr.mxu0 0.0
      %963 = vmatpush1.msra.mxu0 %v185
      %964 = vmatprep.subr.mxu0 0.0
      %965 = vmatpush1.msra.mxu0 %v186
      %966 = vmatprep.subr.mxu0 0.0
      %967 = vmatpush1.msra.mxu0 0.0
      %968 = vmatprep.subr.mxu0 0.0
      %969 = vmatpush1.msra.mxu0 0.0
      %970 = vmatprep.subr.mxu0 0.0
      %971 = vmatpush1.msra.mxu0 0.0
      %972 = vmatprep.subr.mxu0 0.0
      %973 = vmatpush1.msra.mxu0 0.0
      %974 = vmatprep.subr.mxu0 0.0
      %975 = vmatpush1.msra.mxu0 0.0
      %976 = vmatprep.subr.mxu0 0.0
      %977 = vmatpush1.msra.mxu0 0.0
      %978 = vmatprep.subr.mxu0 0.0
      %979 = vmatpush1.msra.mxu0 0.0
      %980 = vmatprep.subr.mxu0 0.0
      %981 = vmatpush1.msra.mxu0 0.0
      %982 = vmatprep.subr.mxu0 0.0
      %983 = vmatpush1.msra.mxu0 0.0
      %984 = vmatprep.subr.mxu0 0.0
      %985 = vmatpush1.msra.mxu0 0.0
      %986 = vmatprep.subr.mxu0 0.0
      %987 = vmatpush1.msra.mxu0 0.0
      %988 = vmatprep.subr.mxu0 0.0
      %989 = vmatpush1.msra.mxu0 0.0
      %990 = vmatprep.subr.mxu0 0.0
      %991 = vmatpush1.msra.mxu0 0.0
      %992 = vmatprep.subr.mxu0 0.0
      %993 = vmatpush1.msra.mxu0 0.0
      %994 = vmatprep.subr.mxu0 0.0
      %995 = vmatpush1.msra.mxu0 0.0
      %996 = vmatprep.subr.mxu0 0.0
      %997 = vmatpush1.msra.mxu0 0.0
      %998 = vmatprep.mubr.f32.mxu0 0.0
      %999 = vmatmul.mubr.f32.gmra.mrb[0].mxu0 %v932
      %v1000 = vpop.f32.mrb[0].mxu0
      %v1001 = vadd.f32 1e-05, %v1000
      %v1002 = vpop.f32.mrb[0].mxu0
      %1003 = vmatprep.mubr.f32.mxu0 0.0
      %1004 = vmatmul.mubr.f32.gmra.mrb[0].mxu0 %v933
      %v1005 = vpop.f32.mrb[0].mxu0
      %v1006 = vadd.f32 1e-05, %v1005
      %v1007 = vpop.f32.mrb[0].mxu0
      %1008 = vdwg.mxu0
      %v1009 = vrsqrt.pop %v1001
      %v1010 = vrsqrt.pop %v1006
      %v1011 = vmul.f32 %v930, %v1009
      %v1012 = vmul.f32 %v931, %v1010
      %v1013 = vlaneseq
      %v1014 = vshrl.u32 %v1013, 7
      %v1015 = vsub.s32 0, %v1014
      %v1016 = vrot.slane %v851, %v1015
      %v1017 = vmul.f32 %v1011, %v1016
      %v1018 = vmul.f32 %v1012, %v1016
      %v1019 = vlaneseq
      %v1020 = vshrl.u32 %v1019, 7
      %v1021 = vsub.s32 0, %v1020
      %v1022 = vrot.slane %v852, %v1021
      %v1023 = vadd.f32 %v1017, %v1022
      %v1024 = vadd.f32 %v1018, %v1022
      %v1025 = vld [vmem:[%s2 + $0x70] sm:$0xff]
      %v1026 = vld [vmem:[%s2 + $0x78] sm:$0xff]
      %v1027 = vld [vmem:[%s2 + $0x80] sm:$0xff]
      %v1028 = vld [vmem:[%s2 + $0x88] sm:$0xff]
      %v1029 = vld [vmem:[%s2 + $0x90] sm:$0xff]
      %v1030 = vld [vmem:[%s2 + $0x98] sm:$0xff]
      %v1031 = vld [vmem:[%s2 + $0xa0] sm:$0xff]
      %v1032 = vld [vmem:[%s2 + $0xa8] sm:$0xff]
      %v1033 = vld [vmem:[%s2 + $0xb0] sm:$0xff]
      %v1034 = vld [vmem:[%s2 + $0xb8] sm:$0xff]
      %v1035 = vld [vmem:[%s2 + $0xc0] sm:$0xff]
      %v1036 = vld [vmem:[%s2 + $0xc8] sm:$0xff]
      %v1037 = vld [vmem:[%s2 + $0xd0] sm:$0xff]
      %v1038 = vld [vmem:[%s2 + $0xd8] sm:$0xff]
      %v1039 = vld [vmem:[%s2 + $0xe0] sm:$0xff]
      %v1040 = vld [vmem:[%s2 + $0xe8] sm:$0xff]
      %v1041 = vld [vmem:[%s2 + $0x178] sm:$0xff]
      %v1042 = vld [vmem:[%s2 + $0x180] sm:$0xff]
      %v1043 = vld [vmem:[%s2 + $0x188] sm:$0xff]
      %v1044 = vld [vmem:[%s2 + $0x190] sm:$0xff]
      %v1045 = vld [vmem:[%s2 + $0x198] sm:$0xff]
      %v1046 = vld [vmem:[%s2 + $0x1a0] sm:$0xff]
      %v1047 = vld [vmem:[%s2 + $0x1a8] sm:$0xff]
      %v1048 = vld [vmem:[%s2 + $0x1b0] sm:$0xff]
      %v1049 = vld [vmem:[%s2 + $0x1b8] sm:$0xff]
      %v1050 = vld [vmem:[%s2 + $0x1c0] sm:$0xff]
      %v1051 = vld [vmem:[%s2 + $0x1c8] sm:$0xff]
      %v1052 = vld [vmem:[%s2 + $0x1d0] sm:$0xff]
      %v1053 = vld [vmem:[%s2 + $0x1d8] sm:$0xff]
      %v1054 = vld [vmem:[%s2 + $0x1e0] sm:$0xff]
      %v1055 = vld [vmem:[%s2 + $0x1e8] sm:$0xff]
      %v1056 = vld [vmem:[%s2 + $0x1f0] sm:$0xff]
      %v1057 = vlaneseq
      %v1058 = vshrl.u32 %v1057, 7
      %v1059 = vsub.s32 0, %v1058
      %v1060 = vrot.slane %v853, %v1059
      %1061 = vmatprep.subr.mxu0 0.0
      %1062 = vmatpush1.msra.mxu0 %v1025
      %1063 = vmatprep.subr.mxu0 0.0
      %1064 = vmatpush1.msra.mxu0 %v1026
      %1065 = vmatprep.subr.mxu0 0.0
      %1066 = vmatpush1.msra.mxu0 %v1027
      %1067 = vmatprep.subr.mxu0 0.0
      %1068 = vmatpush1.msra.mxu0 %v1028
      %1069 = vmatprep.subr.mxu0 0.0
      %1070 = vmatpush1.msra.mxu0 %v1029
      %1071 = vmatprep.subr.mxu0 0.0
      %1072 = vmatpush1.msra.mxu0 %v1030
      %1073 = vmatprep.subr.mxu0 0.0
      %1074 = vmatpush1.msra.mxu0 %v1031
      %1075 = vmatprep.subr.mxu0 0.0
      %1076 = vmatpush1.msra.mxu0 %v1032
      %1077 = vmatprep.subr.mxu0 0.0
      %1078 = vmatpush1.msra.mxu0 %v1033
      %1079 = vmatprep.subr.mxu0 0.0
      %1080 = vmatpush1.msra.mxu0 %v1034
      %1081 = vmatprep.subr.mxu0 0.0
      %1082 = vmatpush1.msra.mxu0 %v1035
      %1083 = vmatprep.subr.mxu0 0.0
      %1084 = vmatpush1.msra.mxu0 %v1036
      %1085 = vmatprep.subr.mxu0 0.0
      %1086 = vmatpush1.msra.mxu0 %v1037
      %1087 = vmatprep.subr.mxu0 0.0
      %1088 = vmatpush1.msra.mxu0 %v1038
      %1089 = vmatprep.subr.mxu0 0.0
      %1090 = vmatpush1.msra.mxu0 %v1039
      %1091 = vmatprep.subr.mxu0 0.0
      %1092 = vmatpush1.msra.mxu0 %v1040
      %1093 = vmatprep.subr.mxu0 0.0
      %1094 = vmatpush1.msra.mxu0 0.0
      %1095 = vmatprep.subr.mxu0 0.0
      %1096 = vmatpush1.msra.mxu0 0.0
      %1097 = vmatprep.subr.mxu0 0.0
      %1098 = vmatpush1.msra.mxu0 0.0
      %1099 = vmatprep.subr.mxu0 0.0
      %1100 = vmatpush1.msra.mxu0 0.0
      %1101 = vmatprep.subr.mxu0 0.0
      %1102 = vmatpush1.msra.mxu0 0.0
      %1103 = vmatprep.subr.mxu0 0.0
      %1104 = vmatpush1.msra.mxu0 0.0
      %1105 = vmatprep.subr.mxu0 0.0
      %1106 = vmatpush1.msra.mxu0 0.0
      %1107 = vmatprep.subr.mxu0 0.0
      %1108 = vmatpush1.msra.mxu0 0.0
      %1109 = vmatprep.subr.mxu0 0.0
      %1110 = vmatpush1.msra.mxu0 0.0
      %1111 = vmatprep.subr.mxu0 0.0
      %1112 = vmatpush1.msra.mxu0 0.0
      %1113 = vmatprep.subr.mxu0 0.0
      %1114 = vmatpush1.msra.mxu0 0.0
      %1115 = vmatprep.subr.mxu0 0.0
      %1116 = vmatpush1.msra.mxu0 0.0
      %1117 = vmatprep.subr.mxu0 0.0
      %1118 = vmatpush1.msra.mxu0 0.0
      %1119 = vmatprep.subr.mxu0 0.0
      %1120 = vmatpush1.msra.mxu0 0.0
      %1121 = vmatprep.subr.mxu0 0.0
      %1122 = vmatpush1.msra.mxu0 0.0
      %1123 = vmatprep.subr.mxu0 0.0
      %1124 = vmatpush1.msra.mxu0 0.0
      %1125 = vmatprep.mubr.f32.mxu0 0.0
      %1126 = vmatmul.mubr.f32.gmra.mrb[0].mxu0 %v1023
      %v1127 = vpop.f32.mrb[0].mxu0
      %v1128 = vadd.f32 %v1060, %v1127
      %v1129 = vpop.f32.mrb[0].mxu0
      %1130 = vmatprep.mubr.f32.mxu0 0.0
      %1131 = vmatmul.mubr.f32.gmra.mrb[0].mxu0 %v1024
      %v1132 = vpop.f32.mrb[0].mxu0
      %v1133 = vadd.f32 %v1060, %v1132
      %v1134 = vpop.f32.mrb[0].mxu0
      %1135 = vdwg.mxu0
      %v1136 = vmax.f32 %v1128, 0.0
      %v1137 = vmax.f32 %v1133, 0.0
      %v1138 = vld [vmem:[%s2 + $0xf0] sm:$0xff]
      %v1139 = vld [vmem:[%s2 + $0xf8] sm:$0xff]
      %v1140 = vld [vmem:[%s2 + $0x100] sm:$0xff]
      %v1141 = vld [vmem:[%s2 + $0x108] sm:$0xff]
      %v1142 = vld [vmem:[%s2 + $0x110] sm:$0xff]
      %v1143 = vld [vmem:[%s2 + $0x118] sm:$0xff]
      %v1144 = vld [vmem:[%s2 + $0x120] sm:$0xff]
      %v1145 = vld [vmem:[%s2 + $0x128] sm:$0xff]
      %v1146 = vld [vmem:[%s2 + $0x130] sm:$0xff]
      %v1147 = vld [vmem:[%s2 + $0x138] sm:$0xff]
      %v1148 = vld [vmem:[%s2 + $0x140] sm:$0xff]
      %v1149 = vld [vmem:[%s2 + $0x148] sm:$0xff]
      %v1150 = vld [vmem:[%s2 + $0x150] sm:$0xff]
      %v1151 = vld [vmem:[%s2 + $0x158] sm:$0xff]
      %v1152 = vld [vmem:[%s2 + $0x160] sm:$0xff]
      %v1153 = vld [vmem:[%s2 + $0x168] sm:$0xff]
      %v1154 = vld [vmem:[%s2 + $0x1f8] sm:$0xff]
      %v1155 = vld [vmem:[%s2 + $0x200] sm:$0xff]
      %v1156 = vld [vmem:[%s2 + $0x208] sm:$0xff]
      %v1157 = vld [vmem:[%s2 + $0x210] sm:$0xff]
      %v1158 = vld [vmem:[%s2 + $0x218] sm:$0xff]
      %v1159 = vld [vmem:[%s2 + $0x220] sm:$0xff]
      %v1160 = vld [vmem:[%s2 + $0x228] sm:$0xff]
      %v1161 = vld [vmem:[%s2 + $0x230] sm:$0xff]
      %v1162 = vld [vmem:[%s2 + $0x238] sm:$0xff]
      %v1163 = vld [vmem:[%s2 + $0x240] sm:$0xff]
      %v1164 = vld [vmem:[%s2 + $0x248] sm:$0xff]
      %v1165 = vld [vmem:[%s2 + $0x250] sm:$0xff]
      %v1166 = vld [vmem:[%s2 + $0x258] sm:$0xff]
      %v1167 = vld [vmem:[%s2 + $0x260] sm:$0xff]
      %v1168 = vld [vmem:[%s2 + $0x268] sm:$0xff]
      %v1169 = vld [vmem:[%s2 + $0x270] sm:$0xff]
      %v1170 = vlaneseq
      %v1171 = vshrl.u32 %v1170, 7
      %v1172 = vsub.s32 1, %v1171
      %v1173 = vrot.slane %v853, %v1172
      %1174 = vmatprep.subr.mxu0 0.0
      %1175 = vmatpush1.msra.mxu0 %v1138
      %1176 = vmatprep.subr.mxu0 0.0
      %1177 = vmatpush1.msra.mxu0 %v1139
      %1178 = vmatprep.subr.mxu0 0.0
      %1179 = vmatpush1.msra.mxu0 %v1140
      %1180 = vmatprep.subr.mxu0 0.0
      %1181 = vmatpush1.msra.mxu0 %v1141
      %1182 = vmatprep.subr.mxu0 0.0
      %1183 = vmatpush1.msra.mxu0 %v1142
      %1184 = vmatprep.subr.mxu0 0.0
      %1185 = vmatpush1.msra.mxu0 %v1143
      %1186 = vmatprep.subr.mxu0 0.0
      %1187 = vmatpush1.msra.mxu0 %v1144
      %1188 = vmatprep.subr.mxu0 0.0
      %1189 = vmatpush1.msra.mxu0 %v1145
      %1190 = vmatprep.subr.mxu0 0.0
      %1191 = vmatpush1.msra.mxu0 %v1146
      %1192 = vmatprep.subr.mxu0 0.0
      %1193 = vmatpush1.msra.mxu0 %v1147
      %1194 = vmatprep.subr.mxu0 0.0
      %1195 = vmatpush1.msra.mxu0 %v1148
      %1196 = vmatprep.subr.mxu0 0.0
      %1197 = vmatpush1.msra.mxu0 %v1149
      %1198 = vmatprep.subr.mxu0 0.0
      %1199 = vmatpush1.msra.mxu0 %v1150
      %1200 = vmatprep.subr.mxu0 0.0
      %1201 = vmatpush1.msra.mxu0 %v1151
      %1202 = vmatprep.subr.mxu0 0.0
      %1203 = vmatpush1.msra.mxu0 %v1152
      %1204 = vmatprep.subr.mxu0 0.0
      %1205 = vmatpush1.msra.mxu0 %v1153
      %1206 = vmatprep.subr.mxu0 0.0
      %1207 = vmatpush1.msra.mxu0 0.0
      %1208 = vmatprep.subr.mxu0 0.0
      %1209 = vmatpush1.msra.mxu0 0.0
      %1210 = vmatprep.subr.mxu0 0.0
      %1211 = vmatpush1.msra.mxu0 0.0
      %1212 = vmatprep.subr.mxu0 0.0
      %1213 = vmatpush1.msra.mxu0 0.0
      %1214 = vmatprep.subr.mxu0 0.0
      %1215 = vmatpush1.msra.mxu0 0.0
      %1216 = vmatprep.subr.mxu0 0.0
      %1217 = vmatpush1.msra.mxu0 0.0
      %1218 = vmatprep.subr.mxu0 0.0
      %1219 = vmatpush1.msra.mxu0 0.0
      %1220 = vmatprep.subr.mxu0 0.0
      %1221 = vmatpush1.msra.mxu0 0.0
      %1222 = vmatprep.subr.mxu0 0.0
      %1223 = vmatpush1.msra.mxu0 0.0
      %1224 = vmatprep.subr.mxu0 0.0
      %1225 = vmatpush1.msra.mxu0 0.0
      %1226 = vmatprep.subr.mxu0 0.0
      %1227 = vmatpush1.msra.mxu0 0.0
      %1228 = vmatprep.subr.mxu0 0.0
      %1229 = vmatpush1.msra.mxu0 0.0
      %1230 = vmatprep.subr.mxu0 0.0
      %1231 = vmatpush1.msra.mxu0 0.0
      %1232 = vmatprep.subr.mxu0 0.0
      %1233 = vmatpush1.msra.mxu0 0.0
      %1234 = vmatprep.subr.mxu0 0.0
      %1235 = vmatpush1.msra.mxu0 0.0
      %1236 = vmatprep.subr.mxu0 0.0
      %1237 = vmatpush1.msra.mxu0 0.0
      %1238 = vmatprep.mubr.f32.mxu0 0.0
      %1239 = vmatmul.mubr.f32.gmra.mrb[0].mxu0 %v1023
      %v1240 = vpop.f32.mrb[0].mxu0
      %v1241 = vadd.f32 %v1173, %v1240
      %v1242 = vpop.f32.mrb[0].mxu0
      %1243 = vmatprep.mubr.f32.mxu0 0.0
      %1244 = vmatmul.mubr.f32.gmra.mrb[0].mxu0 %v1024
      %v1245 = vpop.f32.mrb[0].mxu0
      %v1246 = vadd.f32 %v1173, %v1245
      %v1247 = vpop.f32.mrb[0].mxu0
      %1248 = vdwg.mxu0
      %v1249 = vmax.f32 %v1241, 0.0
      %v1250 = vmax.f32 %v1246, 0.0
      %1251 = vmatprep.subr.mxu0 0.0
      %1252 = vmatpush1.msra.mxu0 %v1154
      %1253 = vmatprep.subr.mxu0 0.0
      %1254 = vmatpush1.msra.mxu0 %v1155
      %1255 = vmatprep.subr.mxu0 0.0
      %1256 = vmatpush1.msra.mxu0 %v1156
      %1257 = vmatprep.subr.mxu0 0.0
      %1258 = vmatpush1.msra.mxu0 %v1157
      %1259 = vmatprep.subr.mxu0 0.0
      %1260 = vmatpush1.msra.mxu0 %v1158
      %1261 = vmatprep.subr.mxu0 0.0
      %1262 = vmatpush1.msra.mxu0 %v1159
      %1263 = vmatprep.subr.mxu0 0.0
      %1264 = vmatpush1.msra.mxu0 %v1160
      %1265 = vmatprep.subr.mxu0 0.0
      %1266 = vmatpush1.msra.mxu0 %v1161
      %1267 = vmatprep.subr.mxu0 0.0
      %1268 = vmatpush1.msra.mxu0 %v1162
      %1269 = vmatprep.subr.mxu0 0.0
      %1270 = vmatpush1.msra.mxu0 %v1163
      %1271 = vmatprep.subr.mxu0 0.0
      %1272 = vmatpush1.msra.mxu0 %v1164
      %1273 = vmatprep.subr.mxu0 0.0
      %1274 = vmatpush1.msra.mxu0 %v1165
      %1275 = vmatprep.subr.mxu0 0.0
      %1276 = vmatpush1.msra.mxu0 %v1166
      %1277 = vmatprep.subr.mxu0 0.0
      %1278 = vmatpush1.msra.mxu0 %v1167
      %1279 = vmatprep.subr.mxu0 0.0
      %1280 = vmatpush1.msra.mxu0 %v1168
      %1281 = vmatprep.subr.mxu0 0.0
      %1282 = vmatpush1.msra.mxu0 %v1169
      %1283 = vmatprep.subr.mxu0 0.0
      %1284 = vmatpush1.msra.mxu0 0.0
      %1285 = vmatprep.subr.mxu0 0.0
      %1286 = vmatpush1.msra.mxu0 0.0
      %1287 = vmatprep.subr.mxu0 0.0
      %1288 = vmatpush1.msra.mxu0 0.0
      %1289 = vmatprep.subr.mxu0 0.0
      %1290 = vmatpush1.msra.mxu0 0.0
      %1291 = vmatprep.subr.mxu0 0.0
      %1292 = vmatpush1.msra.mxu0 0.0
      %1293 = vmatprep.subr.mxu0 0.0
      %1294 = vmatpush1.msra.mxu0 0.0
      %1295 = vmatprep.subr.mxu0 0.0
      %1296 = vmatpush1.msra.mxu0 0.0
      %1297 = vmatprep.subr.mxu0 0.0
      %1298 = vmatpush1.msra.mxu0 0.0
      %1299 = vmatprep.subr.mxu0 0.0
      %1300 = vmatpush1.msra.mxu0 0.0
      %1301 = vmatprep.subr.mxu0 0.0
      %1302 = vmatpush1.msra.mxu0 0.0
      %1303 = vmatprep.subr.mxu0 0.0
      %1304 = vmatpush1.msra.mxu0 0.0
      %1305 = vmatprep.subr.mxu0 0.0
      %1306 = vmatpush1.msra.mxu0 0.0
      %1307 = vmatprep.subr.mxu0 0.0
      %1308 = vmatpush1.msra.mxu0 0.0
      %1309 = vmatprep.subr.mxu0 0.0
      %1310 = vmatpush1.msra.mxu0 0.0
      %1311 = vmatprep.subr.mxu0 0.0
      %1312 = vmatpush1.msra.mxu0 0.0
      %1313 = vmatprep.subr.mxu0 0.0
      %1314 = vmatpush1.msra.mxu0 0.0
      %1315 = vmatprep.mubr.f32.mxu0 0.0
      %1316 = vmatmul.mubr.f32.gmra.mrb[0].mxu0 %v1249
      %v1317 = vpop.f32.mrb[0].mxu0
      %v1318 = vadd.f32 0.0, %v1317
      %v1319 = vpop.f32.mrb[0].mxu0
      %1320 = vmatprep.mubr.f32.mxu0 0.0
      %1321 = vmatmul.mubr.f32.gmra.mrb[0].mxu0 %v1250
      %v1322 = vpop.f32.mrb[0].mxu0
      %v1323 = vadd.f32 0.0, %v1322
      %v1324 = vpop.f32.mrb[0].mxu0
      %1325 = vdwg.mxu0
      %1326 = vmatprep.subr.mxu0 0.0
      %1327 = vmatpush1.msra.mxu0 %v1041
      %1328 = vmatprep.subr.mxu0 0.0
      %1329 = vmatpush1.msra.mxu0 %v1042
      %1330 = vmatprep.subr.mxu0 0.0
      %1331 = vmatpush1.msra.mxu0 %v1043
      %1332 = vmatprep.subr.mxu0 0.0
      %1333 = vmatpush1.msra.mxu0 %v1044
      %1334 = vmatprep.subr.mxu0 0.0
      %1335 = vmatpush1.msra.mxu0 %v1045
      %1336 = vmatprep.subr.mxu0 0.0
      %1337 = vmatpush1.msra.mxu0 %v1046
      %1338 = vmatprep.subr.mxu0 0.0
      %1339 = vmatpush1.msra.mxu0 %v1047
      %1340 = vmatprep.subr.mxu0 0.0
      %1341 = vmatpush1.msra.mxu0 %v1048
      %1342 = vmatprep.subr.mxu0 0.0
      %1343 = vmatpush1.msra.mxu0 %v1049
      %1344 = vmatprep.subr.mxu0 0.0
      %1345 = vmatpush1.msra.mxu0 %v1050
      %1346 = vmatprep.subr.mxu0 0.0
      %1347 = vmatpush1.msra.mxu0 %v1051
      %1348 = vmatprep.subr.mxu0 0.0
      %1349 = vmatpush1.msra.mxu0 %v1052
      %1350 = vmatprep.subr.mxu0 0.0
      %1351 = vmatpush1.msra.mxu0 %v1053
      %1352 = vmatprep.subr.mxu0 0.0
      %1353 = vmatpush1.msra.mxu0 %v1054
      %1354 = vmatprep.subr.mxu0 0.0
      %1355 = vmatpush1.msra.mxu0 %v1055
      %1356 = vmatprep.subr.mxu0 0.0
      %1357 = vmatpush1.msra.mxu0 %v1056
      %1358 = vmatprep.subr.mxu0 0.0
      %1359 = vmatpush1.msra.mxu0 0.0
      %1360 = vmatprep.subr.mxu0 0.0
      %1361 = vmatpush1.msra.mxu0 0.0
      %1362 = vmatprep.subr.mxu0 0.0
      %1363 = vmatpush1.msra.mxu0 0.0
      %1364 = vmatprep.subr.mxu0 0.0
      %1365 = vmatpush1.msra.mxu0 0.0
      %1366 = vmatprep.subr.mxu0 0.0
      %1367 = vmatpush1.msra.mxu0 0.0
      %1368 = vmatprep.subr.mxu0 0.0
      %1369 = vmatpush1.msra.mxu0 0.0
      %1370 = vmatprep.subr.mxu0 0.0
      %1371 = vmatpush1.msra.mxu0 0.0
      %1372 = vmatprep.subr.mxu0 0.0
      %1373 = vmatpush1.msra.mxu0 0.0
      %1374 = vmatprep.subr.mxu0 0.0
      %1375 = vmatpush1.msra.mxu0 0.0
      %1376 = vmatprep.subr.mxu0 0.0
      %1377 = vmatpush1.msra.mxu0 0.0
      %1378 = vmatprep.subr.mxu0 0.0
      %1379 = vmatpush1.msra.mxu0 0.0
      %1380 = vmatprep.subr.mxu0 0.0
      %1381 = vmatpush1.msra.mxu0 0.0
      %1382 = vmatprep.subr.mxu0 0.0
      %1383 = vmatpush1.msra.mxu0 0.0
      %1384 = vmatprep.subr.mxu0 0.0
      %1385 = vmatpush1.msra.mxu0 0.0
      %1386 = vmatprep.subr.mxu0 0.0
      %1387 = vmatpush1.msra.mxu0 0.0
      %1388 = vmatprep.subr.mxu0 0.0
      %1389 = vmatpush1.msra.mxu0 0.0
      %1390 = vmatprep.mubr.f32.mxu0 0.0
      %1391 = vmatmul.mubr.f32.gmra.mrb[0].mxu0 %v1136
      %v1392 = vpop.f32.mrb[0].mxu0
      %v1393 = vadd.f32 %v1318, %v1392
      %v1394 = vpop.f32.mrb[0].mxu0
      %1395 = vmatprep.mubr.f32.mxu0 0.0
      %1396 = vmatmul.mubr.f32.gmra.mrb[0].mxu0 %v1137
      %v1397 = vpop.f32.mrb[0].mxu0
      %v1398 = vadd.f32 %v1323, %v1397
      %v1399 = vpop.f32.mrb[0].mxu0
      %1400 = vdwg.mxu0
      %v1401 = vadd.f32 %v849, %v1393
      %v1402 = vadd.f32 %v850, %v1398
      %v1403 = vlaneseq
      %v1404 = vshrl.u32 %v1403, 7
      %v1405 = vsub.s32 0, %v1404
      %v1406 = vrot.slane %v854, %v1405
      %v1407 = vadd.f32 %v1401, %v1406
      %v1408 = vadd.f32 %v1402, %v1406
      %v1409 = vld [vmem:[%s2 + $0x280] sm:$0x1]
      %v1410 = vld [vmem:[%s2 + $0x288] sm:$0x1]
      %v1411 = vld [vmem:[%s2 + $0x290] sm:$0xff]
      %v1412 = vld [vmem:[%s2 + $0x298] sm:$0xff]
      %v1413 = vld [vmem:[%s2 + $0x2a0] sm:$0xff]
      %v1414 = vld [vmem:[%s2 + $0x2a8] sm:$0xff]
      %v1415 = vld [vmem:[%s2 + $0x2b0] sm:$0xff]
      %v1416 = vld [vmem:[%s2 + $0x2b8] sm:$0xff]
      %v1417 = vld [vmem:[%s2 + $0x2c0] sm:$0xff]
      %v1418 = vld [vmem:[%s2 + $0x2c8] sm:$0xff]
      %v1419 = vld [vmem:[%s2 + $0x2d0] sm:$0xff]
      %v1420 = vld [vmem:[%s2 + $0x2d8] sm:$0xff]
      %1421 = vmatprep.subr.mxu0 0.0
      %1422 = vmatpush1.msra.mxu0 %v171
      %1423 = vmatprep.subr.mxu0 0.0
      %1424 = vmatpush1.msra.mxu0 %v172
      %1425 = vmatprep.subr.mxu0 0.0
      %1426 = vmatpush1.msra.mxu0 %v173
      %1427 = vmatprep.subr.mxu0 0.0
      %1428 = vmatpush1.msra.mxu0 %v174
      %1429 = vmatprep.subr.mxu0 0.0
      %1430 = vmatpush1.msra.mxu0 %v175
      %1431 = vmatprep.subr.mxu0 0.0
      %1432 = vmatpush1.msra.mxu0 %v176
      %1433 = vmatprep.subr.mxu0 0.0
      %1434 = vmatpush1.msra.mxu0 %v177
      %1435 = vmatprep.subr.mxu0 0.0
      %1436 = vmatpush1.msra.mxu0 %v178
      %1437 = vmatprep.subr.mxu0 0.0
      %1438 = vmatpush1.msra.mxu0 %v179
      %1439 = vmatprep.subr.mxu0 0.0
      %1440 = vmatpush1.msra.mxu0 %v180
      %1441 = vmatprep.subr.mxu0 0.0
      %1442 = vmatpush1.msra.mxu0 %v181
      %1443 = vmatprep.subr.mxu0 0.0
      %1444 = vmatpush1.msra.mxu0 %v182
      %1445 = vmatprep.subr.mxu0 0.0
      %1446 = vmatpush1.msra.mxu0 %v183
      %1447 = vmatprep.subr.mxu0 0.0
      %1448 = vmatpush1.msra.mxu0 %v184
      %1449 = vmatprep.subr.mxu0 0.0
      %1450 = vmatpush1.msra.mxu0 %v185
      %1451 = vmatprep.subr.mxu0 0.0
      %1452 = vmatpush1.msra.mxu0 %v186
      %1453 = vmatprep.subr.mxu0 0.0
      %1454 = vmatpush1.msra.mxu0 0.0
      %1455 = vmatprep.subr.mxu0 0.0
      %1456 = vmatpush1.msra.mxu0 0.0
      %1457 = vmatprep.subr.mxu0 0.0
      %1458 = vmatpush1.msra.mxu0 0.0
      %1459 = vmatprep.subr.mxu0 0.0
      %1460 = vmatpush1.msra.mxu0 0.0
      %1461 = vmatprep.subr.mxu0 0.0
      %1462 = vmatpush1.msra.mxu0 0.0
      %1463 = vmatprep.subr.mxu0 0.0
      %1464 = vmatpush1.msra.mxu0 0.0
      %1465 = vmatprep.subr.mxu0 0.0
      %1466 = vmatpush1.msra.mxu0 0.0
      %1467 = vmatprep.subr.mxu0 0.0
      %1468 = vmatpush1.msra.mxu0 0.0
      %1469 = vmatprep.subr.mxu0 0.0
      %1470 = vmatpush1.msra.mxu0 0.0
      %1471 = vmatprep.subr.mxu0 0.0
      %1472 = vmatpush1.msra.mxu0 0.0
      %1473 = vmatprep.subr.mxu0 0.0
      %1474 = vmatpush1.msra.mxu0 0.0
      %1475 = vmatprep.subr.mxu0 0.0
      %1476 = vmatpush1.msra.mxu0 0.0
      %1477 = vmatprep.subr.mxu0 0.0
      %1478 = vmatpush1.msra.mxu0 0.0
      %1479 = vmatprep.subr.mxu0 0.0
      %1480 = vmatpush1.msra.mxu0 0.0
      %1481 = vmatprep.subr.mxu0 0.0
      %1482 = vmatpush1.msra.mxu0 0.0
      %1483 = vmatprep.subr.mxu0 0.0
      %1484 = vmatpush1.msra.mxu0 0.0
      %1485 = vmatprep.mubr.f32.mxu0 0.0
      %1486 = vmatmul.mubr.f32.gmra.mrb[0].mxu0 %v1407
      %v1487 = vpop.f32.mrb[0].mxu0
      %v1488 = vadd.f32 0.0, %v1487
      %v1489 = vpop.f32.mrb[0].mxu0
      %1490 = vmatprep.mubr.f32.mxu0 0.0
      %1491 = vmatmul.mubr.f32.gmra.mrb[0].mxu0 %v1408
      %v1492 = vpop.f32.mrb[0].mxu0
      %v1493 = vadd.f32 0.0, %v1492
      %v1494 = vpop.f32.mrb[0].mxu0
      %1495 = vdwg.mxu0
      %v1496 = vsub.f32 %v1407, %v1488
      %v1497 = vsub.f32 %v1408, %v1493
      %v1498 = vmul.f32 %v1496, %v1496
      %v1499 = vmul.f32 %v1497, %v1497
      %1500 = vmatprep.subr.mxu0 0.0
      %1501 = vmatpush1.msra.mxu0 %v171
      %1502 = vmatprep.subr.mxu0 0.0
      %1503 = vmatpush1.msra.mxu0 %v172
      %1504 = vmatprep.subr.mxu0 0.0
      %1505 = vmatpush1.msra.mxu0 %v173
      %1506 = vmatprep.subr.mxu0 0.0
      %1507 = vmatpush1.msra.mxu0 %v174
      %1508 = vmatprep.subr.mxu0 0.0
      %1509 = vmatpush1.msra.mxu0 %v175
      %1510 = vmatprep.subr.mxu0 0.0
      %1511 = vmatpush1.msra.mxu0 %v176
      %1512 = vmatprep.subr.mxu0 0.0
      %1513 = vmatpush1.msra.mxu0 %v177
      %1514 = vmatprep.subr.mxu0 0.0
      %1515 = vmatpush1.msra.mxu0 %v178
      %1516 = vmatprep.subr.mxu0 0.0
      %1517 = vmatpush1.msra.mxu0 %v179
      %1518 = vmatprep.subr.mxu0 0.0
      %1519 = vmatpush1.msra.mxu0 %v180
      %1520 = vmatprep.subr.mxu0 0.0
      %1521 = vmatpush1.msra.mxu0 %v181
      %1522 = vmatprep.subr.mxu0 0.0
      %1523 = vmatpush1.msra.mxu0 %v182
      %1524 = vmatprep.subr.mxu0 0.0
      %1525 = vmatpush1.msra.mxu0 %v183
      %1526 = vmatprep.subr.mxu0 0.0
      %1527 = vmatpush1.msra.mxu0 %v184
      %1528 = vmatprep.subr.mxu0 0.0
      %1529 = vmatpush1.msra.mxu0 %v185
      %1530 = vmatprep.subr.mxu0 0.0
      %1531 = vmatpush1.msra.mxu0 %v186
      %1532 = vmatprep.subr.mxu0 0.0
      %1533 = vmatpush1.msra.mxu0 0.0
      %1534 = vmatprep.subr.mxu0 0.0
      %1535 = vmatpush1.msra.mxu0 0.0
      %1536 = vmatprep.subr.mxu0 0.0
      %1537 = vmatpush1.msra.mxu0 0.0
      %1538 = vmatprep.subr.mxu0 0.0
      %1539 = vmatpush1.msra.mxu0 0.0
      %1540 = vmatprep.subr.mxu0 0.0
      %1541 = vmatpush1.msra.mxu0 0.0
      %1542 = vmatprep.subr.mxu0 0.0
      %1543 = vmatpush1.msra.mxu0 0.0
      %1544 = vmatprep.subr.mxu0 0.0
      %1545 = vmatpush1.msra.mxu0 0.0
      %1546 = vmatprep.subr.mxu0 0.0
      %1547 = vmatpush1.msra.mxu0 0.0
      %1548 = vmatprep.subr.mxu0 0.0
      %1549 = vmatpush1.msra.mxu0 0.0
      %1550 = vmatprep.subr.mxu0 0.0
      %1551 = vmatpush1.msra.mxu0 0.0
      %1552 = vmatprep.subr.mxu0 0.0
      %1553 = vmatpush1.msra.mxu0 0.0
      %1554 = vmatprep.subr.mxu0 0.0
      %1555 = vmatpush1.msra.mxu0 0.0
      %1556 = vmatprep.subr.mxu0 0.0
      %1557 = vmatpush1.msra.mxu0 0.0
      %1558 = vmatprep.subr.mxu0 0.0
      %1559 = vmatpush1.msra.mxu0 0.0
      %1560 = vmatprep.subr.mxu0 0.0
      %1561 = vmatpush1.msra.mxu0 0.0
      %1562 = vmatprep.subr.mxu0 0.0
      %1563 = vmatpush1.msra.mxu0 0.0
      %1564 = vmatprep.mubr.f32.mxu0 0.0
      %1565 = vmatmul.mubr.f32.gmra.mrb[0].mxu0 %v1498
      %v1566 = vpop.f32.mrb[0].mxu0
      %v1567 = vadd.f32 1e-05, %v1566
      %v1568 = vpop.f32.mrb[0].mxu0
      %1569 = vmatprep.mubr.f32.mxu0 0.0
      %1570 = vmatmul.mubr.f32.gmra.mrb[0].mxu0 %v1499
      %v1571 = vpop.f32.mrb[0].mxu0
      %v1572 = vadd.f32 1e-05, %v1571
      %v1573 = vpop.f32.mrb[0].mxu0
      %1574 = vdwg.mxu0
      %v1575 = vrsqrt.pop %v1567
      %v1576 = vrsqrt.pop %v1572
      %v1577 = vmul.f32 %v1496, %v1575
      %v1578 = vmul.f32 %v1497, %v1576
      %v1579 = vlaneseq
      %v1580 = vshrl.u32 %v1579, 7
      %v1581 = vsub.s32 0, %v1580
      %v1582 = vrot.slane %v1409, %v1581
      %v1583 = vmul.f32 %v1577, %v1582
      %v1584 = vmul.f32 %v1578, %v1582
      %v1585 = vlaneseq
      %v1586 = vshrl.u32 %v1585, 7
      %v1587 = vsub.s32 0, %v1586
      %v1588 = vrot.slane %v1410, %v1587
      %v1589 = vadd.f32 %v1583, %v1588
      %v1590 = vadd.f32 %v1584, %v1588
      %1591 = vmatprep.subr.mxu0 0.0
      %1592 = vmatpush1.msra.mxu0 %v187
      %1593 = vmatprep.subr.mxu0 0.0
      %1594 = vmatpush1.msra.mxu0 %v188
      %1595 = vmatprep.subr.mxu0 0.0
      %1596 = vmatpush1.msra.mxu0 %v189
      %1597 = vmatprep.subr.mxu0 0.0
      %1598 = vmatpush1.msra.mxu0 %v190
      %1599 = vmatprep.subr.mxu0 0.0
      %1600 = vmatpush1.msra.mxu0 %v191
      %1601 = vmatprep.subr.mxu0 0.0
      %1602 = vmatpush1.msra.mxu0 %v192
      %1603 = vmatprep.subr.mxu0 0.0
      %1604 = vmatpush1.msra.mxu0 %v193
      %1605 = vmatprep.subr.mxu0 0.0
      %1606 = vmatpush1.msra.mxu0 %v194
      %1607 = vmatprep.subr.mxu0 0.0
      %1608 = vmatpush1.msra.mxu0 %v195
      %1609 = vmatprep.subr.mxu0 0.0
      %1610 = vmatpush1.msra.mxu0 %v196
      %1611 = vmatprep.subr.mxu0 0.0
      %1612 = vmatpush1.msra.mxu0 %v197
      %1613 = vmatprep.subr.mxu0 0.0
      %1614 = vmatpush1.msra.mxu0 %v198
      %1615 = vmatprep.subr.mxu0 0.0
      %1616 = vmatpush1.msra.mxu0 %v199
      %1617 = vmatprep.subr.mxu0 0.0
      %1618 = vmatpush1.msra.mxu0 %v200
      %1619 = vmatprep.subr.mxu0 0.0
      %1620 = vmatpush1.msra.mxu0 %v201
      %1621 = vmatprep.subr.mxu0 0.0
      %1622 = vmatpush1.msra.mxu0 %v202
      %1623 = vmatprep.subr.mxu0 0.0
      %1624 = vmatpush1.msra.mxu0 0.0
      %1625 = vmatprep.subr.mxu0 0.0
      %1626 = vmatpush1.msra.mxu0 0.0
      %1627 = vmatprep.subr.mxu0 0.0
      %1628 = vmatpush1.msra.mxu0 0.0
      %1629 = vmatprep.subr.mxu0 0.0
      %1630 = vmatpush1.msra.mxu0 0.0
      %1631 = vmatprep.subr.mxu0 0.0
      %1632 = vmatpush1.msra.mxu0 0.0
      %1633 = vmatprep.subr.mxu0 0.0
      %1634 = vmatpush1.msra.mxu0 0.0
      %1635 = vmatprep.subr.mxu0 0.0
      %1636 = vmatpush1.msra.mxu0 0.0
      %1637 = vmatprep.subr.mxu0 0.0
      %1638 = vmatpush1.msra.mxu0 0.0
      %1639 = vmatprep.subr.mxu0 0.0
      %1640 = vmatpush1.msra.mxu0 0.0
      %1641 = vmatprep.subr.mxu0 0.0
      %1642 = vmatpush1.msra.mxu0 0.0
      %1643 = vmatprep.subr.mxu0 0.0
      %1644 = vmatpush1.msra.mxu0 0.0
      %1645 = vmatprep.subr.mxu0 0.0
      %1646 = vmatpush1.msra.mxu0 0.0
      %1647 = vmatprep.subr.mxu0 0.0
      %1648 = vmatpush1.msra.mxu0 0.0
      %1649 = vmatprep.subr.mxu0 0.0
      %1650 = vmatpush1.msra.mxu0 0.0
      %1651 = vmatprep.subr.mxu0 0.0
      %1652 = vmatpush1.msra.mxu0 0.0
      %1653 = vmatprep.subr.mxu0 0.0
      %1654 = vmatpush1.msra.mxu0 0.0
      %1655 = vmatprep.mubr.f32.mxu0 0.0
      %1656 = vmatmul.mubr.f32.gmra.mrb[0].mxu0 %v1589
      %v1657 = vpop.f32.mrb[0].mxu0
      %v1658 = vadd.f32 0.0, %v1657
      %v1659 = vpop.f32.mrb[0].mxu0
      %1660 = vmatprep.mubr.f32.mxu0 0.0
      %1661 = vmatmul.mubr.f32.gmra.mrb[0].mxu0 %v1590
      %v1662 = vpop.f32.mrb[0].mxu0
      %v1663 = vadd.f32 0.0, %v1662
      %v1664 = vpop.f32.mrb[0].mxu0
      %1665 = vdwg.mxu0
      %v1667 = vsel %vm494, %v1411, 0
      %1669 = vmatprep.subr.mxu0 0.0
      %1670 = vmatpush1.msra.mxu0 %v1658
      %1671 = vmatprep.subr.mxu0 0.0
      %1672 = vmatpush1.msra.mxu0 %v1663
      %1673 = vmatprep.subr.mxu0 0.0
      %1674 = vmatpush1.msra.mxu0 0.0
      %1675 = vmatprep.subr.mxu0 0.0
      %1676 = vmatpush1.msra.mxu0 0.0
      %1677 = vmatprep.subr.mxu0 0.0
      %1678 = vmatpush1.msra.mxu0 0.0
      %1679 = vmatprep.subr.mxu0 0.0
      %1680 = vmatpush1.msra.mxu0 0.0
      %1681 = vmatprep.subr.mxu0 0.0
      %1682 = vmatpush1.msra.mxu0 0.0
      %1683 = vmatprep.subr.mxu0 0.0
      %1684 = vmatpush1.msra.mxu0 0.0
      %1685 = vmatprep.subr.mxu0 0.0
      %1686 = vmatpush1.msra.mxu0 0.0
      %1687 = vmatprep.subr.mxu0 0.0
      %1688 = vmatpush1.msra.mxu0 0.0
      %1689 = vmatprep.subr.mxu0 0.0
      %1690 = vmatpush1.msra.mxu0 0.0
      %1691 = vmatprep.subr.mxu0 0.0
      %1692 = vmatpush1.msra.mxu0 0.0
      %1693 = vmatprep.subr.mxu0 0.0
      %1694 = vmatpush1.msra.mxu0 0.0
      %1695 = vmatprep.subr.mxu0 0.0
      %1696 = vmatpush1.msra.mxu0 0.0
      %1697 = vmatprep.subr.mxu0 0.0
      %1698 = vmatpush1.msra.mxu0 0.0
      %1699 = vmatprep.subr.mxu0 0.0
      %1700 = vmatpush1.msra.mxu0 0.0
      %1701 = vmatprep.subr.mxu0 0.0
      %1702 = vmatpush1.msra.mxu0 0.0
      %1703 = vmatprep.subr.mxu0 0.0
      %1704 = vmatpush1.msra.mxu0 0.0
      %1705 = vmatprep.subr.mxu0 0.0
      %1706 = vmatpush1.msra.mxu0 0.0
      %1707 = vmatprep.subr.mxu0 0.0
      %1708 = vmatpush1.msra.mxu0 0.0
      %1709 = vmatprep.subr.mxu0 0.0
      %1710 = vmatpush1.msra.mxu0 0.0
      %1711 = vmatprep.subr.mxu0 0.0
      %1712 = vmatpush1.msra.mxu0 0.0
      %1713 = vmatprep.subr.mxu0 0.0
      %1714 = vmatpush1.msra.mxu0 0.0
      %1715 = vmatprep.subr.mxu0 0.0
      %1716 = vmatpush1.msra.mxu0 0.0
      %1717 = vmatprep.subr.mxu0 0.0
      %1718 = vmatpush1.msra.mxu0 0.0
      %1719 = vmatprep.subr.mxu0 0.0
      %1720 = vmatpush1.msra.mxu0 0.0
      %1721 = vmatprep.subr.mxu0 0.0
      %1722 = vmatpush1.msra.mxu0 0.0
      %1723 = vmatprep.subr.mxu0 0.0
      %1724 = vmatpush1.msra.mxu0 0.0
      %1725 = vmatprep.subr.mxu0 0.0
      %1726 = vmatpush1.msra.mxu0 0.0
      %1727 = vmatprep.subr.mxu0 0.0
      %1728 = vmatpush1.msra.mxu0 0.0
      %1729 = vmatprep.subr.mxu0 0.0
      %1730 = vmatpush1.msra.mxu0 0.0
      %1731 = vmatprep.subr.mxu0 0.0
      %1732 = vmatpush1.msra.mxu0 0.0
      %1733 = vmatprep.mubr.f32.mxu0 0.0
      %1734 = vmatmul.mubr.f32.gmra.mrb[0].mxu0 %v1667
      %v1735 = vpop.f32.mrb[0].mxu0
      %v1736 = vadd.f32 %v1412, %v1735
      %v1737 = vpop.f32.mrb[0].mxu0
      %1738 = vdwg.mxu0
      %v1739 = vadd.f32 %v1736, 3.0
      %v1740 = vmax.f32 %v1739, 0.0
      %v1741 = vmin.f32 %v1740, 6.0
      %v1742 = vmul.f32 %v1741, 0.16666667
      %v1743 = vmul.f32 %v1736, %v1742
      %v1745 = vsel %vm573, %v1413, 0
      %v1748 = vsel %vm573, %v1414, 0
      %v1751 = vsel %vm573, %v1415, 0
      %v1754 = vsel %vm573, %v1416, 0
      %1756 = vmatprep.subr.mxu0 0.0
      %1757 = vmatpush1.msra.mxu0 %v1743
      %1758 = vmatprep.subr.mxu0 0.0
      %1759 = vmatpush1.msra.mxu0 0.0
      %1760 = vmatprep.subr.mxu0 0.0
      %1761 = vmatpush1.msra.mxu0 0.0
      %1762 = vmatprep.subr.mxu0 0.0
      %1763 = vmatpush1.msra.mxu0 0.0
      %1764 = vmatprep.subr.mxu0 0.0
      %1765 = vmatpush1.msra.mxu0 0.0
      %1766 = vmatprep.subr.mxu0 0.0
      %1767 = vmatpush1.msra.mxu0 0.0
      %1768 = vmatprep.subr.mxu0 0.0
      %1769 = vmatpush1.msra.mxu0 0.0
      %1770 = vmatprep.subr.mxu0 0.0
      %1771 = vmatpush1.msra.mxu0 0.0
      %1772 = vmatprep.subr.mxu0 0.0
      %1773 = vmatpush1.msra.mxu0 0.0
      %1774 = vmatprep.subr.mxu0 0.0
      %1775 = vmatpush1.msra.mxu0 0.0
      %1776 = vmatprep.subr.mxu0 0.0
      %1777 = vmatpush1.msra.mxu0 0.0
      %1778 = vmatprep.subr.mxu0 0.0
      %1779 = vmatpush1.msra.mxu0 0.0
      %1780 = vmatprep.subr.mxu0 0.0
      %1781 = vmatpush1.msra.mxu0 0.0
      %1782 = vmatprep.subr.mxu0 0.0
      %1783 = vmatpush1.msra.mxu0 0.0
      %1784 = vmatprep.subr.mxu0 0.0
      %1785 = vmatpush1.msra.mxu0 0.0
      %1786 = vmatprep.subr.mxu0 0.0
      %1787 = vmatpush1.msra.mxu0 0.0
      %1788 = vmatprep.subr.mxu0 0.0
      %1789 = vmatpush1.msra.mxu0 0.0
      %1790 = vmatprep.subr.mxu0 0.0
      %1791 = vmatpush1.msra.mxu0 0.0
      %1792 = vmatprep.subr.mxu0 0.0
      %1793 = vmatpush1.msra.mxu0 0.0
      %1794 = vmatprep.subr.mxu0 0.0
      %1795 = vmatpush1.msra.mxu0 0.0
      %1796 = vmatprep.subr.mxu0 0.0
      %1797 = vmatpush1.msra.mxu0 0.0
      %1798 = vmatprep.subr.mxu0 0.0
      %1799 = vmatpush1.msra.mxu0 0.0
      %1800 = vmatprep.subr.mxu0 0.0
      %1801 = vmatpush1.msra.mxu0 0.0
      %1802 = vmatprep.subr.mxu0 0.0
      %1803 = vmatpush1.msra.mxu0 0.0
      %1804 = vmatprep.subr.mxu0 0.0
      %1805 = vmatpush1.msra.mxu0 0.0
      %1806 = vmatprep.subr.mxu0 0.0
      %1807 = vmatpush1.msra.mxu0 0.0
      %1808 = vmatprep.subr.mxu0 0.0
      %1809 = vmatpush1.msra.mxu0 0.0
      %1810 = vmatprep.subr.mxu0 0.0
      %1811 = vmatpush1.msra.mxu0 0.0
      %1812 = vmatprep.subr.mxu0 0.0
      %1813 = vmatpush1.msra.mxu0 0.0
      %1814 = vmatprep.subr.mxu0 0.0
      %1815 = vmatpush1.msra.mxu0 0.0
      %1816 = vmatprep.subr.mxu0 0.0
      %1817 = vmatpush1.msra.mxu0 0.0
      %1818 = vmatprep.subr.mxu0 0.0
      %1819 = vmatpush1.msra.mxu0 0.0
      %1820 = vmatprep.mubr.f32.mxu0 0.0
      %1821 = vmatmul.mubr.f32.gmra.mrb[0].mxu0 %v1745
      %v1822 = vpop.f32.mrb[0].mxu0
      %v1823 = vadd.f32 %v1417, %v1822
      %v1824 = vpop.f32.mrb[0].mxu0
      %1825 = vmatprep.mubr.f32.mxu0 0.0
      %1826 = vmatmul.mubr.f32.gmra.mrb[0].mxu0 %v1748
      %v1827 = vpop.f32.mrb[0].mxu0
      %v1828 = vadd.f32 %v1418, %v1827
      %v1829 = vpop.f32.mrb[0].mxu0
      %1830 = vmatprep.mubr.f32.mxu0 0.0
      %1831 = vmatmul.mubr.f32.gmra.mrb[0].mxu0 %v1751
      %v1832 = vpop.f32.mrb[0].mxu0
      %v1833 = vadd.f32 %v1419, %v1832
      %v1834 = vpop.f32.mrb[0].mxu0
      %1835 = vmatprep.mubr.f32.mxu0 0.0
      %1836 = vmatmul.mubr.f32.gmra.mrb[0].mxu0 %v1754
      %v1837 = vpop.f32.mrb[0].mxu0
      %v1838 = vadd.f32 %v1420, %v1837
      %v1839 = vpop.f32.mrb[0].mxu0
      %1840 = vdwg.mxu0
      %v1841 = vxor.u32 %v1823, 2147483648
      %v1842 = vxor.u32 %v1828, 2147483648
      %v1843 = vxor.u32 %v1833, 2147483648
      %v1844 = vxor.u32 %v1838, 2147483648
      %v1845 = vmul.f32 %v1841, 1.442695
      %v1846 = vpow.pop %v1845
      %v1847 = vmul.f32 %v1842, 1.442695
      %v1848 = vpow.pop %v1847
      %v1849 = vmul.f32 %v1843, 1.442695
      %v1850 = vpow.pop %v1849
      %v1851 = vmul.f32 %v1844, 1.442695
      %v1852 = vpow.pop %v1851
      %v1853 = vadd.f32 %v1846, 1.0
      %v1854 = vadd.f32 %v1848, 1.0
      %v1855 = vadd.f32 %v1850, 1.0
      %v1856 = vadd.f32 %v1852, 1.0
      %v1857 = vrcp.pop %v1853
      %v1858 = vmul.f32 1.0, %v1857
      %v1859 = vrcp.pop %v1854
      %v1860 = vmul.f32 1.0, %v1859
      %v1861 = vrcp.pop %v1855
      %v1862 = vmul.f32 1.0, %v1861
      %v1863 = vrcp.pop %v1856
      %v1864 = vmul.f32 1.0, %v1863
      %1865 = vmatprep.subr.mxu0 0.0
      %1866 = vmatpush1.msra.mxu0 %v203
      %1867 = vmatprep.subr.mxu0 0.0
      %1868 = vmatpush1.msra.mxu0 %v204
      %1869 = vmatprep.subr.mxu0 0.0
      %1870 = vmatpush1.msra.mxu0 %v205
      %1871 = vmatprep.subr.mxu0 0.0
      %1872 = vmatpush1.msra.mxu0 %v206
      %1873 = vmatprep.subr.mxu0 0.0
      %1874 = vmatpush1.msra.mxu0 %v207
      %1875 = vmatprep.subr.mxu0 0.0
      %1876 = vmatpush1.msra.mxu0 %v208
      %1877 = vmatprep.subr.mxu0 0.0
      %1878 = vmatpush1.msra.mxu0 %v209
      %1879 = vmatprep.subr.mxu0 0.0
      %1880 = vmatpush1.msra.mxu0 %v210
      %1881 = vmatprep.subr.mxu0 0.0
      %1882 = vmatpush1.msra.mxu0 %v211
      %1883 = vmatprep.subr.mxu0 0.0
      %1884 = vmatpush1.msra.mxu0 %v212
      %1885 = vmatprep.subr.mxu0 0.0
      %1886 = vmatpush1.msra.mxu0 %v213
      %1887 = vmatprep.subr.mxu0 0.0
      %1888 = vmatpush1.msra.mxu0 %v214
      %1889 = vmatprep.subr.mxu0 0.0
      %1890 = vmatpush1.msra.mxu0 %v215
      %1891 = vmatprep.subr.mxu0 0.0
      %1892 = vmatpush1.msra.mxu0 %v216
      %1893 = vmatprep.subr.mxu0 0.0
      %1894 = vmatpush1.msra.mxu0 %v217
      %1895 = vmatprep.subr.mxu0 0.0
      %1896 = vmatpush1.msra.mxu0 %v218
      %1897 = vmatprep.subr.mxu0 0.0
      %1898 = vmatpush1.msra.mxu0 0.0
      %1899 = vmatprep.subr.mxu0 0.0
      %1900 = vmatpush1.msra.mxu0 0.0
      %1901 = vmatprep.subr.mxu0 0.0
      %1902 = vmatpush1.msra.mxu0 0.0
      %1903 = vmatprep.subr.mxu0 0.0
      %1904 = vmatpush1.msra.mxu0 0.0
      %1905 = vmatprep.subr.mxu0 0.0
      %1906 = vmatpush1.msra.mxu0 0.0
      %1907 = vmatprep.subr.mxu0 0.0
      %1908 = vmatpush1.msra.mxu0 0.0
      %1909 = vmatprep.subr.mxu0 0.0
      %1910 = vmatpush1.msra.mxu0 0.0
      %1911 = vmatprep.subr.mxu0 0.0
      %1912 = vmatpush1.msra.mxu0 0.0
      %1913 = vmatprep.subr.mxu0 0.0
      %1914 = vmatpush1.msra.mxu0 0.0
      %1915 = vmatprep.subr.mxu0 0.0
      %1916 = vmatpush1.msra.mxu0 0.0
      %1917 = vmatprep.subr.mxu0 0.0
      %1918 = vmatpush1.msra.mxu0 0.0
      %1919 = vmatprep.subr.mxu0 0.0
      %1920 = vmatpush1.msra.mxu0 0.0
      %1921 = vmatprep.subr.mxu0 0.0
      %1922 = vmatpush1.msra.mxu0 0.0
      %1923 = vmatprep.subr.mxu0 0.0
      %1924 = vmatpush1.msra.mxu0 0.0
      %1925 = vmatprep.subr.mxu0 0.0
      %1926 = vmatpush1.msra.mxu0 0.0
      %1927 = vmatprep.subr.mxu0 0.0
      %1928 = vmatpush1.msra.mxu0 0.0
      %1929 = vmatprep.mubr.f32.mxu0 0.0
      %1930 = vmatmul.mubr.f32.gmra.mrb[0].mxu0 %v1858
      %v1931 = vpop.f32.mrb[0].mxu0
      %v1932 = vadd.f32 0.0, %v1931
      %v1933 = vpop.f32.mrb[0].mxu0
      %1934 = vmatprep.mubr.f32.mxu0 0.0
      %1935 = vmatmul.mubr.f32.gmra.mrb[0].mxu0 %v1860
      %v1936 = vpop.f32.mrb[0].mxu0
      %v1937 = vadd.f32 0.0, %v1936
      %v1938 = vpop.f32.mrb[0].mxu0
      %1939 = vdwg.mxu0
      %1940 = vmatprep.subr.mxu0 0.0
      %1941 = vmatpush1.msra.mxu0 %v219
      %1942 = vmatprep.subr.mxu0 0.0
      %1943 = vmatpush1.msra.mxu0 %v220
      %1944 = vmatprep.subr.mxu0 0.0
      %1945 = vmatpush1.msra.mxu0 %v221
      %1946 = vmatprep.subr.mxu0 0.0
      %1947 = vmatpush1.msra.mxu0 %v222
      %1948 = vmatprep.subr.mxu0 0.0
      %1949 = vmatpush1.msra.mxu0 %v223
      %1950 = vmatprep.subr.mxu0 0.0
      %1951 = vmatpush1.msra.mxu0 %v224
      %1952 = vmatprep.subr.mxu0 0.0
      %1953 = vmatpush1.msra.mxu0 %v225
      %1954 = vmatprep.subr.mxu0 0.0
      %1955 = vmatpush1.msra.mxu0 %v226
      %1956 = vmatprep.subr.mxu0 0.0
      %1957 = vmatpush1.msra.mxu0 %v227
      %1958 = vmatprep.subr.mxu0 0.0
      %1959 = vmatpush1.msra.mxu0 %v228
      %1960 = vmatprep.subr.mxu0 0.0
      %1961 = vmatpush1.msra.mxu0 %v229
      %1962 = vmatprep.subr.mxu0 0.0
      %1963 = vmatpush1.msra.mxu0 %v230
      %1964 = vmatprep.subr.mxu0 0.0
      %1965 = vmatpush1.msra.mxu0 %v231
      %1966 = vmatprep.subr.mxu0 0.0
      %1967 = vmatpush1.msra.mxu0 %v232
      %1968 = vmatprep.subr.mxu0 0.0
      %1969 = vmatpush1.msra.mxu0 %v233
      %1970 = vmatprep.subr.mxu0 0.0
      %1971 = vmatpush1.msra.mxu0 %v234
      %1972 = vmatprep.subr.mxu0 0.0
      %1973 = vmatpush1.msra.mxu0 0.0
      %1974 = vmatprep.subr.mxu0 0.0
      %1975 = vmatpush1.msra.mxu0 0.0
      %1976 = vmatprep.subr.mxu0 0.0
      %1977 = vmatpush1.msra.mxu0 0.0
      %1978 = vmatprep.subr.mxu0 0.0
      %1979 = vmatpush1.msra.mxu0 0.0
      %1980 = vmatprep.subr.mxu0 0.0
      %1981 = vmatpush1.msra.mxu0 0.0
      %1982 = vmatprep.subr.mxu0 0.0
      %1983 = vmatpush1.msra.mxu0 0.0
      %1984 = vmatprep.subr.mxu0 0.0
      %1985 = vmatpush1.msra.mxu0 0.0
      %1986 = vmatprep.subr.mxu0 0.0
      %1987 = vmatpush1.msra.mxu0 0.0
      %1988 = vmatprep.subr.mxu0 0.0
      %1989 = vmatpush1.msra.mxu0 0.0
      %1990 = vmatprep.subr.mxu0 0.0
      %1991 = vmatpush1.msra.mxu0 0.0
      %1992 = vmatprep.subr.mxu0 0.0
      %1993 = vmatpush1.msra.mxu0 0.0
      %1994 = vmatprep.subr.mxu0 0.0
      %1995 = vmatpush1.msra.mxu0 0.0
      %1996 = vmatprep.subr.mxu0 0.0
      %1997 = vmatpush1.msra.mxu0 0.0
      %1998 = vmatprep.subr.mxu0 0.0
      %1999 = vmatpush1.msra.mxu0 0.0
      %2000 = vmatprep.subr.mxu0 0.0
      %2001 = vmatpush1.msra.mxu0 0.0
      %2002 = vmatprep.subr.mxu0 0.0
      %2003 = vmatpush1.msra.mxu0 0.0
      %2004 = vmatprep.mubr.f32.mxu0 0.0
      %2005 = vmatmul.mubr.f32.gmra.mrb[0].mxu0 %v1862
      %v2006 = vpop.f32.mrb[0].mxu0
      %v2007 = vadd.f32 0.0, %v2006
      %v2008 = vpop.f32.mrb[0].mxu0
      %2009 = vmatprep.mubr.f32.mxu0 0.0
      %2010 = vmatmul.mubr.f32.gmra.mrb[0].mxu0 %v1864
      %v2011 = vpop.f32.mrb[0].mxu0
      %v2012 = vadd.f32 0.0, %v2011
      %v2013 = vpop.f32.mrb[0].mxu0
      %2014 = vdwg.mxu0
      %v2015 = vmul.f32 %v1589, %v1932
      %v2016 = vmul.f32 %v1590, %v1937
      %v2017 = vmul.f32 %v2015, %v2007
      %v2018 = vmul.f32 %v2016, %v2012
      %v2019 = vadd.f32 %v1407, %v2017
      %v2020 = vadd.f32 %v1408, %v2018
      %v2021 = vld [vmem:[%s2 + $0x2e0] sm:$0x1]
      %v2022 = vld [vmem:[%s2 + $0x2e8] sm:$0x1]
      %v2023 = vld [vmem:[%s2 + $0x3f0] sm:$0x3]
      %v2024 = vld [vmem:[%s2 + $0x4f8] sm:$0x1]
      %2025 = vmatprep.subr.mxu0 0.0
      %2026 = vmatpush1.msra.mxu0 %v171
      %2027 = vmatprep.subr.mxu0 0.0
      %2028 = vmatpush1.msra.mxu0 %v172
      %2029 = vmatprep.subr.mxu0 0.0
      %2030 = vmatpush1.msra.mxu0 %v173
      %2031 = vmatprep.subr.mxu0 0.0
      %2032 = vmatpush1.msra.mxu0 %v174
      %2033 = vmatprep.subr.mxu0 0.0
      %2034 = vmatpush1.msra.mxu0 %v175
      %2035 = vmatprep.subr.mxu0 0.0
      %2036 = vmatpush1.msra.mxu0 %v176
      %2037 = vmatprep.subr.mxu0 0.0
      %2038 = vmatpush1.msra.mxu0 %v177
      %2039 = vmatprep.subr.mxu0 0.0
      %2040 = vmatpush1.msra.mxu0 %v178
      %2041 = vmatprep.subr.mxu0 0.0
      %2042 = vmatpush1.msra.mxu0 %v179
      %2043 = vmatprep.subr.mxu0 0.0
      %2044 = vmatpush1.msra.mxu0 %v180
      %2045 = vmatprep.subr.mxu0 0.0
      %2046 = vmatpush1.msra.mxu0 %v181
      %2047 = vmatprep.subr.mxu0 0.0
      %2048 = vmatpush1.msra.mxu0 %v182
      %2049 = vmatprep.subr.mxu0 0.0
      %2050 = vmatpush1.msra.mxu0 %v183
      %2051 = vmatprep.subr.mxu0 0.0
      %2052 = vmatpush1.msra.mxu0 %v184
      %2053 = vmatprep.subr.mxu0 0.0
      %2054 = vmatpush1.msra.mxu0 %v185
      %2055 = vmatprep.subr.mxu0 0.0
      %2056 = vmatpush1.msra.mxu0 %v186
      %2057 = vmatprep.subr.mxu0 0.0
      %2058 = vmatpush1.msra.mxu0 0.0
      %2059 = vmatprep.subr.mxu0 0.0
      %2060 = vmatpush1.msra.mxu0 0.0
      %2061 = vmatprep.subr.mxu0 0.0
      %2062 = vmatpush1.msra.mxu0 0.0
      %2063 = vmatprep.subr.mxu0 0.0
      %2064 = vmatpush1.msra.mxu0 0.0
      %2065 = vmatprep.subr.mxu0 0.0
      %2066 = vmatpush1.msra.mxu0 0.0
      %2067 = vmatprep.subr.mxu0 0.0
      %2068 = vmatpush1.msra.mxu0 0.0
      %2069 = vmatprep.subr.mxu0 0.0
      %2070 = vmatpush1.msra.mxu0 0.0
      %2071 = vmatprep.subr.mxu0 0.0
      %2072 = vmatpush1.msra.mxu0 0.0
      %2073 = vmatprep.subr.mxu0 0.0
      %2074 = vmatpush1.msra.mxu0 0.0
      %2075 = vmatprep.subr.mxu0 0.0
      %2076 = vmatpush1.msra.mxu0 0.0
      %2077 = vmatprep.subr.mxu0 0.0
      %2078 = vmatpush1.msra.mxu0 0.0
      %2079 = vmatprep.subr.mxu0 0.0
      %2080 = vmatpush1.msra.mxu0 0.0
      %2081 = vmatprep.subr.mxu0 0.0
      %2082 = vmatpush1.msra.mxu0 0.0
      %2083 = vmatprep.subr.mxu0 0.0
      %2084 = vmatpush1.msra.mxu0 0.0
      %2085 = vmatprep.subr.mxu0 0.0
      %2086 = vmatpush1.msra.mxu0 0.0
      %2087 = vmatprep.subr.mxu0 0.0
      %2088 = vmatpush1.msra.mxu0 0.0
      %2089 = vmatprep.mubr.f32.mxu0 0.0
      %2090 = vmatmul.mubr.f32.gmra.mrb[0].mxu0 %v2019
      %v2091 = vpop.f32.mrb[0].mxu0
      %v2092 = vadd.f32 0.0, %v2091
      %v2093 = vpop.f32.mrb[0].mxu0
      %2094 = vmatprep.mubr.f32.mxu0 0.0
      %2095 = vmatmul.mubr.f32.gmra.mrb[0].mxu0 %v2020
      %v2096 = vpop.f32.mrb[0].mxu0
      %v2097 = vadd.f32 0.0, %v2096
      %v2098 = vpop.f32.mrb[0].mxu0
      %2099 = vdwg.mxu0
      %v2100 = vsub.f32 %v2019, %v2092
      %v2101 = vsub.f32 %v2020, %v2097
      %v2102 = vmul.f32 %v2100, %v2100
      %v2103 = vmul.f32 %v2101, %v2101
      %2104 = vmatprep.subr.mxu0 0.0
      %2105 = vmatpush1.msra.mxu0 %v171
      %2106 = vmatprep.subr.mxu0 0.0
      %2107 = vmatpush1.msra.mxu0 %v172
      %2108 = vmatprep.subr.mxu0 0.0
      %2109 = vmatpush1.msra.mxu0 %v173
      %2110 = vmatprep.subr.mxu0 0.0
      %2111 = vmatpush1.msra.mxu0 %v174
      %2112 = vmatprep.subr.mxu0 0.0
      %2113 = vmatpush1.msra.mxu0 %v175
      %2114 = vmatprep.subr.mxu0 0.0
      %2115 = vmatpush1.msra.mxu0 %v176
      %2116 = vmatprep.subr.mxu0 0.0
      %2117 = vmatpush1.msra.mxu0 %v177
      %2118 = vmatprep.subr.mxu0 0.0
      %2119 = vmatpush1.msra.mxu0 %v178
      %2120 = vmatprep.subr.mxu0 0.0
      %2121 = vmatpush1.msra.mxu0 %v179
      %2122 = vmatprep.subr.mxu0 0.0
      %2123 = vmatpush1.msra.mxu0 %v180
      %2124 = vmatprep.subr.mxu0 0.0
      %2125 = vmatpush1.msra.mxu0 %v181
      %2126 = vmatprep.subr.mxu0 0.0
      %2127 = vmatpush1.msra.mxu0 %v182
      %2128 = vmatprep.subr.mxu0 0.0
      %2129 = vmatpush1.msra.mxu0 %v183
      %2130 = vmatprep.subr.mxu0 0.0
      %2131 = vmatpush1.msra.mxu0 %v184
      %2132 = vmatprep.subr.mxu0 0.0
      %2133 = vmatpush1.msra.mxu0 %v185
      %2134 = vmatprep.subr.mxu0 0.0
      %2135 = vmatpush1.msra.mxu0 %v186
      %2136 = vmatprep.subr.mxu0 0.0
      %2137 = vmatpush1.msra.mxu0 0.0
      %2138 = vmatprep.subr.mxu0 0.0
      %2139 = vmatpush1.msra.mxu0 0.0
      %2140 = vmatprep.subr.mxu0 0.0
      %2141 = vmatpush1.msra.mxu0 0.0
      %2142 = vmatprep.subr.mxu0 0.0
      %2143 = vmatpush1.msra.mxu0 0.0
      %2144 = vmatprep.subr.mxu0 0.0
      %2145 = vmatpush1.msra.mxu0 0.0
      %2146 = vmatprep.subr.mxu0 0.0
      %2147 = vmatpush1.msra.mxu0 0.0
      %2148 = vmatprep.subr.mxu0 0.0
      %2149 = vmatpush1.msra.mxu0 0.0
      %2150 = vmatprep.subr.mxu0 0.0
      %2151 = vmatpush1.msra.mxu0 0.0
      %2152 = vmatprep.subr.mxu0 0.0
      %2153 = vmatpush1.msra.mxu0 0.0
      %2154 = vmatprep.subr.mxu0 0.0
      %2155 = vmatpush1.msra.mxu0 0.0
      %2156 = vmatprep.subr.mxu0 0.0
      %2157 = vmatpush1.msra.mxu0 0.0
      %2158 = vmatprep.subr.mxu0 0.0
      %2159 = vmatpush1.msra.mxu0 0.0
      %2160 = vmatprep.subr.mxu0 0.0
      %2161 = vmatpush1.msra.mxu0 0.0
      %2162 = vmatprep.subr.mxu0 0.0
      %2163 = vmatpush1.msra.mxu0 0.0
      %2164 = vmatprep.subr.mxu0 0.0
      %2165 = vmatpush1.msra.mxu0 0.0
      %2166 = vmatprep.subr.mxu0 0.0
      %2167 = vmatpush1.msra.mxu0 0.0
      %2168 = vmatprep.mubr.f32.mxu0 0.0
      %2169 = vmatmul.mubr.f32.gmra.mrb[0].mxu0 %v2102
      %v2170 = vpop.f32.mrb[0].mxu0
      %v2171 = vadd.f32 1e-05, %v2170
      %v2172 = vpop.f32.mrb[0].mxu0
      %2173 = vmatprep.mubr.f32.mxu0 0.0
      %2174 = vmatmul.mubr.f32.gmra.mrb[0].mxu0 %v2103
      %v2175 = vpop.f32.mrb[0].mxu0
      %v2176 = vadd.f32 1e-05, %v2175
      %v2177 = vpop.f32.mrb[0].mxu0
      %2178 = vdwg.mxu0
      %v2179 = vrsqrt.pop %v2171
      %v2180 = vrsqrt.pop %v2176
      %v2181 = vmul.f32 %v2100, %v2179
      %v2182 = vmul.f32 %v2101, %v2180
      %v2183 = vlaneseq
      %v2184 = vshrl.u32 %v2183, 7
      %v2185 = vsub.s32 0, %v2184
      %v2186 = vrot.slane %v2021, %v2185
      %v2187 = vmul.f32 %v2181, %v2186
      %v2188 = vmul.f32 %v2182, %v2186
      %v2189 = vlaneseq
      %v2190 = vshrl.u32 %v2189, 7
      %v2191 = vsub.s32 0, %v2190
      %v2192 = vrot.slane %v2022, %v2191
      %v2193 = vadd.f32 %v2187, %v2192
      %v2194 = vadd.f32 %v2188, %v2192
      %v2195 = vld [vmem:[%s2 + $0x2f0] sm:$0xff]
      %v2196 = vld [vmem:[%s2 + $0x2f8] sm:$0xff]
      %v2197 = vld [vmem:[%s2 + $0x300] sm:$0xff]
      %v2198 = vld [vmem:[%s2 + $0x308] sm:$0xff]
      %v2199 = vld [vmem:[%s2 + $0x310] sm:$0xff]
      %v2200 = vld [vmem:[%s2 + $0x318] sm:$0xff]
      %v2201 = vld [vmem:[%s2 + $0x320] sm:$0xff]
      %v2202 = vld [vmem:[%s2 + $0x328] sm:$0xff]
      %v2203 = vld [vmem:[%s2 + $0x330] sm:$0xff]
      %v2204 = vld [vmem:[%s2 + $0x338] sm:$0xff]
      %v2205 = vld [vmem:[%s2 + $0x340] sm:$0xff]
      %v2206 = vld [vmem:[%s2 + $0x348] sm:$0xff]
      %v2207 = vld [vmem:[%s2 + $0x350] sm:$0xff]
      %v2208 = vld [vmem:[%s2 + $0x358] sm:$0xff]
      %v2209 = vld [vmem:[%s2 + $0x360] sm:$0xff]
      %v2210 = vld [vmem:[%s2 + $0x368] sm:$0xff]
      %v2211 = vld [vmem:[%s2 + $0x3f8] sm:$0xff]
      %v2212 = vld [vmem:[%s2 + $0x400] sm:$0xff]
      %v2213 = vld [vmem:[%s2 + $0x408] sm:$0xff]
      %v2214 = vld [vmem:[%s2 + $0x410] sm:$0xff]
      %v2215 = vld [vmem:[%s2 + $0x418] sm:$0xff]
      %v2216 = vld [vmem:[%s2 + $0x420] sm:$0xff]
      %v2217 = vld [vmem:[%s2 + $0x428] sm:$0xff]
      %v2218 = vld [vmem:[%s2 + $0x430] sm:$0xff]
      %v2219 = vld [vmem:[%s2 + $0x438] sm:$0xff]
      %v2220 = vld [vmem:[%s2 + $0x440] sm:$0xff]
      %v2221 = vld [vmem:[%s2 + $0x448] sm:$0xff]
      %v2222 = vld [vmem:[%s2 + $0x450] sm:$0xff]
      %v2223 = vld [vmem:[%s2 + $0x458] sm:$0xff]
      %v2224 = vld [vmem:[%s2 + $0x460] sm:$0xff]
      %v2225 = vld [vmem:[%s2 + $0x468] sm:$0xff]
      %v2226 = vld [vmem:[%s2 + $0x470] sm:$0xff]
      %v2227 = vlaneseq
      %v2228 = vshrl.u32 %v2227, 7
      %v2229 = vsub.s32 0, %v2228
      %v2230 = vrot.slane %v2023, %v2229
      %2231 = vmatprep.subr.mxu0 0.0
      %2232 = vmatpush1.msra.mxu0 %v2195
      %2233 = vmatprep.subr.mxu0 0.0
      %2234 = vmatpush1.msra.mxu0 %v2196
      %2235 = vmatprep.subr.mxu0 0.0
      %2236 = vmatpush1.msra.mxu0 %v2197
      %2237 = vmatprep.subr.mxu0 0.0
      %2238 = vmatpush1.msra.mxu0 %v2198
      %2239 = vmatprep.subr.mxu0 0.0
      %2240 = vmatpush1.msra.mxu0 %v2199
      %2241 = vmatprep.subr.mxu0 0.0
      %2242 = vmatpush1.msra.mxu0 %v2200
      %2243 = vmatprep.subr.mxu0 0.0
      %2244 = vmatpush1.msra.mxu0 %v2201
      %2245 = vmatprep.subr.mxu0 0.0
      %2246 = vmatpush1.msra.mxu0 %v2202
      %2247 = vmatprep.subr.mxu0 0.0
      %2248 = vmatpush1.msra.mxu0 %v2203
      %2249 = vmatprep.subr.mxu0 0.0
      %2250 = vmatpush1.msra.mxu0 %v2204
      %2251 = vmatprep.subr.mxu0 0.0
      %2252 = vmatpush1.msra.mxu0 %v2205
      %2253 = vmatprep.subr.mxu0 0.0
      %2254 = vmatpush1.msra.mxu0 %v2206
      %2255 = vmatprep.subr.mxu0 0.0
      %2256 = vmatpush1.msra.mxu0 %v2207
      %2257 = vmatprep.subr.mxu0 0.0
      %2258 = vmatpush1.msra.mxu0 %v2208
      %2259 = vmatprep.subr.mxu0 0.0
      %2260 = vmatpush1.msra.mxu0 %v2209
      %2261 = vmatprep.subr.mxu0 0.0
      %2262 = vmatpush1.msra.mxu0 %v2210
      %2263 = vmatprep.subr.mxu0 0.0
      %2264 = vmatpush1.msra.mxu0 0.0
      %2265 = vmatprep.subr.mxu0 0.0
      %2266 = vmatpush1.msra.mxu0 0.0
      %2267 = vmatprep.subr.mxu0 0.0
      %2268 = vmatpush1.msra.mxu0 0.0
      %2269 = vmatprep.subr.mxu0 0.0
      %2270 = vmatpush1.msra.mxu0 0.0
      %2271 = vmatprep.subr.mxu0 0.0
      %2272 = vmatpush1.msra.mxu0 0.0
      %2273 = vmatprep.subr.mxu0 0.0
      %2274 = vmatpush1.msra.mxu0 0.0
      %2275 = vmatprep.subr.mxu0 0.0
      %2276 = vmatpush1.msra.mxu0 0.0
      %2277 = vmatprep.subr.mxu0 0.0
      %2278 = vmatpush1.msra.mxu0 0.0
      %2279 = vmatprep.subr.mxu0 0.0
      %2280 = vmatpush1.msra.mxu0 0.0
      %2281 = vmatprep.subr.mxu0 0.0
      %2282 = vmatpush1.msra.mxu0 0.0
      %2283 = vmatprep.subr.mxu0 0.0
      %2284 = vmatpush1.msra.mxu0 0.0
      %2285 = vmatprep.subr.mxu0 0.0
      %2286 = vmatpush1.msra.mxu0 0.0
      %2287 = vmatprep.subr.mxu0 0.0
      %2288 = vmatpush1.msra.mxu0 0.0
      %2289 = vmatprep.subr.mxu0 0.0
      %2290 = vmatpush1.msra.mxu0 0.0
      %2291 = vmatprep.subr.mxu0 0.0
      %2292 = vmatpush1.msra.mxu0 0.0
      %2293 = vmatprep.subr.mxu0 0.0
      %2294 = vmatpush1.msra.mxu0 0.0
      %2295 = vmatprep.mubr.f32.mxu0 0.0
      %2296 = vmatmul.mubr.f32.gmra.mrb[0].mxu0 %v2193
      %v2297 = vpop.f32.mrb[0].mxu0
      %v2298 = vadd.f32 %v2230, %v2297
      %v2299 = vpop.f32.mrb[0].mxu0
      %2300 = vmatprep.mubr.f32.mxu0 0.0
      %2301 = vmatmul.mubr.f32.gmra.mrb[0].mxu0 %v2194
      %v2302 = vpop.f32.mrb[0].mxu0
      %v2303 = vadd.f32 %v2230, %v2302
      %v2304 = vpop.f32.mrb[0].mxu0
      %2305 = vdwg.mxu0
      %v2306 = vmax.f32 %v2298, 0.0
      %v2307 = vmax.f32 %v2303, 0.0
      %v2308 = vld [vmem:[%s2 + $0x370] sm:$0xff]
      %v2309 = vld [vmem:[%s2 + $0x378] sm:$0xff]
      %v2310 = vld [vmem:[%s2 + $0x380] sm:$0xff]
      %v2311 = vld [vmem:[%s2 + $0x388] sm:$0xff]
      %v2312 = vld [vmem:[%s2 + $0x390] sm:$0xff]
      %v2313 = vld [vmem:[%s2 + $0x398] sm:$0xff]
      %v2314 = vld [vmem:[%s2 + $0x3a0] sm:$0xff]
      %v2315 = vld [vmem:[%s2 + $0x3a8] sm:$0xff]
      %v2316 = vld [vmem:[%s2 + $0x3b0] sm:$0xff]
      %v2317 = vld [vmem:[%s2 + $0x3b8] sm:$0xff]
      %v2318 = vld [vmem:[%s2 + $0x3c0] sm:$0xff]
      %v2319 = vld [vmem:[%s2 + $0x3c8] sm:$0xff]
      %v2320 = vld [vmem:[%s2 + $0x3d0] sm:$0xff]
      %v2321 = vld [vmem:[%s2 + $0x3d8] sm:$0xff]
      %v2322 = vld [vmem:[%s2 + $0x3e0] sm:$0xff]
      %v2323 = vld [vmem:[%s2 + $0x3e8] sm:$0xff]
      %v2324 = vld [vmem:[%s2 + $0x478] sm:$0xff]
      %v2325 = vld [vmem:[%s2 + $0x480] sm:$0xff]
      %v2326 = vld [vmem:[%s2 + $0x488] sm:$0xff]
      %v2327 = vld [vmem:[%s2 + $0x490] sm:$0xff]
      %v2328 = vld [vmem:[%s2 + $0x498] sm:$0xff]
      %v2329 = vld [vmem:[%s2 + $0x4a0] sm:$0xff]
      %v2330 = vld [vmem:[%s2 + $0x4a8] sm:$0xff]
      %v2331 = vld [vmem:[%s2 + $0x4b0] sm:$0xff]
      %v2332 = vld [vmem:[%s2 + $0x4b8] sm:$0xff]
      %v2333 = vld [vmem:[%s2 + $0x4c0] sm:$0xff]
      %v2334 = vld [vmem:[%s2 + $0x4c8] sm:$0xff]
      %v2335 = vld [vmem:[%s2 + $0x4d0] sm:$0xff]
      %v2336 = vld [vmem:[%s2 + $0x4d8] sm:$0xff]
      %v2337 = vld [vmem:[%s2 + $0x4e0] sm:$0xff]
      %v2338 = vld [vmem:[%s2 + $0x4e8] sm:$0xff]
      %v2339 = vld [vmem:[%s2 + $0x4f0] sm:$0xff]
      %v2340 = vlaneseq
      %v2341 = vshrl.u32 %v2340, 7
      %v2342 = vsub.s32 1, %v2341
      %v2343 = vrot.slane %v2023, %v2342
      %2344 = vmatprep.subr.mxu0 0.0
      %2345 = vmatpush1.msra.mxu0 %v2308
      %2346 = vmatprep.subr.mxu0 0.0
      %2347 = vmatpush1.msra.mxu0 %v2309
      %2348 = vmatprep.subr.mxu0 0.0
      %2349 = vmatpush1.msra.mxu0 %v2310
      %2350 = vmatprep.subr.mxu0 0.0
      %2351 = vmatpush1.msra.mxu0 %v2311
      %2352 = vmatprep.subr.mxu0 0.0
      %2353 = vmatpush1.msra.mxu0 %v2312
      %2354 = vmatprep.subr.mxu0 0.0
      %2355 = vmatpush1.msra.mxu0 %v2313
      %2356 = vmatprep.subr.mxu0 0.0
      %2357 = vmatpush1.msra.mxu0 %v2314
      %2358 = vmatprep.subr.mxu0 0.0
      %2359 = vmatpush1.msra.mxu0 %v2315
      %2360 = vmatprep.subr.mxu0 0.0
      %2361 = vmatpush1.msra.mxu0 %v2316
      %2362 = vmatprep.subr.mxu0 0.0
      %2363 = vmatpush1.msra.mxu0 %v2317
      %2364 = vmatprep.subr.mxu0 0.0
      %2365 = vmatpush1.msra.mxu0 %v2318
      %2366 = vmatprep.subr.mxu0 0.0
      %2367 = vmatpush1.msra.mxu0 %v2319
      %2368 = vmatprep.subr.mxu0 0.0
      %2369 = vmatpush1.msra.mxu0 %v2320
      %2370 = vmatprep.subr.mxu0 0.0
      %2371 = vmatpush1.msra.mxu0 %v2321
      %2372 = vmatprep.subr.mxu0 0.0
      %2373 = vmatpush1.msra.mxu0 %v2322
      %2374 = vmatprep.subr.mxu0 0.0
      %2375 = vmatpush1.msra.mxu0 %v2323
      %2376 = vmatprep.subr.mxu0 0.0
      %2377 = vmatpush1.msra.mxu0 0.0
      %2378 = vmatprep.subr.mxu0 0.0
      %2379 = vmatpush1.msra.mxu0 0.0
      %2380 = vmatprep.subr.mxu0 0.0
      %2381 = vmatpush1.msra.mxu0 0.0
      %2382 = vmatprep.subr.mxu0 0.0
      %2383 = vmatpush1.msra.mxu0 0.0
      %2384 = vmatprep.subr.mxu0 0.0
      %2385 = vmatpush1.msra.mxu0 0.0
      %2386 = vmatprep.subr.mxu0 0.0
      %2387 = vmatpush1.msra.mxu0 0.0
      %2388 = vmatprep.subr.mxu0 0.0
      %2389 = vmatpush1.msra.mxu0 0.0
      %2390 = vmatprep.subr.mxu0 0.0
      %2391 = vmatpush1.msra.mxu0 0.0
      %2392 = vmatprep.subr.mxu0 0.0
      %2393 = vmatpush1.msra.mxu0 0.0
      %2394 = vmatprep.subr.mxu0 0.0
      %2395 = vmatpush1.msra.mxu0 0.0
      %2396 = vmatprep.subr.mxu0 0.0
      %2397 = vmatpush1.msra.mxu0 0.0
      %2398 = vmatprep.subr.mxu0 0.0
      %2399 = vmatpush1.msra.mxu0 0.0
      %2400 = vmatprep.subr.mxu0 0.0
      %2401 = vmatpush1.msra.mxu0 0.0
      %2402 = vmatprep.subr.mxu0 0.0
      %2403 = vmatpush1.msra.mxu0 0.0
      %2404 = vmatprep.subr.mxu0 0.0
      %2405 = vmatpush1.msra.mxu0 0.0
      %2406 = vmatprep.subr.mxu0 0.0
      %2407 = vmatpush1.msra.mxu0 0.0
      %2408 = vmatprep.mubr.f32.mxu0 0.0
      %2409 = vmatmul.mubr.f32.gmra.mrb[0].mxu0 %v2193
      %v2410 = vpop.f32.mrb[0].mxu0
      %v2411 = vadd.f32 %v2343, %v2410
      %v2412 = vpop.f32.mrb[0].mxu0
      %2413 = vmatprep.mubr.f32.mxu0 0.0
      %2414 = vmatmul.mubr.f32.gmra.mrb[0].mxu0 %v2194
      %v2415 = vpop.f32.mrb[0].mxu0
      %v2416 = vadd.f32 %v2343, %v2415
      %v2417 = vpop.f32.mrb[0].mxu0
      %2418 = vdwg.mxu0
      %v2419 = vmax.f32 %v2411, 0.0
      %v2420 = vmax.f32 %v2416, 0.0
      %2421 = vmatprep.subr.mxu0 0.0
      %2422 = vmatpush1.msra.mxu0 %v2324
      %2423 = vmatprep.subr.mxu0 0.0
      %2424 = vmatpush1.msra.mxu0 %v2325
      %2425 = vmatprep.subr.mxu0 0.0
      %2426 = vmatpush1.msra.mxu0 %v2326
      %2427 = vmatprep.subr.mxu0 0.0
      %2428 = vmatpush1.msra.mxu0 %v2327
      %2429 = vmatprep.subr.mxu0 0.0
      %2430 = vmatpush1.msra.mxu0 %v2328
      %2431 = vmatprep.subr.mxu0 0.0
      %2432 = vmatpush1.msra.mxu0 %v2329
      %2433 = vmatprep.subr.mxu0 0.0
      %2434 = vmatpush1.msra.mxu0 %v2330
      %2435 = vmatprep.subr.mxu0 0.0
      %2436 = vmatpush1.msra.mxu0 %v2331
      %2437 = vmatprep.subr.mxu0 0.0
      %2438 = vmatpush1.msra.mxu0 %v2332
      %2439 = vmatprep.subr.mxu0 0.0
      %2440 = vmatpush1.msra.mxu0 %v2333
      %2441 = vmatprep.subr.mxu0 0.0
      %2442 = vmatpush1.msra.mxu0 %v2334
      %2443 = vmatprep.subr.mxu0 0.0
      %2444 = vmatpush1.msra.mxu0 %v2335
      %2445 = vmatprep.subr.mxu0 0.0
      %2446 = vmatpush1.msra.mxu0 %v2336
      %2447 = vmatprep.subr.mxu0 0.0
      %2448 = vmatpush1.msra.mxu0 %v2337
      %2449 = vmatprep.subr.mxu0 0.0
      %2450 = vmatpush1.msra.mxu0 %v2338
      %2451 = vmatprep.subr.mxu0 0.0
      %2452 = vmatpush1.msra.mxu0 %v2339
      %2453 = vmatprep.subr.mxu0 0.0
      %2454 = vmatpush1.msra.mxu0 0.0
      %2455 = vmatprep.subr.mxu0 0.0
      %2456 = vmatpush1.msra.mxu0 0.0
      %2457 = vmatprep.subr.mxu0 0.0
      %2458 = vmatpush1.msra.mxu0 0.0
      %2459 = vmatprep.subr.mxu0 0.0
      %2460 = vmatpush1.msra.mxu0 0.0
      %2461 = vmatprep.subr.mxu0 0.0
      %2462 = vmatpush1.msra.mxu0 0.0
      %2463 = vmatprep.subr.mxu0 0.0
      %2464 = vmatpush1.msra.mxu0 0.0
      %2465 = vmatprep.subr.mxu0 0.0
      %2466 = vmatpush1.msra.mxu0 0.0
      %2467 = vmatprep.subr.mxu0 0.0
      %2468 = vmatpush1.msra.mxu0 0.0
      %2469 = vmatprep.subr.mxu0 0.0
      %2470 = vmatpush1.msra.mxu0 0.0
      %2471 = vmatprep.subr.mxu0 0.0
      %2472 = vmatpush1.msra.mxu0 0.0
      %2473 = vmatprep.subr.mxu0 0.0
      %2474 = vmatpush1.msra.mxu0 0.0
      %2475 = vmatprep.subr.mxu0 0.0
      %2476 = vmatpush1.msra.mxu0 0.0
      %2477 = vmatprep.subr.mxu0 0.0
      %2478 = vmatpush1.msra.mxu0 0.0
      %2479 = vmatprep.subr.mxu0 0.0
      %2480 = vmatpush1.msra.mxu0 0.0
      %2481 = vmatprep.subr.mxu0 0.0
      %2482 = vmatpush1.msra.mxu0 0.0
      %2483 = vmatprep.subr.mxu0 0.0
      %2484 = vmatpush1.msra.mxu0 0.0
      %2485 = vmatprep.mubr.f32.mxu0 0.0
      %2486 = vmatmul.mubr.f32.gmra.mrb[0].mxu0 %v2419
      %v2487 = vpop.f32.mrb[0].mxu0
      %v2488 = vadd.f32 0.0, %v2487
      %v2489 = vpop.f32.mrb[0].mxu0
      %2490 = vmatprep.mubr.f32.mxu0 0.0
      %2491 = vmatmul.mubr.f32.gmra.mrb[0].mxu0 %v2420
      %v2492 = vpop.f32.mrb[0].mxu0
      %v2493 = vadd.f32 0.0, %v2492
      %v2494 = vpop.f32.mrb[0].mxu0
      %2495 = vdwg.mxu0
      %2496 = vmatprep.subr.mxu0 0.0
      %2497 = vmatpush1.msra.mxu0 %v2211
      %2498 = vmatprep.subr.mxu0 0.0
      %2499 = vmatpush1.msra.mxu0 %v2212
      %2500 = vmatprep.subr.mxu0 0.0
      %2501 = vmatpush1.msra.mxu0 %v2213
      %2502 = vmatprep.subr.mxu0 0.0
      %2503 = vmatpush1.msra.mxu0 %v2214
      %2504 = vmatprep.subr.mxu0 0.0
      %2505 = vmatpush1.msra.mxu0 %v2215
      %2506 = vmatprep.subr.mxu0 0.0
      %2507 = vmatpush1.msra.mxu0 %v2216
      %2508 = vmatprep.subr.mxu0 0.0
      %2509 = vmatpush1.msra.mxu0 %v2217
      %2510 = vmatprep.subr.mxu0 0.0
      %2511 = vmatpush1.msra.mxu0 %v2218
      %2512 = vmatprep.subr.mxu0 0.0
      %2513 = vmatpush1.msra.mxu0 %v2219
      %2514 = vmatprep.subr.mxu0 0.0
      %2515 = vmatpush1.msra.mxu0 %v2220
      %2516 = vmatprep.subr.mxu0 0.0
      %2517 = vmatpush1.msra.mxu0 %v2221
      %2518 = vmatprep.subr.mxu0 0.0
      %2519 = vmatpush1.msra.mxu0 %v2222
      %2520 = vmatprep.subr.mxu0 0.0
      %2521 = vmatpush1.msra.mxu0 %v2223
      %2522 = vmatprep.subr.mxu0 0.0
      %2523 = vmatpush1.msra.mxu0 %v2224
      %2524 = vmatprep.subr.mxu0 0.0
      %2525 = vmatpush1.msra.mxu0 %v2225
      %2526 = vmatprep.subr.mxu0 0.0
      %2527 = vmatpush1.msra.mxu0 %v2226
      %2528 = vmatprep.subr.mxu0 0.0
      %2529 = vmatpush1.msra.mxu0 0.0
      %2530 = vmatprep.subr.mxu0 0.0
      %2531 = vmatpush1.msra.mxu0 0.0
      %2532 = vmatprep.subr.mxu0 0.0
      %2533 = vmatpush1.msra.mxu0 0.0
      %2534 = vmatprep.subr.mxu0 0.0
      %2535 = vmatpush1.msra.mxu0 0.0
      %2536 = vmatprep.subr.mxu0 0.0
      %2537 = vmatpush1.msra.mxu0 0.0
      %2538 = vmatprep.subr.mxu0 0.0
      %2539 = vmatpush1.msra.mxu0 0.0
      %2540 = vmatprep.subr.mxu0 0.0
      %2541 = vmatpush1.msra.mxu0 0.0
      %2542 = vmatprep.subr.mxu0 0.0
      %2543 = vmatpush1.msra.mxu0 0.0
      %2544 = vmatprep.subr.mxu0 0.0
      %2545 = vmatpush1.msra.mxu0 0.0
      %2546 = vmatprep.subr.mxu0 0.0
      %2547 = vmatpush1.msra.mxu0 0.0
      %2548 = vmatprep.subr.mxu0 0.0
      %2549 = vmatpush1.msra.mxu0 0.0
      %2550 = vmatprep.subr.mxu0 0.0
      %2551 = vmatpush1.msra.mxu0 0.0
      %2552 = vmatprep.subr.mxu0 0.0
      %2553 = vmatpush1.msra.mxu0 0.0
      %2554 = vmatprep.subr.mxu0 0.0
      %2555 = vmatpush1.msra.mxu0 0.0
      %2556 = vmatprep.subr.mxu0 0.0
      %2557 = vmatpush1.msra.mxu0 0.0
      %2558 = vmatprep.subr.mxu0 0.0
      %2559 = vmatpush1.msra.mxu0 0.0
      %2560 = vmatprep.mubr.f32.mxu0 0.0
      %2561 = vmatmul.mubr.f32.gmra.mrb[0].mxu0 %v2306
      %v2562 = vpop.f32.mrb[0].mxu0
      %v2563 = vadd.f32 %v2488, %v2562
      %v2564 = vpop.f32.mrb[0].mxu0
      %2565 = vmatprep.mubr.f32.mxu0 0.0
      %2566 = vmatmul.mubr.f32.gmra.mrb[0].mxu0 %v2307
      %v2567 = vpop.f32.mrb[0].mxu0
      %v2568 = vadd.f32 %v2493, %v2567
      %v2569 = vpop.f32.mrb[0].mxu0
      %2570 = vdwg.mxu0
      %v2571 = vadd.f32 %v2019, %v2563
      %v2572 = vadd.f32 %v2020, %v2568
      %v2573 = vlaneseq
      %v2574 = vshrl.u32 %v2573, 7
      %v2575 = vsub.s32 0, %v2574
      %v2576 = vrot.slane %v2024, %v2575
      %v2577 = vadd.f32 %v2571, %v2576
      %v2578 = vadd.f32 %v2572, %v2576
      %v2579 = vld [vmem:[%s2 + $0x500] sm:$0x1]
      %v2580 = vld [vmem:[%s2 + $0x508] sm:$0x1]
      %v2581 = vld [vmem:[%s2 + $0x510] sm:$0xff]
      %v2582 = vld [vmem:[%s2 + $0x518] sm:$0xff]
      %v2583 = vld [vmem:[%s2 + $0x520] sm:$0xff]
      %v2584 = vld [vmem:[%s2 + $0x528] sm:$0xff]
      %v2585 = vld [vmem:[%s2 + $0x530] sm:$0xff]
      %v2586 = vld [vmem:[%s2 + $0x538] sm:$0xff]
      %v2587 = vld [vmem:[%s2 + $0x540] sm:$0xff]
      %v2588 = vld [vmem:[%s2 + $0x548] sm:$0xff]
      %v2589 = vld [vmem:[%s2 + $0x550] sm:$0xff]
      %v2590 = vld [vmem:[%s2 + $0x558] sm:$0xff]
      %2591 = vmatprep.subr.mxu0 0.0
      %2592 = vmatpush1.msra.mxu0 %v171
      %2593 = vmatprep.subr.mxu0 0.0
      %2594 = vmatpush1.msra.mxu0 %v172
      %2595 = vmatprep.subr.mxu0 0.0
      %2596 = vmatpush1.msra.mxu0 %v173
      %2597 = vmatprep.subr.mxu0 0.0
      %2598 = vmatpush1.msra.mxu0 %v174
      %2599 = vmatprep.subr.mxu0 0.0
      %2600 = vmatpush1.msra.mxu0 %v175
      %2601 = vmatprep.subr.mxu0 0.0
      %2602 = vmatpush1.msra.mxu0 %v176
      %2603 = vmatprep.subr.mxu0 0.0
      %2604 = vmatpush1.msra.mxu0 %v177
      %2605 = vmatprep.subr.mxu0 0.0
      %2606 = vmatpush1.msra.mxu0 %v178
      %2607 = vmatprep.subr.mxu0 0.0
      %2608 = vmatpush1.msra.mxu0 %v179
      %2609 = vmatprep.subr.mxu0 0.0
      %2610 = vmatpush1.msra.mxu0 %v180
      %2611 = vmatprep.subr.mxu0 0.0
      %2612 = vmatpush1.msra.mxu0 %v181
      %2613 = vmatprep.subr.mxu0 0.0
      %2614 = vmatpush1.msra.mxu0 %v182
      %2615 = vmatprep.subr.mxu0 0.0
      %2616 = vmatpush1.msra.mxu0 %v183
      %2617 = vmatprep.subr.mxu0 0.0
      %2618 = vmatpush1.msra.mxu0 %v184
      %2619 = vmatprep.subr.mxu0 0.0
      %2620 = vmatpush1.msra.mxu0 %v185
      %2621 = vmatprep.subr.mxu0 0.0
      %2622 = vmatpush1.msra.mxu0 %v186
      %2623 = vmatprep.subr.mxu0 0.0
      %2624 = vmatpush1.msra.mxu0 0.0
      %2625 = vmatprep.subr.mxu0 0.0
      %2626 = vmatpush1.msra.mxu0 0.0
      %2627 = vmatprep.subr.mxu0 0.0
      %2628 = vmatpush1.msra.mxu0 0.0
      %2629 = vmatprep.subr.mxu0 0.0
      %2630 = vmatpush1.msra.mxu0 0.0
      %2631 = vmatprep.subr.mxu0 0.0
      %2632 = vmatpush1.msra.mxu0 0.0
      %2633 = vmatprep.subr.mxu0 0.0
      %2634 = vmatpush1.msra.mxu0 0.0
      %2635 = vmatprep.subr.mxu0 0.0
      %2636 = vmatpush1.msra.mxu0 0.0
      %2637 = vmatprep.subr.mxu0 0.0
      %2638 = vmatpush1.msra.mxu0 0.0
      %2639 = vmatprep.subr.mxu0 0.0
      %2640 = vmatpush1.msra.mxu0 0.0
      %2641 = vmatprep.subr.mxu0 0.0
      %2642 = vmatpush1.msra.mxu0 0.0
      %2643 = vmatprep.subr.mxu0 0.0
      %2644 = vmatpush1.msra.mxu0 0.0
      %2645 = vmatprep.subr.mxu0 0.0
      %2646 = vmatpush1.msra.mxu0 0.0
      %2647 = vmatprep.subr.mxu0 0.0
      %2648 = vmatpush1.msra.mxu0 0.0
      %2649 = vmatprep.subr.mxu0 0.0
      %2650 = vmatpush1.msra.mxu0 0.0
      %2651 = vmatprep.subr.mxu0 0.0
      %2652 = vmatpush1.msra.mxu0 0.0
      %2653 = vmatprep.subr.mxu0 0.0
      %2654 = vmatpush1.msra.mxu0 0.0
      %2655 = vmatprep.mubr.f32.mxu0 0.0
      %2656 = vmatmul.mubr.f32.gmra.mrb[0].mxu0 %v2577
      %v2657 = vpop.f32.mrb[0].mxu0
      %v2658 = vadd.f32 0.0, %v2657
      %v2659 = vpop.f32.mrb[0].mxu0
      %2660 = vmatprep.mubr.f32.mxu0 0.0
      %2661 = vmatmul.mubr.f32.gmra.mrb[0].mxu0 %v2578
      %v2662 = vpop.f32.mrb[0].mxu0
      %v2663 = vadd.f32 0.0, %v2662
      %v2664 = vpop.f32.mrb[0].mxu0
      %2665 = vdwg.mxu0
      %v2666 = vsub.f32 %v2577, %v2658
      %v2667 = vsub.f32 %v2578, %v2663
      %v2668 = vmul.f32 %v2666, %v2666
      %v2669 = vmul.f32 %v2667, %v2667
      %2670 = vmatprep.subr.mxu0 0.0
      %2671 = vmatpush1.msra.mxu0 %v171
      %2672 = vmatprep.subr.mxu0 0.0
      %2673 = vmatpush1.msra.mxu0 %v172
      %2674 = vmatprep.subr.mxu0 0.0
      %2675 = vmatpush1.msra.mxu0 %v173
      %2676 = vmatprep.subr.mxu0 0.0
      %2677 = vmatpush1.msra.mxu0 %v174
      %2678 = vmatprep.subr.mxu0 0.0
      %2679 = vmatpush1.msra.mxu0 %v175
      %2680 = vmatprep.subr.mxu0 0.0
      %2681 = vmatpush1.msra.mxu0 %v176
      %2682 = vmatprep.subr.mxu0 0.0
      %2683 = vmatpush1.msra.mxu0 %v177
      %2684 = vmatprep.subr.mxu0 0.0
      %2685 = vmatpush1.msra.mxu0 %v178
      %2686 = vmatprep.subr.mxu0 0.0
      %2687 = vmatpush1.msra.mxu0 %v179
      %2688 = vmatprep.subr.mxu0 0.0
      %2689 = vmatpush1.msra.mxu0 %v180
      %2690 = vmatprep.subr.mxu0 0.0
      %2691 = vmatpush1.msra.mxu0 %v181
      %2692 = vmatprep.subr.mxu0 0.0
      %2693 = vmatpush1.msra.mxu0 %v182
      %2694 = vmatprep.subr.mxu0 0.0
      %2695 = vmatpush1.msra.mxu0 %v183
      %2696 = vmatprep.subr.mxu0 0.0
      %2697 = vmatpush1.msra.mxu0 %v184
      %2698 = vmatprep.subr.mxu0 0.0
      %2699 = vmatpush1.msra.mxu0 %v185
      %2700 = vmatprep.subr.mxu0 0.0
      %2701 = vmatpush1.msra.mxu0 %v186
      %2702 = vmatprep.subr.mxu0 0.0
      %2703 = vmatpush1.msra.mxu0 0.0
      %2704 = vmatprep.subr.mxu0 0.0
      %2705 = vmatpush1.msra.mxu0 0.0
      %2706 = vmatprep.subr.mxu0 0.0
      %2707 = vmatpush1.msra.mxu0 0.0
      %2708 = vmatprep.subr.mxu0 0.0
      %2709 = vmatpush1.msra.mxu0 0.0
      %2710 = vmatprep.subr.mxu0 0.0
      %2711 = vmatpush1.msra.mxu0 0.0
      %2712 = vmatprep.subr.mxu0 0.0
      %2713 = vmatpush1.msra.mxu0 0.0
      %2714 = vmatprep.subr.mxu0 0.0
      %2715 = vmatpush1.msra.mxu0 0.0
      %2716 = vmatprep.subr.mxu0 0.0
      %2717 = vmatpush1.msra.mxu0 0.0
      %2718 = vmatprep.subr.mxu0 0.0
      %2719 = vmatpush1.msra.mxu0 0.0
      %2720 = vmatprep.subr.mxu0 0.0
      %2721 = vmatpush1.msra.mxu0 0.0
      %2722 = vmatprep.subr.mxu0 0.0
      %2723 = vmatpush1.msra.mxu0 0.0
      %2724 = vmatprep.subr.mxu0 0.0
      %2725 = vmatpush1.msra.mxu0 0.0
      %2726 = vmatprep.subr.mxu0 0.0
      %2727 = vmatpush1.msra.mxu0 0.0
      %2728 = vmatprep.subr.mxu0 0.0
      %2729 = vmatpush1.msra.mxu0 0.0
      %2730 = vmatprep.subr.mxu0 0.0
      %2731 = vmatpush1.msra.mxu0 0.0
      %2732 = vmatprep.subr.mxu0 0.0
      %2733 = vmatpush1.msra.mxu0 0.0
      %2734 = vmatprep.mubr.f32.mxu0 0.0
      %2735 = vmatmul.mubr.f32.gmra.mrb[0].mxu0 %v2668
      %v2736 = vpop.f32.mrb[0].mxu0
      %v2737 = vadd.f32 1e-05, %v2736
      %v2738 = vpop.f32.mrb[0].mxu0
      %2739 = vmatprep.mubr.f32.mxu0 0.0
      %2740 = vmatmul.mubr.f32.gmra.mrb[0].mxu0 %v2669
      %v2741 = vpop.f32.mrb[0].mxu0
      %v2742 = vadd.f32 1e-05, %v2741
      %v2743 = vpop.f32.mrb[0].mxu0
      %2744 = vdwg.mxu0
      %v2745 = vrsqrt.pop %v2737
      %v2746 = vrsqrt.pop %v2742
      %v2747 = vmul.f32 %v2666, %v2745
      %v2748 = vmul.f32 %v2667, %v2746
      %v2749 = vlaneseq
      %v2750 = vshrl.u32 %v2749, 7
      %v2751 = vsub.s32 0, %v2750
      %v2752 = vrot.slane %v2579, %v2751
      %v2753 = vmul.f32 %v2747, %v2752
      %v2754 = vmul.f32 %v2748, %v2752
      %v2755 = vlaneseq
      %v2756 = vshrl.u32 %v2755, 7
      %v2757 = vsub.s32 0, %v2756
      %v2758 = vrot.slane %v2580, %v2757
      %v2759 = vadd.f32 %v2753, %v2758
      %v2760 = vadd.f32 %v2754, %v2758
      %2761 = vmatprep.subr.mxu0 0.0
      %2762 = vmatpush1.msra.mxu0 %v187
      %2763 = vmatprep.subr.mxu0 0.0
      %2764 = vmatpush1.msra.mxu0 %v188
      %2765 = vmatprep.subr.mxu0 0.0
      %2766 = vmatpush1.msra.mxu0 %v189
      %2767 = vmatprep.subr.mxu0 0.0
      %2768 = vmatpush1.msra.mxu0 %v190
      %2769 = vmatprep.subr.mxu0 0.0
      %2770 = vmatpush1.msra.mxu0 %v191
      %2771 = vmatprep.subr.mxu0 0.0
      %2772 = vmatpush1.msra.mxu0 %v192
      %2773 = vmatprep.subr.mxu0 0.0
      %2774 = vmatpush1.msra.mxu0 %v193
      %2775 = vmatprep.subr.mxu0 0.0
      %2776 = vmatpush1.msra.mxu0 %v194
      %2777 = vmatprep.subr.mxu0 0.0
      %2778 = vmatpush1.msra.mxu0 %v195
      %2779 = vmatprep.subr.mxu0 0.0
      %2780 = vmatpush1.msra.mxu0 %v196
      %2781 = vmatprep.subr.mxu0 0.0
      %2782 = vmatpush1.msra.mxu0 %v197
      %2783 = vmatprep.subr.mxu0 0.0
      %2784 = vmatpush1.msra.mxu0 %v198
      %2785 = vmatprep.subr.mxu0 0.0
      %2786 = vmatpush1.msra.mxu0 %v199
      %2787 = vmatprep.subr.mxu0 0.0
      %2788 = vmatpush1.msra.mxu0 %v200
      %2789 = vmatprep.subr.mxu0 0.0
      %2790 = vmatpush1.msra.mxu0 %v201
      %2791 = vmatprep.subr.mxu0 0.0
      %2792 = vmatpush1.msra.mxu0 %v202
      %2793 = vmatprep.subr.mxu0 0.0
      %2794 = vmatpush1.msra.mxu0 0.0
      %2795 = vmatprep.subr.mxu0 0.0
      %2796 = vmatpush1.msra.mxu0 0.0
      %2797 = vmatprep.subr.mxu0 0.0
      %2798 = vmatpush1.msra.mxu0 0.0
      %2799 = vmatprep.subr.mxu0 0.0
      %2800 = vmatpush1.msra.mxu0 0.0
      %2801 = vmatprep.subr.mxu0 0.0
      %2802 = vmatpush1.msra.mxu0 0.0
      %2803 = vmatprep.subr.mxu0 0.0
      %2804 = vmatpush1.msra.mxu0 0.0
      %2805 = vmatprep.subr.mxu0 0.0
      %2806 = vmatpush1.msra.mxu0 0.0
      %2807 = vmatprep.subr.mxu0 0.0
      %2808 = vmatpush1.msra.mxu0 0.0
      %2809 = vmatprep.subr.mxu0 0.0
      %2810 = vmatpush1.msra.mxu0 0.0
      %2811 = vmatprep.subr.mxu0 0.0
      %2812 = vmatpush1.msra.mxu0 0.0
      %2813 = vmatprep.subr.mxu0 0.0
      %2814 = vmatpush1.msra.mxu0 0.0
      %2815 = vmatprep.subr.mxu0 0.0
      %2816 = vmatpush1.msra.mxu0 0.0
      %2817 = vmatprep.subr.mxu0 0.0
      %2818 = vmatpush1.msra.mxu0 0.0
      %2819 = vmatprep.subr.mxu0 0.0
      %2820 = vmatpush1.msra.mxu0 0.0
      %2821 = vmatprep.subr.mxu0 0.0
      %2822 = vmatpush1.msra.mxu0 0.0
      %2823 = vmatprep.subr.mxu0 0.0
      %2824 = vmatpush1.msra.mxu0 0.0
      %2825 = vmatprep.mubr.f32.mxu0 0.0
      %2826 = vmatmul.mubr.f32.gmra.mrb[0].mxu0 %v2759
      %v2827 = vpop.f32.mrb[0].mxu0
      %v2828 = vadd.f32 0.0, %v2827
      %v2829 = vpop.f32.mrb[0].mxu0
      %2830 = vmatprep.mubr.f32.mxu0 0.0
      %2831 = vmatmul.mubr.f32.gmra.mrb[0].mxu0 %v2760
      %v2832 = vpop.f32.mrb[0].mxu0
      %v2833 = vadd.f32 0.0, %v2832
      %v2834 = vpop.f32.mrb[0].mxu0
      %2835 = vdwg.mxu0
      %v2837 = vsel %vm494, %v2581, 0
      %2839 = vmatprep.subr.mxu0 0.0
      %2840 = vmatpush1.msra.mxu0 %v2828
      %2841 = vmatprep.subr.mxu0 0.0
      %2842 = vmatpush1.msra.mxu0 %v2833
      %2843 = vmatprep.subr.mxu0 0.0
      %2844 = vmatpush1.msra.mxu0 0.0
      %2845 = vmatprep.subr.mxu0 0.0
      %2846 = vmatpush1.msra.mxu0 0.0
      %2847 = vmatprep.subr.mxu0 0.0
      %2848 = vmatpush1.msra.mxu0 0.0
      %2849 = vmatprep.subr.mxu0 0.0
      %2850 = vmatpush1.msra.mxu0 0.0
      %2851 = vmatprep.subr.mxu0 0.0
      %2852 = vmatpush1.msra.mxu0 0.0
      %2853 = vmatprep.subr.mxu0 0.0
      %2854 = vmatpush1.msra.mxu0 0.0
      %2855 = vmatprep.subr.mxu0 0.0
      %2856 = vmatpush1.msra.mxu0 0.0
      %2857 = vmatprep.subr.mxu0 0.0
      %2858 = vmatpush1.msra.mxu0 0.0
      %2859 = vmatprep.subr.mxu0 0.0
      %2860 = vmatpush1.msra.mxu0 0.0
      %2861 = vmatprep.subr.mxu0 0.0
      %2862 = vmatpush1.msra.mxu0 0.0
      %2863 = vmatprep.subr.mxu0 0.0
      %2864 = vmatpush1.msra.mxu0 0.0
      %2865 = vmatprep.subr.mxu0 0.0
      %2866 = vmatpush1.msra.mxu0 0.0
      %2867 = vmatprep.subr.mxu0 0.0
      %2868 = vmatpush1.msra.mxu0 0.0
      %2869 = vmatprep.subr.mxu0 0.0
      %2870 = vmatpush1.msra.mxu0 0.0
      %2871 = vmatprep.subr.mxu0 0.0
      %2872 = vmatpush1.msra.mxu0 0.0
      %2873 = vmatprep.subr.mxu0 0.0
      %2874 = vmatpush1.msra.mxu0 0.0
      %2875 = vmatprep.subr.mxu0 0.0
      %2876 = vmatpush1.msra.mxu0 0.0
      %2877 = vmatprep.subr.mxu0 0.0
      %2878 = vmatpush1.msra.mxu0 0.0
      %2879 = vmatprep.subr.mxu0 0.0
      %2880 = vmatpush1.msra.mxu0 0.0
      %2881 = vmatprep.subr.mxu0 0.0
      %2882 = vmatpush1.msra.mxu0 0.0
      %2883 = vmatprep.subr.mxu0 0.0
      %2884 = vmatpush1.msra.mxu0 0.0
      %2885 = vmatprep.subr.mxu0 0.0
      %2886 = vmatpush1.msra.mxu0 0.0
      %2887 = vmatprep.subr.mxu0 0.0
      %2888 = vmatpush1.msra.mxu0 0.0
      %2889 = vmatprep.subr.mxu0 0.0
      %2890 = vmatpush1.msra.mxu0 0.0
      %2891 = vmatprep.subr.mxu0 0.0
      %2892 = vmatpush1.msra.mxu0 0.0
      %2893 = vmatprep.subr.mxu0 0.0
      %2894 = vmatpush1.msra.mxu0 0.0
      %2895 = vmatprep.subr.mxu0 0.0
      %2896 = vmatpush1.msra.mxu0 0.0
      %2897 = vmatprep.subr.mxu0 0.0
      %2898 = vmatpush1.msra.mxu0 0.0
      %2899 = vmatprep.subr.mxu0 0.0
      %2900 = vmatpush1.msra.mxu0 0.0
      %2901 = vmatprep.subr.mxu0 0.0
      %2902 = vmatpush1.msra.mxu0 0.0
      %2903 = vmatprep.mubr.f32.mxu0 0.0
      %2904 = vmatmul.mubr.f32.gmra.mrb[0].mxu0 %v2837
      %v2905 = vpop.f32.mrb[0].mxu0
      %v2906 = vadd.f32 %v2582, %v2905
      %v2907 = vpop.f32.mrb[0].mxu0
      %2908 = vdwg.mxu0
      %v2909 = vadd.f32 %v2906, 3.0
      %v2910 = vmax.f32 %v2909, 0.0
      %v2911 = vmin.f32 %v2910, 6.0
      %v2912 = vmul.f32 %v2911, 0.16666667
      %v2913 = vmul.f32 %v2906, %v2912
      %v2915 = vsel %vm573, %v2583, 0
      %v2918 = vsel %vm573, %v2584, 0
      %v2921 = vsel %vm573, %v2585, 0
      %v2924 = vsel %vm573, %v2586, 0
      %2926 = vmatprep.subr.mxu0 0.0
      %2927 = vmatpush1.msra.mxu0 %v2913
      %2928 = vmatprep.subr.mxu0 0.0
      %2929 = vmatpush1.msra.mxu0 0.0
      %2930 = vmatprep.subr.mxu0 0.0
      %2931 = vmatpush1.msra.mxu0 0.0
      %2932 = vmatprep.subr.mxu0 0.0
      %2933 = vmatpush1.msra.mxu0 0.0
      %2934 = vmatprep.subr.mxu0 0.0
      %2935 = vmatpush1.msra.mxu0 0.0
      %2936 = vmatprep.subr.mxu0 0.0
      %2937 = vmatpush1.msra.mxu0 0.0
      %2938 = vmatprep.subr.mxu0 0.0
      %2939 = vmatpush1.msra.mxu0 0.0
      %2940 = vmatprep.subr.mxu0 0.0
      %2941 = vmatpush1.msra.mxu0 0.0
      %2942 = vmatprep.subr.mxu0 0.0
      %2943 = vmatpush1.msra.mxu0 0.0
      %2944 = vmatprep.subr.mxu0 0.0
      %2945 = vmatpush1.msra.mxu0 0.0
      %2946 = vmatprep.subr.mxu0 0.0
      %2947 = vmatpush1.msra.mxu0 0.0
      %2948 = vmatprep.subr.mxu0 0.0
      %2949 = vmatpush1.msra.mxu0 0.0
      %2950 = vmatprep.subr.mxu0 0.0
      %2951 = vmatpush1.msra.mxu0 0.0
      %2952 = vmatprep.subr.mxu0 0.0
      %2953 = vmatpush1.msra.mxu0 0.0
      %2954 = vmatprep.subr.mxu0 0.0
      %2955 = vmatpush1.msra.mxu0 0.0
      %2956 = vmatprep.subr.mxu0 0.0
      %2957 = vmatpush1.msra.mxu0 0.0
      %2958 = vmatprep.subr.mxu0 0.0
      %2959 = vmatpush1.msra.mxu0 0.0
      %2960 = vmatprep.subr.mxu0 0.0
      %2961 = vmatpush1.msra.mxu0 0.0
      %2962 = vmatprep.subr.mxu0 0.0
      %2963 = vmatpush1.msra.mxu0 0.0
      %2964 = vmatprep.subr.mxu0 0.0
      %2965 = vmatpush1.msra.mxu0 0.0
      %2966 = vmatprep.subr.mxu0 0.0
      %2967 = vmatpush1.msra.mxu0 0.0
      %2968 = vmatprep.subr.mxu0 0.0
      %2969 = vmatpush1.msra.mxu0 0.0
      %2970 = vmatprep.subr.mxu0 0.0
      %2971 = vmatpush1.msra.mxu0 0.0
      %2972 = vmatprep.subr.mxu0 0.0
      %2973 = vmatpush1.msra.mxu0 0.0
      %2974 = vmatprep.subr.mxu0 0.0
      %2975 = vmatpush1.msra.mxu0 0.0
      %2976 = vmatprep.subr.mxu0 0.0
      %2977 = vmatpush1.msra.mxu0 0.0
      %2978 = vmatprep.subr.mxu0 0.0
      %2979 = vmatpush1.msra.mxu0 0.0
      %2980 = vmatprep.subr.mxu0 0.0
      %2981 = vmatpush1.msra.mxu0 0.0
      %2982 = vmatprep.subr.mxu0 0.0
      %2983 = vmatpush1.msra.mxu0 0.0
      %2984 = vmatprep.subr.mxu0 0.0
      %2985 = vmatpush1.msra.mxu0 0.0
      %2986 = vmatprep.subr.mxu0 0.0
      %2987 = vmatpush1.msra.mxu0 0.0
      %2988 = vmatprep.subr.mxu0 0.0
      %2989 = vmatpush1.msra.mxu0 0.0
      %2990 = vmatprep.mubr.f32.mxu0 0.0
      %2991 = vmatmul.mubr.f32.gmra.mrb[0].mxu0 %v2915
      %v2992 = vpop.f32.mrb[0].mxu0
      %v2993 = vadd.f32 %v2587, %v2992
      %v2994 = vpop.f32.mrb[0].mxu0
      %2995 = vmatprep.mubr.f32.mxu0 0.0
      %2996 = vmatmul.mubr.f32.gmra.mrb[0].mxu0 %v2918
      %v2997 = vpop.f32.mrb[0].mxu0
      %v2998 = vadd.f32 %v2588, %v2997
      %v2999 = vpop.f32.mrb[0].mxu0
      %3000 = vmatprep.mubr.f32.mxu0 0.0
      %3001 = vmatmul.mubr.f32.gmra.mrb[0].mxu0 %v2921
      %v3002 = vpop.f32.mrb[0].mxu0
      %v3003 = vadd.f32 %v2589, %v3002
      %v3004 = vpop.f32.mrb[0].mxu0
      %3005 = vmatprep.mubr.f32.mxu0 0.0
      %3006 = vmatmul.mubr.f32.gmra.mrb[0].mxu0 %v2924
      %v3007 = vpop.f32.mrb[0].mxu0
      %v3008 = vadd.f32 %v2590, %v3007
      %v3009 = vpop.f32.mrb[0].mxu0
      %3010 = vdwg.mxu0
      %v3011 = vxor.u32 %v2993, 2147483648
      %v3012 = vxor.u32 %v2998, 2147483648
      %v3013 = vxor.u32 %v3003, 2147483648
      %v3014 = vxor.u32 %v3008, 2147483648
      %v3015 = vmul.f32 %v3011, 1.442695
      %v3016 = vpow.pop %v3015
      %v3017 = vmul.f32 %v3012, 1.442695
      %v3018 = vpow.pop %v3017
      %v3019 = vmul.f32 %v3013, 1.442695
      %v3020 = vpow.pop %v3019
      %v3021 = vmul.f32 %v3014, 1.442695
      %v3022 = vpow.pop %v3021
      %v3023 = vadd.f32 %v3016, 1.0
      %v3024 = vadd.f32 %v3018, 1.0
      %v3025 = vadd.f32 %v3020, 1.0
      %v3026 = vadd.f32 %v3022, 1.0
      %v3027 = vrcp.pop %v3023
      %v3028 = vmul.f32 1.0, %v3027
      %v3029 = vrcp.pop %v3024
      %v3030 = vmul.f32 1.0, %v3029
      %v3031 = vrcp.pop %v3025
      %v3032 = vmul.f32 1.0, %v3031
      %v3033 = vrcp.pop %v3026
      %v3034 = vmul.f32 1.0, %v3033
      %3035 = vmatprep.subr.mxu0 0.0
      %3036 = vmatpush1.msra.mxu0 %v203
      %3037 = vmatprep.subr.mxu0 0.0
      %3038 = vmatpush1.msra.mxu0 %v204
      %3039 = vmatprep.subr.mxu0 0.0
      %3040 = vmatpush1.msra.mxu0 %v205
      %3041 = vmatprep.subr.mxu0 0.0
      %3042 = vmatpush1.msra.mxu0 %v206
      %3043 = vmatprep.subr.mxu0 0.0
      %3044 = vmatpush1.msra.mxu0 %v207
      %3045 = vmatprep.subr.mxu0 0.0
      %3046 = vmatpush1.msra.mxu0 %v208
      %3047 = vmatprep.subr.mxu0 0.0
      %3048 = vmatpush1.msra.mxu0 %v209
      %3049 = vmatprep.subr.mxu0 0.0
      %3050 = vmatpush1.msra.mxu0 %v210
      %3051 = vmatprep.subr.mxu0 0.0
      %3052 = vmatpush1.msra.mxu0 %v211
      %3053 = vmatprep.subr.mxu0 0.0
      %3054 = vmatpush1.msra.mxu0 %v212
      %3055 = vmatprep.subr.mxu0 0.0
      %3056 = vmatpush1.msra.mxu0 %v213
      %3057 = vmatprep.subr.mxu0 0.0
      %3058 = vmatpush1.msra.mxu0 %v214
      %3059 = vmatprep.subr.mxu0 0.0
      %3060 = vmatpush1.msra.mxu0 %v215
      %3061 = vmatprep.subr.mxu0 0.0
      %3062 = vmatpush1.msra.mxu0 %v216
      %3063 = vmatprep.subr.mxu0 0.0
      %3064 = vmatpush1.msra.mxu0 %v217
      %3065 = vmatprep.subr.mxu0 0.0
      %3066 = vmatpush1.msra.mxu0 %v218
      %3067 = vmatprep.subr.mxu0 0.0
      %3068 = vmatpush1.msra.mxu0 0.0
      %3069 = vmatprep.subr.mxu0 0.0
      %3070 = vmatpush1.msra.mxu0 0.0
      %3071 = vmatprep.subr.mxu0 0.0
      %3072 = vmatpush1.msra.mxu0 0.0
      %3073 = vmatprep.subr.mxu0 0.0
      %3074 = vmatpush1.msra.mxu0 0.0
      %3075 = vmatprep.subr.mxu0 0.0
      %3076 = vmatpush1.msra.mxu0 0.0
      %3077 = vmatprep.subr.mxu0 0.0
      %3078 = vmatpush1.msra.mxu0 0.0
      %3079 = vmatprep.subr.mxu0 0.0
      %3080 = vmatpush1.msra.mxu0 0.0
      %3081 = vmatprep.subr.mxu0 0.0
      %3082 = vmatpush1.msra.mxu0 0.0
      %3083 = vmatprep.subr.mxu0 0.0
      %3084 = vmatpush1.msra.mxu0 0.0
      %3085 = vmatprep.subr.mxu0 0.0
      %3086 = vmatpush1.msra.mxu0 0.0
      %3087 = vmatprep.subr.mxu0 0.0
      %3088 = vmatpush1.msra.mxu0 0.0
      %3089 = vmatprep.subr.mxu0 0.0
      %3090 = vmatpush1.msra.mxu0 0.0
      %3091 = vmatprep.subr.mxu0 0.0
      %3092 = vmatpush1.msra.mxu0 0.0
      %3093 = vmatprep.subr.mxu0 0.0
      %3094 = vmatpush1.msra.mxu0 0.0
      %3095 = vmatprep.subr.mxu0 0.0
      %3096 = vmatpush1.msra.mxu0 0.0
      %3097 = vmatprep.subr.mxu0 0.0
      %3098 = vmatpush1.msra.mxu0 0.0
      %3099 = vmatprep.mubr.f32.mxu0 0.0
      %3100 = vmatmul.mubr.f32.gmra.mrb[0].mxu0 %v3028
      %v3101 = vpop.f32.mrb[0].mxu0
      %v3102 = vadd.f32 0.0, %v3101
      %v3103 = vpop.f32.mrb[0].mxu0
      %3104 = vmatprep.mubr.f32.mxu0 0.0
      %3105 = vmatmul.mubr.f32.gmra.mrb[0].mxu0 %v3030
      %v3106 = vpop.f32.mrb[0].mxu0
      %v3107 = vadd.f32 0.0, %v3106
      %v3108 = vpop.f32.mrb[0].mxu0
      %3109 = vdwg.mxu0
      %3110 = vmatprep.subr.mxu0 0.0
      %3111 = vmatpush1.msra.mxu0 %v219
      %3112 = vmatprep.subr.mxu0 0.0
      %3113 = vmatpush1.msra.mxu0 %v220
      %3114 = vmatprep.subr.mxu0 0.0
      %3115 = vmatpush1.msra.mxu0 %v221
      %3116 = vmatprep.subr.mxu0 0.0
      %3117 = vmatpush1.msra.mxu0 %v222
      %3118 = vmatprep.subr.mxu0 0.0
      %3119 = vmatpush1.msra.mxu0 %v223
      %3120 = vmatprep.subr.mxu0 0.0
      %3121 = vmatpush1.msra.mxu0 %v224
      %3122 = vmatprep.subr.mxu0 0.0
      %3123 = vmatpush1.msra.mxu0 %v225
      %3124 = vmatprep.subr.mxu0 0.0
      %3125 = vmatpush1.msra.mxu0 %v226
      %3126 = vmatprep.subr.mxu0 0.0
      %3127 = vmatpush1.msra.mxu0 %v227
      %3128 = vmatprep.subr.mxu0 0.0
      %3129 = vmatpush1.msra.mxu0 %v228
      %3130 = vmatprep.subr.mxu0 0.0
      %3131 = vmatpush1.msra.mxu0 %v229
      %3132 = vmatprep.subr.mxu0 0.0
      %3133 = vmatpush1.msra.mxu0 %v230
      %3134 = vmatprep.subr.mxu0 0.0
      %3135 = vmatpush1.msra.mxu0 %v231
      %3136 = vmatprep.subr.mxu0 0.0
      %3137 = vmatpush1.msra.mxu0 %v232
      %3138 = vmatprep.subr.mxu0 0.0
      %3139 = vmatpush1.msra.mxu0 %v233
      %3140 = vmatprep.subr.mxu0 0.0
      %3141 = vmatpush1.msra.mxu0 %v234
      %3142 = vmatprep.subr.mxu0 0.0
      %3143 = vmatpush1.msra.mxu0 0.0
      %3144 = vmatprep.subr.mxu0 0.0
      %3145 = vmatpush1.msra.mxu0 0.0
      %3146 = vmatprep.subr.mxu0 0.0
      %3147 = vmatpush1.msra.mxu0 0.0
      %3148 = vmatprep.subr.mxu0 0.0
      %3149 = vmatpush1.msra.mxu0 0.0
      %3150 = vmatprep.subr.mxu0 0.0
      %3151 = vmatpush1.msra.mxu0 0.0
      %3152 = vmatprep.subr.mxu0 0.0
      %3153 = vmatpush1.msra.mxu0 0.0
      %3154 = vmatprep.subr.mxu0 0.0
      %3155 = vmatpush1.msra.mxu0 0.0
      %3156 = vmatprep.subr.mxu0 0.0
      %3157 = vmatpush1.msra.mxu0 0.0
      %3158 = vmatprep.subr.mxu0 0.0
      %3159 = vmatpush1.msra.mxu0 0.0
      %3160 = vmatprep.subr.mxu0 0.0
      %3161 = vmatpush1.msra.mxu0 0.0
      %3162 = vmatprep.subr.mxu0 0.0
      %3163 = vmatpush1.msra.mxu0 0.0
      %3164 = vmatprep.subr.mxu0 0.0
      %3165 = vmatpush1.msra.mxu0 0.0
      %3166 = vmatprep.subr.mxu0 0.0
      %3167 = vmatpush1.msra.mxu0 0.0
      %3168 = vmatprep.subr.mxu0 0.0
      %3169 = vmatpush1.msra.mxu0 0.0
      %3170 = vmatprep.subr.mxu0 0.0
      %3171 = vmatpush1.msra.mxu0 0.0
      %3172 = vmatprep.subr.mxu0 0.0
      %3173 = vmatpush1.msra.mxu0 0.0
      %3174 = vmatprep.mubr.f32.mxu0 0.0
      %3175 = vmatmul.mubr.f32.gmra.mrb[0].mxu0 %v3032
      %v3176 = vpop.f32.mrb[0].mxu0
      %v3177 = vadd.f32 0.0, %v3176
      %v3178 = vpop.f32.mrb[0].mxu0
      %3179 = vmatprep.mubr.f32.mxu0 0.0
      %3180 = vmatmul.mubr.f32.gmra.mrb[0].mxu0 %v3034
      %v3181 = vpop.f32.mrb[0].mxu0
      %v3182 = vadd.f32 0.0, %v3181
      %v3183 = vpop.f32.mrb[0].mxu0
      %3184 = vdwg.mxu0
      %v3185 = vmul.f32 %v2759, %v3102
      %v3186 = vmul.f32 %v2760, %v3107
      %v3187 = vmul.f32 %v3185, %v3177
      %v3188 = vmul.f32 %v3186, %v3182
      %v3189 = vadd.f32 %v2577, %v3187
      %v3190 = vadd.f32 %v2578, %v3188
      %v3191 = vld [vmem:[%s2 + $0x560] sm:$0x1]
      %v3192 = vld [vmem:[%s2 + $0x568] sm:$0x1]
      %v3193 = vld [vmem:[%s2 + $0x670] sm:$0x3]
      %v3194 = vld [vmem:[%s2 + $0x778] sm:$0x1]
      %3195 = vmatprep.subr.mxu0 0.0
      %3196 = vmatpush1.msra.mxu0 %v171
      %3197 = vmatprep.subr.mxu0 0.0
      %3198 = vmatpush1.msra.mxu0 %v172
      %3199 = vmatprep.subr.mxu0 0.0
      %3200 = vmatpush1.msra.mxu0 %v173
      %3201 = vmatprep.subr.mxu0 0.0
      %3202 = vmatpush1.msra.mxu0 %v174
      %3203 = vmatprep.subr.mxu0 0.0
      %3204 = vmatpush1.msra.mxu0 %v175
      %3205 = vmatprep.subr.mxu0 0.0
      %3206 = vmatpush1.msra.mxu0 %v176
      %3207 = vmatprep.subr.mxu0 0.0
      %3208 = vmatpush1.msra.mxu0 %v177
      %3209 = vmatprep.subr.mxu0 0.0
      %3210 = vmatpush1.msra.mxu0 %v178
      %3211 = vmatprep.subr.mxu0 0.0
      %3212 = vmatpush1.msra.mxu0 %v179
      %3213 = vmatprep.subr.mxu0 0.0
      %3214 = vmatpush1.msra.mxu0 %v180
      %3215 = vmatprep.subr.mxu0 0.0
      %3216 = vmatpush1.msra.mxu0 %v181
      %3217 = vmatprep.subr.mxu0 0.0
      %3218 = vmatpush1.msra.mxu0 %v182
      %3219 = vmatprep.subr.mxu0 0.0
      %3220 = vmatpush1.msra.mxu0 %v183
      %3221 = vmatprep.subr.mxu0 0.0
      %3222 = vmatpush1.msra.mxu0 %v184
      %3223 = vmatprep.subr.mxu0 0.0
      %3224 = vmatpush1.msra.mxu0 %v185
      %3225 = vmatprep.subr.mxu0 0.0
      %3226 = vmatpush1.msra.mxu0 %v186
      %3227 = vmatprep.subr.mxu0 0.0
      %3228 = vmatpush1.msra.mxu0 0.0
      %3229 = vmatprep.subr.mxu0 0.0
      %3230 = vmatpush1.msra.mxu0 0.0
      %3231 = vmatprep.subr.mxu0 0.0
      %3232 = vmatpush1.msra.mxu0 0.0
      %3233 = vmatprep.subr.mxu0 0.0
      %3234 = vmatpush1.msra.mxu0 0.0
      %3235 = vmatprep.subr.mxu0 0.0
      %3236 = vmatpush1.msra.mxu0 0.0
      %3237 = vmatprep.subr.mxu0 0.0
      %3238 = vmatpush1.msra.mxu0 0.0
      %3239 = vmatprep.subr.mxu0 0.0
      %3240 = vmatpush1.msra.mxu0 0.0
      %3241 = vmatprep.subr.mxu0 0.0
      %3242 = vmatpush1.msra.mxu0 0.0
      %3243 = vmatprep.subr.mxu0 0.0
      %3244 = vmatpush1.msra.mxu0 0.0
      %3245 = vmatprep.subr.mxu0 0.0
      %3246 = vmatpush1.msra.mxu0 0.0
      %3247 = vmatprep.subr.mxu0 0.0
      %3248 = vmatpush1.msra.mxu0 0.0
      %3249 = vmatprep.subr.mxu0 0.0
      %3250 = vmatpush1.msra.mxu0 0.0
      %3251 = vmatprep.subr.mxu0 0.0
      %3252 = vmatpush1.msra.mxu0 0.0
      %3253 = vmatprep.subr.mxu0 0.0
      %3254 = vmatpush1.msra.mxu0 0.0
      %3255 = vmatprep.subr.mxu0 0.0
      %3256 = vmatpush1.msra.mxu0 0.0
      %3257 = vmatprep.subr.mxu0 0.0
      %3258 = vmatpush1.msra.mxu0 0.0
      %3259 = vmatprep.mubr.f32.mxu0 0.0
      %3260 = vmatmul.mubr.f32.gmra.mrb[0].mxu0 %v3189
      %v3261 = vpop.f32.mrb[0].mxu0
      %v3262 = vadd.f32 0.0, %v3261
      %v3263 = vpop.f32.mrb[0].mxu0
      %3264 = vmatprep.mubr.f32.mxu0 0.0
      %3265 = vmatmul.mubr.f32.gmra.mrb[0].mxu0 %v3190
      %v3266 = vpop.f32.mrb[0].mxu0
      %v3267 = vadd.f32 0.0, %v3266
      %v3268 = vpop.f32.mrb[0].mxu0
      %3269 = vdwg.mxu0
      %v3270 = vsub.f32 %v3189, %v3262
      %v3271 = vsub.f32 %v3190, %v3267
      %v3272 = vmul.f32 %v3270, %v3270
      %v3273 = vmul.f32 %v3271, %v3271
      %3274 = vmatprep.subr.mxu0 0.0
      %3275 = vmatpush1.msra.mxu0 %v171
      %3276 = vmatprep.subr.mxu0 0.0
      %3277 = vmatpush1.msra.mxu0 %v172
      %3278 = vmatprep.subr.mxu0 0.0
      %3279 = vmatpush1.msra.mxu0 %v173
      %3280 = vmatprep.subr.mxu0 0.0
      %3281 = vmatpush1.msra.mxu0 %v174
      %3282 = vmatprep.subr.mxu0 0.0
      %3283 = vmatpush1.msra.mxu0 %v175
      %3284 = vmatprep.subr.mxu0 0.0
      %3285 = vmatpush1.msra.mxu0 %v176
      %3286 = vmatprep.subr.mxu0 0.0
      %3287 = vmatpush1.msra.mxu0 %v177
      %3288 = vmatprep.subr.mxu0 0.0
      %3289 = vmatpush1.msra.mxu0 %v178
      %3290 = vmatprep.subr.mxu0 0.0
      %3291 = vmatpush1.msra.mxu0 %v179
      %3292 = vmatprep.subr.mxu0 0.0
      %3293 = vmatpush1.msra.mxu0 %v180
      %3294 = vmatprep.subr.mxu0 0.0
      %3295 = vmatpush1.msra.mxu0 %v181
      %3296 = vmatprep.subr.mxu0 0.0
      %3297 = vmatpush1.msra.mxu0 %v182
      %3298 = vmatprep.subr.mxu0 0.0
      %3299 = vmatpush1.msra.mxu0 %v183
      %3300 = vmatprep.subr.mxu0 0.0
      %3301 = vmatpush1.msra.mxu0 %v184
      %3302 = vmatprep.subr.mxu0 0.0
      %3303 = vmatpush1.msra.mxu0 %v185
      %3304 = vmatprep.subr.mxu0 0.0
      %3305 = vmatpush1.msra.mxu0 %v186
      %3306 = vmatprep.subr.mxu0 0.0
      %3307 = vmatpush1.msra.mxu0 0.0
      %3308 = vmatprep.subr.mxu0 0.0
      %3309 = vmatpush1.msra.mxu0 0.0
      %3310 = vmatprep.subr.mxu0 0.0
      %3311 = vmatpush1.msra.mxu0 0.0
      %3312 = vmatprep.subr.mxu0 0.0
      %3313 = vmatpush1.msra.mxu0 0.0
      %3314 = vmatprep.subr.mxu0 0.0
      %3315 = vmatpush1.msra.mxu0 0.0
      %3316 = vmatprep.subr.mxu0 0.0
      %3317 = vmatpush1.msra.mxu0 0.0
      %3318 = vmatprep.subr.mxu0 0.0
      %3319 = vmatpush1.msra.mxu0 0.0
      %3320 = vmatprep.subr.mxu0 0.0
      %3321 = vmatpush1.msra.mxu0 0.0
      %3322 = vmatprep.subr.mxu0 0.0
      %3323 = vmatpush1.msra.mxu0 0.0
      %3324 = vmatprep.subr.mxu0 0.0
      %3325 = vmatpush1.msra.mxu0 0.0
      %3326 = vmatprep.subr.mxu0 0.0
      %3327 = vmatpush1.msra.mxu0 0.0
      %3328 = vmatprep.subr.mxu0 0.0
      %3329 = vmatpush1.msra.mxu0 0.0
      %3330 = vmatprep.subr.mxu0 0.0
      %3331 = vmatpush1.msra.mxu0 0.0
      %3332 = vmatprep.subr.mxu0 0.0
      %3333 = vmatpush1.msra.mxu0 0.0
      %3334 = vmatprep.subr.mxu0 0.0
      %3335 = vmatpush1.msra.mxu0 0.0
      %3336 = vmatprep.subr.mxu0 0.0
      %3337 = vmatpush1.msra.mxu0 0.0
      %3338 = vmatprep.mubr.f32.mxu0 0.0
      %3339 = vmatmul.mubr.f32.gmra.mrb[0].mxu0 %v3272
      %v3340 = vpop.f32.mrb[0].mxu0
      %v3341 = vadd.f32 1e-05, %v3340
      %v3342 = vpop.f32.mrb[0].mxu0
      %3343 = vmatprep.mubr.f32.mxu0 0.0
      %3344 = vmatmul.mubr.f32.gmra.mrb[0].mxu0 %v3273
      %v3345 = vpop.f32.mrb[0].mxu0
      %v3346 = vadd.f32 1e-05, %v3345
      %v3347 = vpop.f32.mrb[0].mxu0
      %3348 = vdwg.mxu0
      %v3349 = vrsqrt.pop %v3341
      %v3350 = vrsqrt.pop %v3346
      %v3351 = vmul.f32 %v3270, %v3349
      %v3352 = vmul.f32 %v3271, %v3350
      %v3353 = vlaneseq
      %v3354 = vshrl.u32 %v3353, 7
      %v3355 = vsub.s32 0, %v3354
      %v3356 = vrot.slane %v3191, %v3355
      %v3357 = vmul.f32 %v3351, %v3356
      %v3358 = vmul.f32 %v3352, %v3356
      %v3359 = vlaneseq
      %v3360 = vshrl.u32 %v3359, 7
      %v3361 = vsub.s32 0, %v3360
      %v3362 = vrot.slane %v3192, %v3361
      %v3363 = vadd.f32 %v3357, %v3362
      %v3364 = vadd.f32 %v3358, %v3362
      %v3365 = vld [vmem:[%s2 + $0x570] sm:$0xff]
      %v3366 = vld [vmem:[%s2 + $0x578] sm:$0xff]
      %v3367 = vld [vmem:[%s2 + $0x580] sm:$0xff]
      %v3368 = vld [vmem:[%s2 + $0x588] sm:$0xff]
      %v3369 = vld [vmem:[%s2 + $0x590] sm:$0xff]
      %v3370 = vld [vmem:[%s2 + $0x598] sm:$0xff]
      %v3371 = vld [vmem:[%s2 + $0x5a0] sm:$0xff]
      %v3372 = vld [vmem:[%s2 + $0x5a8] sm:$0xff]
      %v3373 = vld [vmem:[%s2 + $0x5b0] sm:$0xff]
      %v3374 = vld [vmem:[%s2 + $0x5b8] sm:$0xff]
      %v3375 = vld [vmem:[%s2 + $0x5c0] sm:$0xff]
      %v3376 = vld [vmem:[%s2 + $0x5c8] sm:$0xff]
      %v3377 = vld [vmem:[%s2 + $0x5d0] sm:$0xff]
      %v3378 = vld [vmem:[%s2 + $0x5d8] sm:$0xff]
      %v3379 = vld [vmem:[%s2 + $0x5e0] sm:$0xff]
      %v3380 = vld [vmem:[%s2 + $0x5e8] sm:$0xff]
      %v3381 = vld [vmem:[%s2 + $0x678] sm:$0xff]
      %v3382 = vld [vmem:[%s2 + $0x680] sm:$0xff]
      %v3383 = vld [vmem:[%s2 + $0x688] sm:$0xff]
      %v3384 = vld [vmem:[%s2 + $0x690] sm:$0xff]
      %v3385 = vld [vmem:[%s2 + $0x698] sm:$0xff]
      %v3386 = vld [vmem:[%s2 + $0x6a0] sm:$0xff]
      %v3387 = vld [vmem:[%s2 + $0x6a8] sm:$0xff]
      %v3388 = vld [vmem:[%s2 + $0x6b0] sm:$0xff]
      %v3389 = vld [vmem:[%s2 + $0x6b8] sm:$0xff]
      %v3390 = vld [vmem:[%s2 + $0x6c0] sm:$0xff]
      %v3391 = vld [vmem:[%s2 + $0x6c8] sm:$0xff]
      %v3392 = vld [vmem:[%s2 + $0x6d0] sm:$0xff]
      %v3393 = vld [vmem:[%s2 + $0x6d8] sm:$0xff]
      %v3394 = vld [vmem:[%s2 + $0x6e0] sm:$0xff]
      %v3395 = vld [vmem:[%s2 + $0x6e8] sm:$0xff]
      %v3396 = vld [vmem:[%s2 + $0x6f0] sm:$0xff]
      %v3397 = vlaneseq
      %v3398 = vshrl.u32 %v3397, 7
      %v3399 = vsub.s32 0, %v3398
      %v3400 = vrot.slane %v3193, %v3399
      %3401 = vmatprep.subr.mxu0 0.0
      %3402 = vmatpush1.msra.mxu0 %v3365
      %3403 = vmatprep.subr.mxu0 0.0
      %3404 = vmatpush1.msra.mxu0 %v3366
      %3405 = vmatprep.subr.mxu0 0.0
      %3406 = vmatpush1.msra.mxu0 %v3367
      %3407 = vmatprep.subr.mxu0 0.0
      %3408 = vmatpush1.msra.mxu0 %v3368
      %3409 = vmatprep.subr.mxu0 0.0
      %3410 = vmatpush1.msra.mxu0 %v3369
      %3411 = vmatprep.subr.mxu0 0.0
      %3412 = vmatpush1.msra.mxu0 %v3370
      %3413 = vmatprep.subr.mxu0 0.0
      %3414 = vmatpush1.msra.mxu0 %v3371
      %3415 = vmatprep.subr.mxu0 0.0
      %3416 = vmatpush1.msra.mxu0 %v3372
      %3417 = vmatprep.subr.mxu0 0.0
      %3418 = vmatpush1.msra.mxu0 %v3373
      %3419 = vmatprep.subr.mxu0 0.0
      %3420 = vmatpush1.msra.mxu0 %v3374
      %3421 = vmatprep.subr.mxu0 0.0
      %3422 = vmatpush1.msra.mxu0 %v3375
      %3423 = vmatprep.subr.mxu0 0.0
      %3424 = vmatpush1.msra.mxu0 %v3376
      %3425 = vmatprep.subr.mxu0 0.0
      %3426 = vmatpush1.msra.mxu0 %v3377
      %3427 = vmatprep.subr.mxu0 0.0
      %3428 = vmatpush1.msra.mxu0 %v3378
      %3429 = vmatprep.subr.mxu0 0.0
      %3430 = vmatpush1.msra.mxu0 %v3379
      %3431 = vmatprep.subr.mxu0 0.0
      %3432 = vmatpush1.msra.mxu0 %v3380
      %3433 = vmatprep.subr.mxu0 0.0
      %3434 = vmatpush1.msra.mxu0 0.0
      %3435 = vmatprep.subr.mxu0 0.0
      %3436 = vmatpush1.msra.mxu0 0.0
      %3437 = vmatprep.subr.mxu0 0.0
      %3438 = vmatpush1.msra.mxu0 0.0
      %3439 = vmatprep.subr.mxu0 0.0
      %3440 = vmatpush1.msra.mxu0 0.0
      %3441 = vmatprep.subr.mxu0 0.0
      %3442 = vmatpush1.msra.mxu0 0.0
      %3443 = vmatprep.subr.mxu0 0.0
      %3444 = vmatpush1.msra.mxu0 0.0
      %3445 = vmatprep.subr.mxu0 0.0
      %3446 = vmatpush1.msra.mxu0 0.0
      %3447 = vmatprep.subr.mxu0 0.0
      %3448 = vmatpush1.msra.mxu0 0.0
      %3449 = vmatprep.subr.mxu0 0.0
      %3450 = vmatpush1.msra.mxu0 0.0
      %3451 = vmatprep.subr.mxu0 0.0
      %3452 = vmatpush1.msra.mxu0 0.0
      %3453 = vmatprep.subr.mxu0 0.0
      %3454 = vmatpush1.msra.mxu0 0.0
      %3455 = vmatprep.subr.mxu0 0.0
      %3456 = vmatpush1.msra.mxu0 0.0
      %3457 = vmatprep.subr.mxu0 0.0
      %3458 = vmatpush1.msra.mxu0 0.0
      %3459 = vmatprep.subr.mxu0 0.0
      %3460 = vmatpush1.msra.mxu0 0.0
      %3461 = vmatprep.subr.mxu0 0.0
      %3462 = vmatpush1.msra.mxu0 0.0
      %3463 = vmatprep.subr.mxu0 0.0
      %3464 = vmatpush1.msra.mxu0 0.0
      %3465 = vmatprep.mubr.f32.mxu0 0.0
      %3466 = vmatmul.mubr.f32.gmra.mrb[0].mxu0 %v3363
      %v3467 = vpop.f32.mrb[0].mxu0
      %v3468 = vadd.f32 %v3400, %v3467
      %v3469 = vpop.f32.mrb[0].mxu0
      %3470 = vmatprep.mubr.f32.mxu0 0.0
      %3471 = vmatmul.mubr.f32.gmra.mrb[0].mxu0 %v3364
      %v3472 = vpop.f32.mrb[0].mxu0
      %v3473 = vadd.f32 %v3400, %v3472
      %v3474 = vpop.f32.mrb[0].mxu0
      %3475 = vdwg.mxu0
      %v3476 = vmax.f32 %v3468, 0.0
      %v3477 = vmax.f32 %v3473, 0.0
      %v3478 = vld [vmem:[%s2 + $0x5f0] sm:$0xff]
      %v3479 = vld [vmem:[%s2 + $0x5f8] sm:$0xff]
      %v3480 = vld [vmem:[%s2 + $0x600] sm:$0xff]
      %v3481 = vld [vmem:[%s2 + $0x608] sm:$0xff]
      %v3482 = vld [vmem:[%s2 + $0x610] sm:$0xff]
      %v3483 = vld [vmem:[%s2 + $0x618] sm:$0xff]
      %v3484 = vld [vmem:[%s2 + $0x620] sm:$0xff]
      %v3485 = vld [vmem:[%s2 + $0x628] sm:$0xff]
      %v3486 = vld [vmem:[%s2 + $0x630] sm:$0xff]
      %v3487 = vld [vmem:[%s2 + $0x638] sm:$0xff]
      %v3488 = vld [vmem:[%s2 + $0x640] sm:$0xff]
      %v3489 = vld [vmem:[%s2 + $0x648] sm:$0xff]
      %v3490 = vld [vmem:[%s2 + $0x650] sm:$0xff]
      %v3491 = vld [vmem:[%s2 + $0x658] sm:$0xff]
      %v3492 = vld [vmem:[%s2 + $0x660] sm:$0xff]
      %v3493 = vld [vmem:[%s2 + $0x668] sm:$0xff]
      %v3494 = vld [vmem:[%s2 + $0x6f8] sm:$0xff]
      %v3495 = vld [vmem:[%s2 + $0x700] sm:$0xff]
      %v3496 = vld [vmem:[%s2 + $0x708] sm:$0xff]
      %v3497 = vld [vmem:[%s2 + $0x710] sm:$0xff]
      %v3498 = vld [vmem:[%s2 + $0x718] sm:$0xff]
      %v3499 = vld [vmem:[%s2 + $0x720] sm:$0xff]
      %v3500 = vld [vmem:[%s2 + $0x728] sm:$0xff]
      %v3501 = vld [vmem:[%s2 + $0x730] sm:$0xff]
      %v3502 = vld [vmem:[%s2 + $0x738] sm:$0xff]
      %v3503 = vld [vmem:[%s2 + $0x740] sm:$0xff]
      %v3504 = vld [vmem:[%s2 + $0x748] sm:$0xff]
      %v3505 = vld [vmem:[%s2 + $0x750] sm:$0xff]
      %v3506 = vld [vmem:[%s2 + $0x758] sm:$0xff]
      %v3507 = vld [vmem:[%s2 + $0x760] sm:$0xff]
      %v3508 = vld [vmem:[%s2 + $0x768] sm:$0xff]
      %v3509 = vld [vmem:[%s2 + $0x770] sm:$0xff]
      %v3510 = vlaneseq
      %v3511 = vshrl.u32 %v3510, 7
      %v3512 = vsub.s32 1, %v3511
      %v3513 = vrot.slane %v3193, %v3512
      %3514 = vmatprep.subr.mxu0 0.0
      %3515 = vmatpush1.msra.mxu0 %v3478
      %3516 = vmatprep.subr.mxu0 0.0
      %3517 = vmatpush1.msra.mxu0 %v3479
      %3518 = vmatprep.subr.mxu0 0.0
      %3519 = vmatpush1.msra.mxu0 %v3480
      %3520 = vmatprep.subr.mxu0 0.0
      %3521 = vmatpush1.msra.mxu0 %v3481
      %3522 = vmatprep.subr.mxu0 0.0
      %3523 = vmatpush1.msra.mxu0 %v3482
      %3524 = vmatprep.subr.mxu0 0.0
      %3525 = vmatpush1.msra.mxu0 %v3483
      %3526 = vmatprep.subr.mxu0 0.0
      %3527 = vmatpush1.msra.mxu0 %v3484
      %3528 = vmatprep.subr.mxu0 0.0
      %3529 = vmatpush1.msra.mxu0 %v3485
      %3530 = vmatprep.subr.mxu0 0.0
      %3531 = vmatpush1.msra.mxu0 %v3486
      %3532 = vmatprep.subr.mxu0 0.0
      %3533 = vmatpush1.msra.mxu0 %v3487
      %3534 = vmatprep.subr.mxu0 0.0
      %3535 = vmatpush1.msra.mxu0 %v3488
      %3536 = vmatprep.subr.mxu0 0.0
      %3537 = vmatpush1.msra.mxu0 %v3489
      %3538 = vmatprep.subr.mxu0 0.0
      %3539 = vmatpush1.msra.mxu0 %v3490
      %3540 = vmatprep.subr.mxu0 0.0
      %3541 = vmatpush1.msra.mxu0 %v3491
      %3542 = vmatprep.subr.mxu0 0.0
      %3543 = vmatpush1.msra.mxu0 %v3492
      %3544 = vmatprep.subr.mxu0 0.0
      %3545 = vmatpush1.msra.mxu0 %v3493
      %3546 = vmatprep.subr.mxu0 0.0
      %3547 = vmatpush1.msra.mxu0 0.0
      %3548 = vmatprep.subr.mxu0 0.0
      %3549 = vmatpush1.msra.mxu0 0.0
      %3550 = vmatprep.subr.mxu0 0.0
      %3551 = vmatpush1.msra.mxu0 0.0
      %3552 = vmatprep.subr.mxu0 0.0
      %3553 = vmatpush1.msra.mxu0 0.0
      %3554 = vmatprep.subr.mxu0 0.0
      %3555 = vmatpush1.msra.mxu0 0.0
      %3556 = vmatprep.subr.mxu0 0.0
      %3557 = vmatpush1.msra.mxu0 0.0
      %3558 = vmatprep.subr.mxu0 0.0
      %3559 = vmatpush1.msra.mxu0 0.0
      %3560 = vmatprep.subr.mxu0 0.0
      %3561 = vmatpush1.msra.mxu0 0.0
      %3562 = vmatprep.subr.mxu0 0.0
      %3563 = vmatpush1.msra.mxu0 0.0
      %3564 = vmatprep.subr.mxu0 0.0
      %3565 = vmatpush1.msra.mxu0 0.0
      %3566 = vmatprep.subr.mxu0 0.0
      %3567 = vmatpush1.msra.mxu0 0.0
      %3568 = vmatprep.subr.mxu0 0.0
      %3569 = vmatpush1.msra.mxu0 0.0
      %3570 = vmatprep.subr.mxu0 0.0
      %3571 = vmatpush1.msra.mxu0 0.0
      %3572 = vmatprep.subr.mxu0 0.0
      %3573 = vmatpush1.msra.mxu0 0.0
      %3574 = vmatprep.subr.mxu0 0.0
      %3575 = vmatpush1.msra.mxu0 0.0
      %3576 = vmatprep.subr.mxu0 0.0
      %3577 = vmatpush1.msra.mxu0 0.0
      %3578 = vmatprep.mubr.f32.mxu0 0.0
      %3579 = vmatmul.mubr.f32.gmra.mrb[0].mxu0 %v3363
      %v3580 = vpop.f32.mrb[0].mxu0
      %v3581 = vadd.f32 %v3513, %v3580
      %v3582 = vpop.f32.mrb[0].mxu0
      %3583 = vmatprep.mubr.f32.mxu0 0.0
      %3584 = vmatmul.mubr.f32.gmra.mrb[0].mxu0 %v3364
      %v3585 = vpop.f32.mrb[0].mxu0
      %v3586 = vadd.f32 %v3513, %v3585
      %v3587 = vpop.f32.mrb[0].mxu0
      %3588 = vdwg.mxu0
      %v3589 = vmax.f32 %v3581, 0.0
      %v3590 = vmax.f32 %v3586, 0.0
      %3591 = vmatprep.subr.mxu0 0.0
      %3592 = vmatpush1.msra.mxu0 %v3494
      %3593 = vmatprep.subr.mxu0 0.0
      %3594 = vmatpush1.msra.mxu0 %v3495
      %3595 = vmatprep.subr.mxu0 0.0
      %3596 = vmatpush1.msra.mxu0 %v3496
      %3597 = vmatprep.subr.mxu0 0.0
      %3598 = vmatpush1.msra.mxu0 %v3497
      %3599 = vmatprep.subr.mxu0 0.0
      %3600 = vmatpush1.msra.mxu0 %v3498
      %3601 = vmatprep.subr.mxu0 0.0
      %3602 = vmatpush1.msra.mxu0 %v3499
      %3603 = vmatprep.subr.mxu0 0.0
      %3604 = vmatpush1.msra.mxu0 %v3500
      %3605 = vmatprep.subr.mxu0 0.0
      %3606 = vmatpush1.msra.mxu0 %v3501
      %3607 = vmatprep.subr.mxu0 0.0
      %3608 = vmatpush1.msra.mxu0 %v3502
      %3609 = vmatprep.subr.mxu0 0.0
      %3610 = vmatpush1.msra.mxu0 %v3503
      %3611 = vmatprep.subr.mxu0 0.0
      %3612 = vmatpush1.msra.mxu0 %v3504
      %3613 = vmatprep.subr.mxu0 0.0
      %3614 = vmatpush1.msra.mxu0 %v3505
      %3615 = vmatprep.subr.mxu0 0.0
      %3616 = vmatpush1.msra.mxu0 %v3506
      %3617 = vmatprep.subr.mxu0 0.0
      %3618 = vmatpush1.msra.mxu0 %v3507
      %3619 = vmatprep.subr.mxu0 0.0
      %3620 = vmatpush1.msra.mxu0 %v3508
      %3621 = vmatprep.subr.mxu0 0.0
      %3622 = vmatpush1.msra.mxu0 %v3509
      %3623 = vmatprep.subr.mxu0 0.0
      %3624 = vmatpush1.msra.mxu0 0.0
      %3625 = vmatprep.subr.mxu0 0.0
      %3626 = vmatpush1.msra.mxu0 0.0
      %3627 = vmatprep.subr.mxu0 0.0
      %3628 = vmatpush1.msra.mxu0 0.0
      %3629 = vmatprep.subr.mxu0 0.0
      %3630 = vmatpush1.msra.mxu0 0.0
      %3631 = vmatprep.subr.mxu0 0.0
      %3632 = vmatpush1.msra.mxu0 0.0
      %3633 = vmatprep.subr.mxu0 0.0
      %3634 = vmatpush1.msra.mxu0 0.0
      %3635 = vmatprep.subr.mxu0 0.0
      %3636 = vmatpush1.msra.mxu0 0.0
      %3637 = vmatprep.subr.mxu0 0.0
      %3638 = vmatpush1.msra.mxu0 0.0
      %3639 = vmatprep.subr.mxu0 0.0
      %3640 = vmatpush1.msra.mxu0 0.0
      %3641 = vmatprep.subr.mxu0 0.0
      %3642 = vmatpush1.msra.mxu0 0.0
      %3643 = vmatprep.subr.mxu0 0.0
      %3644 = vmatpush1.msra.mxu0 0.0
      %3645 = vmatprep.subr.mxu0 0.0
      %3646 = vmatpush1.msra.mxu0 0.0
      %3647 = vmatprep.subr.mxu0 0.0
      %3648 = vmatpush1.msra.mxu0 0.0
      %3649 = vmatprep.subr.mxu0 0.0
      %3650 = vmatpush1.msra.mxu0 0.0
      %3651 = vmatprep.subr.mxu0 0.0
      %3652 = vmatpush1.msra.mxu0 0.0
      %3653 = vmatprep.subr.mxu0 0.0
      %3654 = vmatpush1.msra.mxu0 0.0
      %3655 = vmatprep.mubr.f32.mxu0 0.0
      %3656 = vmatmul.mubr.f32.gmra.mrb[0].mxu0 %v3589
      %v3657 = vpop.f32.mrb[0].mxu0
      %v3658 = vadd.f32 0.0, %v3657
      %v3659 = vpop.f32.mrb[0].mxu0
      %3660 = vmatprep.mubr.f32.mxu0 0.0
      %3661 = vmatmul.mubr.f32.gmra.mrb[0].mxu0 %v3590
      %v3662 = vpop.f32.mrb[0].mxu0
      %v3663 = vadd.f32 0.0, %v3662
      %v3664 = vpop.f32.mrb[0].mxu0
      %3665 = vdwg.mxu0
      %3666 = vmatprep.subr.mxu0 0.0
      %3667 = vmatpush1.msra.mxu0 %v3381
      %3668 = vmatprep.subr.mxu0 0.0
      %3669 = vmatpush1.msra.mxu0 %v3382
      %3670 = vmatprep.subr.mxu0 0.0
      %3671 = vmatpush1.msra.mxu0 %v3383
      %3672 = vmatprep.subr.mxu0 0.0
      %3673 = vmatpush1.msra.mxu0 %v3384
      %3674 = vmatprep.subr.mxu0 0.0
      %3675 = vmatpush1.msra.mxu0 %v3385
      %3676 = vmatprep.subr.mxu0 0.0
      %3677 = vmatpush1.msra.mxu0 %v3386
      %3678 = vmatprep.subr.mxu0 0.0
      %3679 = vmatpush1.msra.mxu0 %v3387
      %3680 = vmatprep.subr.mxu0 0.0
      %3681 = vmatpush1.msra.mxu0 %v3388
      %3682 = vmatprep.subr.mxu0 0.0
      %3683 = vmatpush1.msra.mxu0 %v3389
      %3684 = vmatprep.subr.mxu0 0.0
      %3685 = vmatpush1.msra.mxu0 %v3390
      %3686 = vmatprep.subr.mxu0 0.0
      %3687 = vmatpush1.msra.mxu0 %v3391
      %3688 = vmatprep.subr.mxu0 0.0
      %3689 = vmatpush1.msra.mxu0 %v3392
      %3690 = vmatprep.subr.mxu0 0.0
      %3691 = vmatpush1.msra.mxu0 %v3393
      %3692 = vmatprep.subr.mxu0 0.0
      %3693 = vmatpush1.msra.mxu0 %v3394
      %3694 = vmatprep.subr.mxu0 0.0
      %3695 = vmatpush1.msra.mxu0 %v3395
      %3696 = vmatprep.subr.mxu0 0.0
      %3697 = vmatpush1.msra.mxu0 %v3396
      %3698 = vmatprep.subr.mxu0 0.0
      %3699 = vmatpush1.msra.mxu0 0.0
      %3700 = vmatprep.subr.mxu0 0.0
      %3701 = vmatpush1.msra.mxu0 0.0
      %3702 = vmatprep.subr.mxu0 0.0
      %3703 = vmatpush1.msra.mxu0 0.0
      %3704 = vmatprep.subr.mxu0 0.0
      %3705 = vmatpush1.msra.mxu0 0.0
      %3706 = vmatprep.subr.mxu0 0.0
      %3707 = vmatpush1.msra.mxu0 0.0
      %3708 = vmatprep.subr.mxu0 0.0
      %3709 = vmatpush1.msra.mxu0 0.0
      %3710 = vmatprep.subr.mxu0 0.0
      %3711 = vmatpush1.msra.mxu0 0.0
      %3712 = vmatprep.subr.mxu0 0.0
      %3713 = vmatpush1.msra.mxu0 0.0
      %3714 = vmatprep.subr.mxu0 0.0
      %3715 = vmatpush1.msra.mxu0 0.0
      %3716 = vmatprep.subr.mxu0 0.0
      %3717 = vmatpush1.msra.mxu0 0.0
      %3718 = vmatprep.subr.mxu0 0.0
      %3719 = vmatpush1.msra.mxu0 0.0
      %3720 = vmatprep.subr.mxu0 0.0
      %3721 = vmatpush1.msra.mxu0 0.0
      %3722 = vmatprep.subr.mxu0 0.0
      %3723 = vmatpush1.msra.mxu0 0.0
      %3724 = vmatprep.subr.mxu0 0.0
      %3725 = vmatpush1.msra.mxu0 0.0
      %3726 = vmatprep.subr.mxu0 0.0
      %3727 = vmatpush1.msra.mxu0 0.0
      %3728 = vmatprep.subr.mxu0 0.0
      %3729 = vmatpush1.msra.mxu0 0.0
      %3730 = vmatprep.mubr.f32.mxu0 0.0
      %3731 = vmatmul.mubr.f32.gmra.mrb[0].mxu0 %v3476
      %v3732 = vpop.f32.mrb[0].mxu0
      %v3733 = vadd.f32 %v3658, %v3732
      %v3734 = vpop.f32.mrb[0].mxu0
      %3735 = vmatprep.mubr.f32.mxu0 0.0
      %3736 = vmatmul.mubr.f32.gmra.mrb[0].mxu0 %v3477
      %v3737 = vpop.f32.mrb[0].mxu0
      %v3738 = vadd.f32 %v3663, %v3737
      %v3739 = vpop.f32.mrb[0].mxu0
      %3740 = vdwg.mxu0
      %v3741 = vadd.f32 %v3189, %v3733
      %v3742 = vadd.f32 %v3190, %v3738
      %v3743 = vlaneseq
      %v3744 = vshrl.u32 %v3743, 7
      %v3745 = vsub.s32 0, %v3744
      %v3746 = vrot.slane %v3194, %v3745
      %v3747 = vadd.f32 %v3741, %v3746
      %v3748 = vadd.f32 %v3742, %v3746
      %3749 = vst [vmem:[%s170] sm:$0xff] %v3747
      %3750 = vst [vmem:[%s170 + $0x8] sm:$0xff] %v3748
      %p3751 = scmp.lt.s32.totalorder %s14, 1
      %s3752 = scalar_select %p3751, %s14, 1
      %s3753 = smul.addr %s3752, 2
      %s3754 = smul.addr %s3753, 8
      %s3755 = scalar_lea.vmem %s3, %s3754
      // Predicated region
      $region33: #{transformer_ca_forward.1} parent=31 // pred_check
        %p3756 = pneg %p100
      $region34: #{transformer_ca_forward.1} parent=31 // pred_check_branch
        %3758 = sbr.rel (%p3756) target = $region36
      $region35: #{transformer_ca_forward.1} parent=31 // pred_region
        _
      $region36: #{transformer_ca_forward.1} parent=31 // pred_fallthru
        _
    $region32: #{transformer_ca_forward.1} parent=5 // pred_fallthru
      _
    %p3759 = scmp.le.s32.totalorder 2, %s9
    // Predicated region
    $region37: #{transformer_ca_forward.1} parent=5 // pred_check
      %p3760 = pneg %p3759
    $region38: #{transformer_ca_forward.1} parent=5 // pred_check_branch
      %3762 = sbr.rel (%p3760) target = $region40
    $region39: #{transformer_ca_forward.1} parent=5 // pred_region
      %s3763 = ssub.s32 %s9, 2
      // Predicated region
      $region41: #{transformer_ca_forward.1} parent=39 // pred_check
        %p3764 = pneg %p106
      $region42: #{transformer_ca_forward.1} parent=39 // pred_check_branch
        %3766 = sbr.rel (%p3764) target = $region44
      $region43: #{transformer_ca_forward.1} parent=39 // pred_region
        %p3767 = scmp.lt.s32.totalorder %s15, 1
        %s3768 = scalar_select %p3767, %s15, 1
        %s3769 = smul.addr %s3768, 2
        %s3770 = smul.addr %s3769, 8
        %s3771 = scalar_lea.vmem %s3, %s3770
      $region44: #{transformer_ca_forward.1} parent=39 // pred_fallthru
        _
    $region40: #{transformer_ca_forward.1} parent=5 // pred_fallthru
      _
  $region6: #{transformer_ca_forward.1} parent=0 // loop_footer
    %s13 = sadd.s32 1, %s9
  $region7: #{transformer_ca_forward.1} parent=0 // loop_footer_branch
    %8 = sbr.rel target = $region3
  $region8: #{transformer_ca_forward.1} parent=0 // loop_exit
    _

</llo_original>
